<compile_context>
chip_gen: v7x
topology: tpu7x:2x2x1
jax: 0.10.0
libtpu: 0.0.40
codegen_flags: <defaults>
</compile_context>

<pallas_src>
import jax
import jax.numpy as jnp
from jax.experimental import pallas as pl
from jax.experimental.pallas import tpu as pltpu


TPIX = 512   # pixel tile (lane axis) for the 1x1-conv matmul kernel (review: TM 128->512)
TR = 8       # loc3 output-row tile (f32 sublane multiple)


# ---------------------------------------------------------------------------
# Kernel 1: 1x1 conv as an NCHW matmul   out = W @ X + b   (bf16 MXU, f32 acc)
# ---------------------------------------------------------------------------
def _conv1x1_kernel(x_ref, w_ref, b_ref, o_ref):
    # x_ref: (1, Cin, TP)  activations (channels on sublanes, pixels on lanes)
    # w_ref: (Cout, Cin) bf16    b_ref: (Cout, 1) f32    o_ref: (1, Cout, TP) bf16
    x = x_ref[0].astype(jnp.bfloat16)
    acc = jnp.dot(w_ref[...], x, preferred_element_type=jnp.float32)
    o_ref[0] = (acc + b_ref[...]).astype(o_ref.dtype)


def conv1x1(x3, w, b):
    """x3: (N, Cin, M) NCHW-flattened pixels -> (N, Cout, M) bf16."""
    n, cin, m = x3.shape
    cout = w.shape[0]
    tp = TPIX if m >= TPIX else m          # full-extent block when the image is small
    grid = (n, pl.cdiv(m, tp))             # uneven last pixel tile is masked by Pallas
    return pl.pallas_call(
        _conv1x1_kernel,
        out_shape=jax.ShapeDtypeStruct((n, cout, m), jnp.bfloat16),
        grid_spec=pltpu.PrefetchScalarGridSpec(
            num_scalar_prefetch=0,
            grid=grid,
            in_specs=[
                pl.BlockSpec((1, cin, tp), lambda i, j: (i, 0, j)),
                pl.BlockSpec(w.shape, lambda i, j: (0, 0)),
                pl.BlockSpec(b.shape, lambda i, j: (0, 0)),
            ],
            out_specs=pl.BlockSpec((1, cout, tp), lambda i, j: (i, 0, j)),
        ),
        compiler_params=pltpu.CompilerParams(
            dimension_semantics=("parallel", "parallel")),
    )(x3, w, b)


# ---------------------------------------------------------------------------
# Kernel 2: loc3 = folded 2x2 conv + bias + ReLU + channel-max, row-tiled.
# ---------------------------------------------------------------------------
def _loc3_kernel(x_ref, h_ref, w_ref, b_ref, o_ref):
    # x_ref: (1, TR, Cin, W4) bf16  TR spatial rows of t2 (NHCW layout)
    # h_ref: (1, 1, Cin, W4)  bf16  halo row r0+TR (clamped at the image edge)
    # w_ref: (Cout, 4*Cin)    bf16  folded 2x2 taps stacked along K: [00|01|10|11]
    # b_ref: (Cout, 1)        f32   o_ref: (1, TR, Wo) f32 (lane-dense output block)
    tr = x_ref.shape[1]
    wo = o_ref.shape[2]
    for j in range(tr):                                   # small fixed tile -> unrolled
        row_p = x_ref[0, j]                                           # (Cin, W4)
        row_n = x_ref[0, j + 1] if j + 1 < tr else h_ref[0, 0]        # (Cin, W4)
        # im2col for the folded 2x2 conv -> one K = 4*Cin MXU matmul per output row.
        xs = jnp.concatenate(
            [row_p[:, :wo], row_p[:, 1:],                 # taps (0,0), (0,1)
             row_n[:, :wo], row_n[:, 1:]], axis=0)        # taps (1,0), (1,1)
        acc = jnp.dot(w_ref[...], xs, preferred_element_type=jnp.float32)  # (Cout, Wo)
        acc = jnp.maximum(acc + b_ref[...], 0.0)          # bias + ReLU (f32 VPU)
        o_ref[0, j, :] = jnp.max(acc, axis=0)             # channel max = sublane reduce


def loc3_max(t2, halo, w_eff, b3):
    """t2: (N, H4, Cin, W4) NHCW, halo: (N, NT, Cin, W4) -> (N, NT*TR, W4-1) f32."""
    n, h4, cin, w4 = t2.shape
    nt = halo.shape[1]
    wo = w4 - 1
    return pl.pallas_call(
        _loc3_kernel,
        out_shape=jax.ShapeDtypeStruct((n, nt * TR, wo), jnp.float32),
        grid_spec=pltpu.PrefetchScalarGridSpec(
            num_scalar_prefetch=0,
            grid=(n, nt),
            in_specs=[
                pl.BlockSpec((1, TR, cin, w4), lambda i, j: (i, j, 0, 0)),
                pl.BlockSpec((1, 1, cin, w4), lambda i, j: (i, j, 0, 0)),
                pl.BlockSpec(w_eff.shape, lambda i, j: (0, 0)),
                pl.BlockSpec(b3.shape, lambda i, j: (0, 0)),
            ],
            out_specs=pl.BlockSpec((1, TR, wo), lambda i, j: (i, j, 0)),
        ),
        compiler_params=pltpu.CompilerParams(
            dimension_semantics=("parallel", "parallel")),
    )(t2, halo, w_eff, b3)


# ---------------------------------------------------------------------------
# Glue (elementwise / gather passes, per review kept out of the matmul kernels)
# ---------------------------------------------------------------------------
def _up2_nchw(t):
    """Nearest 2x upsample in NCHW (pure pixel replication)."""
    n, c, h, w = t.shape
    t = jnp.broadcast_to(t[:, :, :, None, :, None], (n, c, h, 2, w, 2))
    return t.reshape(n, c, 2 * h, 2 * w)


def init_params(key):
    ks = jax.random.split(key, 6)
    w1 = jax.random.normal(ks[0], (256, 512), jnp.float32) * 0.02   # (Cout, Cin), torch layout
    b1 = jax.random.normal(ks[1], (256,), jnp.float32) * 0.02
    w2 = jax.random.normal(ks[2], (128, 256), jnp.float32) * 0.02
    b2 = jax.random.normal(ks[3], (128,), jnp.float32) * 0.02
    w3 = jax.random.normal(ks[4], (64, 128, 3, 3), jnp.float32) * 0.02  # (Cout, Cin, kh, kw)
    b3 = jax.random.normal(ks[5], (64,), jnp.float32) * 0.02
    # Fold (nearest-2x upsample + 3x3 stride-2 conv, padding=0) into a 2x2 stride-1 conv:
    #   out[p,q] = t00*t[p,q] + t01*t[p,q+1] + t10*t[p+1,q] + t11*t[p+1,q+1]
    t00 = w3[:, :, 0, 0] + w3[:, :, 0, 1] + w3[:, :, 1, 0] + w3[:, :, 1, 1]
    t01 = w3[:, :, 0, 2] + w3[:, :, 1, 2]
    t10 = w3[:, :, 2, 0] + w3[:, :, 2, 1]
    t11 = w3[:, :, 2, 2]
    w3_eff = jnp.concatenate([t00, t01, t10, t11], axis=1)              # (64, 4*128)
    return dict(
        w1=w1.astype(jnp.bfloat16), b1=b1.reshape(-1, 1),
        w2=w2.astype(jnp.bfloat16), b2=b2.reshape(-1, 1),
        w3=w3_eff.astype(jnp.bfloat16), b3=b3.reshape(-1, 1),
    )


@jax.jit
def amer_loc_head(x, y, z, params):
    """x: (N,512,H,W), y: (N,256,2H,2W), z: (N,128,4H,4W), NCHW like the PyTorch module."""
    n, _, h, w = x.shape
    h2, w2, h4, w4 = 2 * h, 2 * w, 4 * h, 4 * w
    ho, wo = h4 - 1, w4 - 1          # loc3 conv uses padding=0 (nn.Conv2d default)

    # loc1: conv1x1 commutes with nearest-up2 -> run it at H x W, then replicate + add y.
    a = conv1x1(x.reshape(n, 512, h * w), params["w1"], params["b1"])    # (N,256,H*W) bf16
    t1 = (_up2_nchw(a.reshape(n, 256, h, w)) + y).astype(jnp.bfloat16)   # = loc1(x) + y

    # loc2: same commute -> conv at 2H x 2W.
    bq = conv1x1(t1.reshape(n, 256, h2 * w2), params["w2"], params["b2"])  # (N,128,2H*2W)
    # replicate + add z, emitted directly in NHCW (row, channel, col) order so the loc3
    # kernel reads MXU-ready (Cin, W) row slabs; the relayout rides the add pass.
    bu = _up2_nchw(bq.reshape(n, 128, h2, w2))                           # (N,128,4H,4W)
    t2 = (jnp.transpose(bu, (0, 2, 1, 3)) +
          jnp.transpose(z, (0, 2, 1, 3))).astype(jnp.bfloat16)           # (N,4H,128,4W)

    # loc3 (folded 2x2 conv) + ReLU + channel max, row-tiled with a 1-row halo input.
    nt = pl.cdiv(ho, TR)
    halo_rows = jnp.minimum((jnp.arange(nt) + 1) * TR, h4 - 1)
    halo = t2[:, halo_rows]                                              # (N,NT,128,4W)
    m = loc3_max(t2, halo, params["w3"], params["b3"])                   # (N,NT*TR,Wo)

    # final nn.Upsample(size=(448,448), mode='nearest') + .squeeze()  (gather glue)
    ih = (jnp.arange(448) * ho) // 448                                   # indices < Ho
    iw = (jnp.arange(448) * wo) // 448                                   # indices < Wo
    out = m[:, ih][:, :, iw]                                             # (N,448,448)
    # torch: max(dim=1, keepdim=True) -> upsample -> .squeeze() (drops all size-1 dims)
    return jnp.squeeze(out[:, None])


if __name__ == "__main__":
    key = jax.random.PRNGKey(0)
    kx, ky, kz, kp = jax.random.split(key, 4)

    # Small spatial size; channel counts are fixed by the module (512 / 256 / 128).
    n, h, w = 2, 4, 4
    x = jax.random.normal(kx, (n, 512, h, w), jnp.float32)           # NCHW
    y = jax.random.normal(ky, (n, 256, 2 * h, 2 * w), jnp.float32)
    z = jax.random.normal(kz, (n, 128, 4 * h, 4 * w), jnp.float32)
    params = init_params(kp)

    out = amer_loc_head(x, y, z, params)
    jax.block_until_ready(out)
    assert out.shape == (n, 448, 448), out.shape
    print("KERNEL_OK")
</pallas_src>

<mosaic_0001>
module attributes {stable_mosaic.version = 11 : i64} {
  func.func @_conv1x1_kernel(%arg0: i32, %arg1: i32, %arg2: memref<1x512x16xf32, #tpu.memory_space<vmem>>, %arg3: memref<256x512xbf16, #tpu.memory_space<vmem>>, %arg4: memref<256x1xf32, #tpu.memory_space<vmem>>, %arg5: memref<1x256x16xbf16, #tpu.memory_space<vmem>>) attributes {dimension_semantics = [#tpu.dimension_semantics<parallel>, #tpu.dimension_semantics<parallel>], iteration_bounds = array<i64: 2, 1>, scalar_prefetch = 0 : i64, scratch_operands = 0 : i64, tpu.core_type = #tpu.core_type<tc>, window_params = [{transform_indices = @transform_0, window_bounds = array<i64: 1, 512, 16>}, {pipeline_mode = #tpu.pipeline_mode<synchronous>, transform_indices = @transform_1, window_bounds = array<i64: 256, 512>}, {pipeline_mode = #tpu.pipeline_mode<synchronous>, transform_indices = @transform_2, window_bounds = array<i64: 256, 1>}, {transform_indices = @transform_3, window_bounds = array<i64: 1, 256, 16>}]} {
    %c0 = arith.constant 0 : index
    %c0_0 = arith.constant 0 : index
    %c0_1 = arith.constant 0 : index
    %0 = vector.load %arg2[%c0, %c0_0, %c0_1] : memref<1x512x16xf32, #tpu.memory_space<vmem>>, vector<1x512x16xf32>
    %1 = vector.shape_cast %0 : vector<1x512x16xf32> to vector<512x16xf32>
    %2 = arith.truncf %1 : vector<512x16xf32> to vector<512x16xbf16>
    %c0_2 = arith.constant 0 : index
    %c0_3 = arith.constant 0 : index
    %3 = vector.load %arg3[%c0_2, %c0_3] : memref<256x512xbf16, #tpu.memory_space<vmem>>, vector<256x512xbf16>
    %cst = arith.constant dense<0.000000e+00> : vector<256x16xf32>
    %4 = tpu.matmul %3, %2, %cst {dimension_numbers = #tpu.dot_dimension_numbers<[1], [0], [0], [1], [0, 0, 1, 1], [], []>} : vector<256x512xbf16>, vector<512x16xbf16>, vector<256x16xf32> -> vector<256x16xf32>
    %c0_4 = arith.constant 0 : index
    %c0_5 = arith.constant 0 : index
    %5 = vector.load %arg4[%c0_4, %c0_5] : memref<256x1xf32, #tpu.memory_space<vmem>>, vector<256x1xf32>
    %6 = vector.broadcast %5 : vector<256x1xf32> to vector<256x16xf32>
    %7 = arith.addf %4, %6 : vector<256x16xf32>
    %8 = arith.truncf %7 : vector<256x16xf32> to vector<256x16xbf16>
    %c0_6 = arith.constant 0 : index
    %c0_7 = arith.constant 0 : index
    %c0_8 = arith.constant 0 : index
    %9 = vector.load %arg5[%c0_6, %c0_7, %c0_8] : memref<1x256x16xbf16, #tpu.memory_space<vmem>>, vector<1x256x16xbf16>
    %10 = vector.shape_cast %9 : vector<1x256x16xbf16> to vector<256x16xbf16>
    %11 = vector.shape_cast %8 : vector<256x16xbf16> to vector<1x256x16xbf16>
    tpu.vector_store %arg5[%c0_6, %c0_7, %c0_8], %11 {strides = array<i32>} : memref<1x256x16xbf16, #tpu.memory_space<vmem>>, vector<1x256x16xbf16>,
    return
  }
  func.func @transform_0(%arg0: i32, %arg1: i32) -> (i32, i32, i32) {
    %c0_i32 = arith.constant 0 : i32
    %c0_i32_0 = arith.constant 0 : i32
    return %arg0, %c0_i32, %arg1 : i32, i32, i32
  }
  func.func @transform_1(%arg0: i32, %arg1: i32) -> (i32, i32) {
    %c0_i32 = arith.constant 0 : i32
    %c0_i32_0 = arith.constant 0 : i32
    %c0_i32_1 = arith.constant 0 : i32
    return %c0_i32, %c0_i32_0 : i32, i32
  }
  func.func @transform_2(%arg0: i32, %arg1: i32) -> (i32, i32) {
    %c0_i32 = arith.constant 0 : i32
    %c0_i32_0 = arith.constant 0 : i32
    %c0_i32_1 = arith.constant 0 : i32
    return %c0_i32, %c0_i32_0 : i32, i32
  }
  func.func @transform_3(%arg0: i32, %arg1: i32) -> (i32, i32, i32) {
    %c0_i32 = arith.constant 0 : i32
    %c0_i32_0 = arith.constant 0 : i32
    return %arg0, %c0_i32, %arg1 : i32, i32, i32
  }
}

module attributes {stable_mosaic.version = 11 : i64} {
  func.func @_conv1x1_kernel(%arg0: i32, %arg1: i32, %arg2: memref<1x256x64xbf16, #tpu.memory_space<vmem>>, %arg3: memref<128x256xbf16, #tpu.memory_space<vmem>>, %arg4: memref<128x1xf32, #tpu.memory_space<vmem>>, %arg5: memref<1x128x64xbf16, #tpu.memory_space<vmem>>) attributes {dimension_semantics = [#tpu.dimension_semantics<parallel>, #tpu.dimension_semantics<parallel>], iteration_bounds = array<i64: 2, 1>, scalar_prefetch = 0 : i64, scratch_operands = 0 : i64, tpu.core_type = #tpu.core_type<tc>, window_params = [{transform_indices = @transform_0, window_bounds = array<i64: 1, 256, 64>}, {pipeline_mode = #tpu.pipeline_mode<synchronous>, transform_indices = @transform_1, window_bounds = array<i64: 128, 256>}, {pipeline_mode = #tpu.pipeline_mode<synchronous>, transform_indices = @transform_2, window_bounds = array<i64: 128, 1>}, {transform_indices = @transform_3, window_bounds = array<i64: 1, 128, 64>}]} {
    %c0 = arith.constant 0 : index
    %c0_0 = arith.constant 0 : index
    %c0_1 = arith.constant 0 : index
    %0 = vector.load %arg2[%c0, %c0_0, %c0_1] : memref<1x256x64xbf16, #tpu.memory_space<vmem>>, vector<1x256x64xbf16>
    %1 = vector.shape_cast %0 : vector<1x256x64xbf16> to vector<256x64xbf16>
    %c0_2 = arith.constant 0 : index
    %c0_3 = arith.constant 0 : index
    %2 = vector.load %arg3[%c0_2, %c0_3] : memref<128x256xbf16, #tpu.memory_space<vmem>>, vector<128x256xbf16>
    %cst = arith.constant dense<0.000000e+00> : vector<128x64xf32>
    %3 = tpu.matmul %2, %1, %cst {dimension_numbers = #tpu.dot_dimension_numbers<[1], [0], [0], [1], [0, 0, 1, 1], [], []>} : vector<128x256xbf16>, vector<256x64xbf16>, vector<128x64xf32> -> vector<128x64xf32>
    %c0_4 = arith.constant 0 : index
    %c0_5 = arith.constant 0 : index
    %4 = vector.load %arg4[%c0_4, %c0_5] : memref<128x1xf32, #tpu.memory_space<vmem>>, vector<128x1xf32>
    %5 = vector.broadcast %4 : vector<128x1xf32> to vector<128x64xf32>
    %6 = arith.addf %3, %5 : vector<128x64xf32>
    %7 = arith.truncf %6 : vector<128x64xf32> to vector<128x64xbf16>
    %c0_6 = arith.constant 0 : index
    %c0_7 = arith.constant 0 : index
    %c0_8 = arith.constant 0 : index
    %8 = vector.load %arg5[%c0_6, %c0_7, %c0_8] : memref<1x128x64xbf16, #tpu.memory_space<vmem>>, vector<1x128x64xbf16>
    %9 = vector.shape_cast %8 : vector<1x128x64xbf16> to vector<128x64xbf16>
    %10 = vector.shape_cast %7 : vector<128x64xbf16> to vector<1x128x64xbf16>
    tpu.vector_store %arg5[%c0_6, %c0_7, %c0_8], %10 {strides = array<i32>} : memref<1x128x64xbf16, #tpu.memory_space<vmem>>, vector<1x128x64xbf16>,
    return
  }
  func.func @transform_0(%arg0: i32, %arg1: i32) -> (i32, i32, i32) {
    %c0_i32 = arith.constant 0 : i32
    %c0_i32_0 = arith.constant 0 : i32
    return %arg0, %c0_i32, %arg1 : i32, i32, i32
  }
  func.func @transform_1(%arg0: i32, %arg1: i32) -> (i32, i32) {
    %c0_i32 = arith.constant 0 : i32
    %c0_i32_0 = arith.constant 0 : i32
    %c0_i32_1 = arith.constant 0 : i32
    return %c0_i32, %c0_i32_0 : i32, i32
  }
  func.func @transform_2(%arg0: i32, %arg1: i32) -> (i32, i32) {
    %c0_i32 = arith.constant 0 : i32
    %c0_i32_0 = arith.constant 0 : i32
    %c0_i32_1 = arith.constant 0 : i32
    return %c0_i32, %c0_i32_0 : i32, i32
  }
  func.func @transform_3(%arg0: i32, %arg1: i32) -> (i32, i32, i32) {
    %c0_i32 = arith.constant 0 : i32
    %c0_i32_0 = arith.constant 0 : i32
    return %arg0, %c0_i32, %arg1 : i32, i32, i32
  }
}

module attributes {stable_mosaic.version = 11 : i64} {
  func.func @_loc3_kernel(%arg0: i32, %arg1: i32, %arg2: memref<1x8x128x16xbf16, #tpu.memory_space<vmem>>, %arg3: memref<1x1x128x16xbf16, #tpu.memory_space<vmem>>, %arg4: memref<64x512xbf16, #tpu.memory_space<vmem>>, %arg5: memref<64x1xf32, #tpu.memory_space<vmem>>, %arg6: memref<1x8x15xf32, #tpu.memory_space<vmem>>) attributes {dimension_semantics = [#tpu.dimension_semantics<parallel>, #tpu.dimension_semantics<parallel>], iteration_bounds = array<i64: 2, 2>, scalar_prefetch = 0 : i64, scratch_operands = 0 : i64, tpu.core_type = #tpu.core_type<tc>, window_params = [{transform_indices = @transform_0, window_bounds = array<i64: 1, 8, 128, 16>}, {transform_indices = @transform_1, window_bounds = array<i64: 1, 1, 128, 16>}, {pipeline_mode = #tpu.pipeline_mode<synchronous>, transform_indices = @transform_2, window_bounds = array<i64: 64, 512>}, {pipeline_mode = #tpu.pipeline_mode<synchronous>, transform_indices = @transform_3, window_bounds = array<i64: 64, 1>}, {transform_indices = @transform_4, window_bounds = array<i64: 1, 8, 15>}]} {
    %c0 = arith.constant 0 : index
    %c0_0 = arith.constant 0 : index
    %c0_1 = arith.constant 0 : index
    %c0_2 = arith.constant 0 : index
    %0 = vector.load %arg2[%c0, %c0_0, %c0_1, %c0_2] : memref<1x8x128x16xbf16, #tpu.memory_space<vmem>>, vector<1x1x128x16xbf16>
    %1 = vector.shape_cast %0 : vector<1x1x128x16xbf16> to vector<128x16xbf16>
    %c0_3 = arith.constant 0 : index
    %c1 = arith.constant 1 : index
    %c0_4 = arith.constant 0 : index
    %c0_5 = arith.constant 0 : index
    %2 = vector.load %arg2[%c0_3, %c1, %c0_4, %c0_5] : memref<1x8x128x16xbf16, #tpu.memory_space<vmem>>, vector<1x1x128x16xbf16>
    %3 = vector.shape_cast %2 : vector<1x1x128x16xbf16> to vector<128x16xbf16>
    %4 = vector.extract_strided_slice %1 {offsets = [0, 0], sizes = [128, 15], strides = [1, 1]} : vector<128x16xbf16> to vector<128x15xbf16>
    %5 = vector.extract_strided_slice %1 {offsets = [0, 1], sizes = [128, 15], strides = [1, 1]} : vector<128x16xbf16> to vector<128x15xbf16>
    %6 = vector.extract_strided_slice %3 {offsets = [0, 0], sizes = [128, 15], strides = [1, 1]} : vector<128x16xbf16> to vector<128x15xbf16>
    %7 = vector.extract_strided_slice %3 {offsets = [0, 1], sizes = [128, 15], strides = [1, 1]} : vector<128x16xbf16> to vector<128x15xbf16>
    %8 = tpu.concatenate %4, %5, %6, %7 in 0 : vector<128x15xbf16>, vector<128x15xbf16>, vector<128x15xbf16>, vector<128x15xbf16> -> vector<512x15xbf16>
    %c0_6 = arith.constant 0 : index
    %c0_7 = arith.constant 0 : index
    %9 = vector.load %arg4[%c0_6, %c0_7] : memref<64x512xbf16, #tpu.memory_space<vmem>>, vector<64x512xbf16>
    %cst = arith.constant dense<0.000000e+00> : vector<64x15xf32>
    %10 = tpu.matmul %9, %8, %cst {dimension_numbers = #tpu.dot_dimension_numbers<[1], [0], [0], [1], [0, 0, 1, 1], [], []>} : vector<64x512xbf16>, vector<512x15xbf16>, vector<64x15xf32> -> vector<64x15xf32>
    %c0_8 = arith.constant 0 : index
    %c0_9 = arith.constant 0 : index
    %11 = vector.load %arg5[%c0_8, %c0_9] : memref<64x1xf32, #tpu.memory_space<vmem>>, vector<64x1xf32>
    %12 = vector.broadcast %11 : vector<64x1xf32> to vector<64x15xf32>
    %13 = arith.addf %10, %12 : vector<64x15xf32>
    %cst_10 = arith.constant 0.000000e+00 : f32
    %14 = vector.broadcast %cst_10 : f32 to vector<64x15xf32>
    %15 = arith.maximumf %13, %14 : vector<64x15xf32>
    %cst_11 = arith.constant dense<0xFF800000> : vector<15xf32>
    %16 = vector.multi_reduction <maximumf>, %15, %cst_11 [0] : vector<64x15xf32> to vector<15xf32>
    %c0_12 = arith.constant 0 : index
    %c0_13 = arith.constant 0 : index
    %c0_14 = arith.constant 0 : index
    %17 = vector.load %arg6[%c0_12, %c0_13, %c0_14] : memref<1x8x15xf32, #tpu.memory_space<vmem>>, vector<1x1x15xf32>
    %18 = vector.shape_cast %17 : vector<1x1x15xf32> to vector<15xf32>
    %19 = vector.shape_cast %16 : vector<15xf32> to vector<1x1x15xf32>
    tpu.vector_store %arg6[%c0_12, %c0_13, %c0_14], %19 {strides = array<i32>} : memref<1x8x15xf32, #tpu.memory_space<vmem>>, vector<1x1x15xf32>,
    %c0_15 = arith.constant 0 : index
    %c1_16 = arith.constant 1 : index
    %c0_17 = arith.constant 0 : index
    %c0_18 = arith.constant 0 : index
    %20 = vector.load %arg2[%c0_15, %c1_16, %c0_17, %c0_18] : memref<1x8x128x16xbf16, #tpu.memory_space<vmem>>, vector<1x1x128x16xbf16>
    %21 = vector.shape_cast %20 : vector<1x1x128x16xbf16> to vector<128x16xbf16>
    %c0_19 = arith.constant 0 : index
    %c2 = arith.constant 2 : index
    %c0_20 = arith.constant 0 : index
    %c0_21 = arith.constant 0 : index
    %22 = vector.load %arg2[%c0_19, %c2, %c0_20, %c0_21] : memref<1x8x128x16xbf16, #tpu.memory_space<vmem>>, vector<1x1x128x16xbf16>
    %23 = vector.shape_cast %22 : vector<1x1x128x16xbf16> to vector<128x16xbf16>
    %24 = vector.extract_strided_slice %21 {offsets = [0, 0], sizes = [128, 15], strides = [1, 1]} : vector<128x16xbf16> to vector<128x15xbf16>
    %25 = vector.extract_strided_slice %21 {offsets = [0, 1], sizes = [128, 15], strides = [1, 1]} : vector<128x16xbf16> to vector<128x15xbf16>
    %26 = vector.extract_strided_slice %23 {offsets = [0, 0], sizes = [128, 15], strides = [1, 1]} : vector<128x16xbf16> to vector<128x15xbf16>
    %27 = vector.extract_strided_slice %23 {offsets = [0, 1], sizes = [128, 15], strides = [1, 1]} : vector<128x16xbf16> to vector<128x15xbf16>
    %28 = tpu.concatenate %24, %25, %26, %27 in 0 : vector<128x15xbf16>, vector<128x15xbf16>, vector<128x15xbf16>, vector<128x15xbf16> -> vector<512x15xbf16>
    %c0_22 = arith.constant 0 : index
    %c0_23 = arith.constant 0 : index
    %29 = vector.load %arg4[%c0_22, %c0_23] : memref<64x512xbf16, #tpu.memory_space<vmem>>, vector<64x512xbf16>
    %cst_24 = arith.constant dense<0.000000e+00> : vector<64x15xf32>
    %30 = tpu.matmul %29, %28, %cst_24 {dimension_numbers = #tpu.dot_dimension_numbers<[1], [0], [0], [1], [0, 0, 1, 1], [], []>} : vector<64x512xbf16>, vector<512x15xbf16>, vector<64x15xf32> -> vector<64x15xf32>
    %c0_25 = arith.constant 0 : index
    %c0_26 = arith.constant 0 : index
    %31 = vector.load %arg5[%c0_25, %c0_26] : memref<64x1xf32, #tpu.memory_space<vmem>>, vector<64x1xf32>
    %32 = vector.broadcast %31 : vector<64x1xf32> to vector<64x15xf32>
    %33 = arith.addf %30, %32 : vector<64x15xf32>
    %cst_27 = arith.constant 0.000000e+00 : f32
    %34 = vector.broadcast %cst_27 : f32 to vector<64x15xf32>
    %35 = arith.maximumf %33, %34 : vector<64x15xf32>
    %cst_28 = arith.constant dense<0xFF800000> : vector<15xf32>
    %36 = vector.multi_reduction <maximumf>, %35, %cst_28 [0] : vector<64x15xf32> to vector<15xf32>
    %c0_29 = arith.constant 0 : index
    %c1_30 = arith.constant 1 : index
    %c0_31 = arith.constant 0 : index
    %37 = vector.load %arg6[%c0_29, %c1_30, %c0_31] : memref<1x8x15xf32, #tpu.memory_space<vmem>>, vector<1x1x15xf32>
    %38 = vector.shape_cast %37 : vector<1x1x15xf32> to vector<15xf32>
    %39 = vector.shape_cast %36 : vector<15xf32> to vector<1x1x15xf32>
    tpu.vector_store %arg6[%c0_29, %c1_30, %c0_31], %39 {strides = array<i32>} : memref<1x8x15xf32, #tpu.memory_space<vmem>>, vector<1x1x15xf32>,
    %c0_32 = arith.constant 0 : index
    %c2_33 = arith.constant 2 : index
    %c0_34 = arith.constant 0 : index
    %c0_35 = arith.constant 0 : index
    %40 = vector.load %arg2[%c0_32, %c2_33, %c0_34, %c0_35] : memref<1x8x128x16xbf16, #tpu.memory_space<vmem>>, vector<1x1x128x16xbf16>
    %41 = vector.shape_cast %40 : vector<1x1x128x16xbf16> to vector<128x16xbf16>
    %c0_36 = arith.constant 0 : index
    %c3 = arith.constant 3 : index
    %c0_37 = arith.constant 0 : index
    %c0_38 = arith.constant 0 : index
    %42 = vector.load %arg2[%c0_36, %c3, %c0_37, %c0_38] : memref<1x8x128x16xbf16, #tpu.memory_space<vmem>>, vector<1x1x128x16xbf16>
    %43 = vector.shape_cast %42 : vector<1x1x128x16xbf16> to vector<128x16xbf16>
    %44 = vector.extract_strided_slice %41 {offsets = [0, 0], sizes = [128, 15], strides = [1, 1]} : vector<128x16xbf16> to vector<128x15xbf16>
    %45 = vector.extract_strided_slice %41 {offsets = [0, 1], sizes = [128, 15], strides = [1, 1]} : vector<128x16xbf16> to vector<128x15xbf16>
    %46 = vector.extract_strided_slice %43 {offsets = [0, 0], sizes = [128, 15], strides = [1, 1]} : vector<128x16xbf16> to vector<128x15xbf16>
    %47 = vector.extract_strided_slice %43 {offsets = [0, 1], sizes = [128, 15], strides = [1, 1]} : vector<128x16xbf16> to vector<128x15xbf16>
    %48 = tpu.concatenate %44, %45, %46, %47 in 0 : vector<128x15xbf16>, vector<128x15xbf16>, vector<128x15xbf16>, vector<128x15xbf16> -> vector<512x15xbf16>
    %c0_39 = arith.constant 0 : index
    %c0_40 = arith.constant 0 : index
    %49 = vector.load %arg4[%c0_39, %c0_40] : memref<64x512xbf16, #tpu.memory_space<vmem>>, vector<64x512xbf16>
    %cst_41 = arith.constant dense<0.000000e+00> : vector<64x15xf32>
    %50 = tpu.matmul %49, %48, %cst_41 {dimension_numbers = #tpu.dot_dimension_numbers<[1], [0], [0], [1], [0, 0, 1, 1], [], []>} : vector<64x512xbf16>, vector<512x15xbf16>, vector<64x15xf32> -> vector<64x15xf32>
    %c0_42 = arith.constant 0 : index
    %c0_43 = arith.constant 0 : index
    %51 = vector.load %arg5[%c0_42, %c0_43] : memref<64x1xf32, #tpu.memory_space<vmem>>, vector<64x1xf32>
    %52 = vector.broadcast %51 : vector<64x1xf32> to vector<64x15xf32>
    %53 = arith.addf %50, %52 : vector<64x15xf32>
    %cst_44 = arith.constant 0.000000e+00 : f32
    %54 = vector.broadcast %cst_44 : f32 to vector<64x15xf32>
    %55 = arith.maximumf %53, %54 : vector<64x15xf32>
    %cst_45 = arith.constant dense<0xFF800000> : vector<15xf32>
    %56 = vector.multi_reduction <maximumf>, %55, %cst_45 [0] : vector<64x15xf32> to vector<15xf32>
    %c0_46 = arith.constant 0 : index
    %c2_47 = arith.constant 2 : index
    %c0_48 = arith.constant 0 : index
    %57 = vector.load %arg6[%c0_46, %c2_47, %c0_48] : memref<1x8x15xf32, #tpu.memory_space<vmem>>, vector<1x1x15xf32>
    %58 = vector.shape_cast %57 : vector<1x1x15xf32> to vector<15xf32>
    %59 = vector.shape_cast %56 : vector<15xf32> to vector<1x1x15xf32>
    tpu.vector_store %arg6[%c0_46, %c2_47, %c0_48], %59 {strides = array<i32>} : memref<1x8x15xf32, #tpu.memory_space<vmem>>, vector<1x1x15xf32>,
    %c0_49 = arith.constant 0 : index
    %c3_50 = arith.constant 3 : index
    %c0_51 = arith.constant 0 : index
    %c0_52 = arith.constant 0 : index
    %60 = vector.load %arg2[%c0_49, %c3_50, %c0_51, %c0_52] : memref<1x8x128x16xbf16, #tpu.memory_space<vmem>>, vector<1x1x128x16xbf16>
    %61 = vector.shape_cast %60 : vector<1x1x128x16xbf16> to vector<128x16xbf16>
    %c0_53 = arith.constant 0 : index
    %c4 = arith.constant 4 : index
    %c0_54 = arith.constant 0 : index
    %c0_55 = arith.constant 0 : index
    %62 = vector.load %arg2[%c0_53, %c4, %c0_54, %c0_55] : memref<1x8x128x16xbf16, #tpu.memory_space<vmem>>, vector<1x1x128x16xbf16>
    %63 = vector.shape_cast %62 : vector<1x1x128x16xbf16> to vector<128x16xbf16>
    %64 = vector.extract_strided_slice %61 {offsets = [0, 0], sizes = [128, 15], strides = [1, 1]} : vector<128x16xbf16> to vector<128x15xbf16>
    %65 = vector.extract_strided_slice %61 {offsets = [0, 1], sizes = [128, 15], strides = [1, 1]} : vector<128x16xbf16> to vector<128x15xbf16>
    %66 = vector.extract_strided_slice %63 {offsets = [0, 0], sizes = [128, 15], strides = [1, 1]} : vector<128x16xbf16> to vector<128x15xbf16>
    %67 = vector.extract_strided_slice %63 {offsets = [0, 1], sizes = [128, 15], strides = [1, 1]} : vector<128x16xbf16> to vector<128x15xbf16>
    %68 = tpu.concatenate %64, %65, %66, %67 in 0 : vector<128x15xbf16>, vector<128x15xbf16>, vector<128x15xbf16>, vector<128x15xbf16> -> vector<512x15xbf16>
    %c0_56 = arith.constant 0 : index
    %c0_57 = arith.constant 0 : index
    %69 = vector.load %arg4[%c0_56, %c0_57] : memref<64x512xbf16, #tpu.memory_space<vmem>>, vector<64x512xbf16>
    %cst_58 = arith.constant dense<0.000000e+00> : vector<64x15xf32>
    %70 = tpu.matmul %69, %68, %cst_58 {dimension_numbers = #tpu.dot_dimension_numbers<[1], [0], [0], [1], [0, 0, 1, 1], [], []>} : vector<64x512xbf16>, vector<512x15xbf16>, vector<64x15xf32> -> vector<64x15xf32>
    %c0_59 = arith.constant 0 : index
    %c0_60 = arith.constant 0 : index
    %71 = vector.load %arg5[%c0_59, %c0_60] : memref<64x1xf32, #tpu.memory_space<vmem>>, vector<64x1xf32>
    %72 = vector.broadcast %71 : vector<64x1xf32> to vector<64x15xf32>
    %73 = arith.addf %70, %72 : vector<64x15xf32>
    %cst_61 = arith.constant 0.000000e+00 : f32
    %74 = vector.broadcast %cst_61 : f32 to vector<64x15xf32>
    %75 = arith.maximumf %73, %74 : vector<64x15xf32>
    %cst_62 = arith.constant dense<0xFF800000> : vector<15xf32>
    %76 = vector.multi_reduction <maximumf>, %75, %cst_62 [0] : vector<64x15xf32> to vector<15xf32>
    %c0_63 = arith.constant 0 : index
    %c3_64 = arith.constant 3 : index
    %c0_65 = arith.constant 0 : index
    %77 = vector.load %arg6[%c0_63, %c3_64, %c0_65] : memref<1x8x15xf32, #tpu.memory_space<vmem>>, vector<1x1x15xf32>
    %78 = vector.shape_cast %77 : vector<1x1x15xf32> to vector<15xf32>
    %79 = vector.shape_cast %76 : vector<15xf32> to vector<1x1x15xf32>
    tpu.vector_store %arg6[%c0_63, %c3_64, %c0_65], %79 {strides = array<i32>} : memref<1x8x15xf32, #tpu.memory_space<vmem>>, vector<1x1x15xf32>,
    %c0_66 = arith.constant 0 : index
    %c4_67 = arith.constant 4 : index
    %c0_68 = arith.constant 0 : index
    %c0_69 = arith.constant 0 : index
    %80 = vector.load %arg2[%c0_66, %c4_67, %c0_68, %c0_69] : memref<1x8x128x16xbf16, #tpu.memory_space<vmem>>, vector<1x1x128x16xbf16>
    %81 = vector.shape_cast %80 : vector<1x1x128x16xbf16> to vector<128x16xbf16>
    %c0_70 = arith.constant 0 : index
    %c5 = arith.constant 5 : index
    %c0_71 = arith.constant 0 : index
    %c0_72 = arith.constant 0 : index
    %82 = vector.load %arg2[%c0_70, %c5, %c0_71, %c0_72] : memref<1x8x128x16xbf16, #tpu.memory_space<vmem>>, vector<1x1x128x16xbf16>
    %83 = vector.shape_cast %82 : vector<1x1x128x16xbf16> to vector<128x16xbf16>
    %84 = vector.extract_strided_slice %81 {offsets = [0, 0], sizes = [128, 15], strides = [1, 1]} : vector<128x16xbf16> to vector<128x15xbf16>
    %85 = vector.extract_strided_slice %81 {offsets = [0, 1], sizes = [128, 15], strides = [1, 1]} : vector<128x16xbf16> to vector<128x15xbf16>
    %86 = vector.extract_strided_slice %83 {offsets = [0, 0], sizes = [128, 15], strides = [1, 1]} : vector<128x16xbf16> to vector<128x15xbf16>
    %87 = vector.extract_strided_slice %83 {offsets = [0, 1], sizes = [128, 15], strides = [1, 1]} : vector<128x16xbf16> to vector<128x15xbf16>
    %88 = tpu.concatenate %84, %85, %86, %87 in 0 : vector<128x15xbf16>, vector<128x15xbf16>, vector<128x15xbf16>, vector<128x15xbf16> -> vector<512x15xbf16>
    %c0_73 = arith.constant 0 : index
    %c0_74 = arith.constant 0 : index
    %89 = vector.load %arg4[%c0_73, %c0_74] : memref<64x512xbf16, #tpu.memory_space<vmem>>, vector<64x512xbf16>
    %cst_75 = arith.constant dense<0.000000e+00> : vector<64x15xf32>
    %90 = tpu.matmul %89, %88, %cst_75 {dimension_numbers = #tpu.dot_dimension_numbers<[1], [0], [0], [1], [0, 0, 1, 1], [], []>} : vector<64x512xbf16>, vector<512x15xbf16>, vector<64x15xf32> -> vector<64x15xf32>
    %c0_76 = arith.constant 0 : index
    %c0_77 = arith.constant 0 : index
    %91 = vector.load %arg5[%c0_76, %c0_77] : memref<64x1xf32, #tpu.memory_space<vmem>>, vector<64x1xf32>
    %92 = vector.broadcast %91 : vector<64x1xf32> to vector<64x15xf32>
    %93 = arith.addf %90, %92 : vector<64x15xf32>
    %cst_78 = arith.constant 0.000000e+00 : f32
    %94 = vector.broadcast %cst_78 : f32 to vector<64x15xf32>
    %95 = arith.maximumf %93, %94 : vector<64x15xf32>
    %cst_79 = arith.constant dense<0xFF800000> : vector<15xf32>
    %96 = vector.multi_reduction <maximumf>, %95, %cst_79 [0] : vector<64x15xf32> to vector<15xf32>
    %c0_80 = arith.constant 0 : index
    %c4_81 = arith.constant 4 : index
    %c0_82 = arith.constant 0 : index
    %97 = vector.load %arg6[%c0_80, %c4_81, %c0_82] : memref<1x8x15xf32, #tpu.memory_space<vmem>>, vector<1x1x15xf32>
    %98 = vector.shape_cast %97 : vector<1x1x15xf32> to vector<15xf32>
    %99 = vector.shape_cast %96 : vector<15xf32> to vector<1x1x15xf32>
    tpu.vector_store %arg6[%c0_80, %c4_81, %c0_82], %99 {strides = array<i32>} : memref<1x8x15xf32, #tpu.memory_space<vmem>>, vector<1x1x15xf32>,
    %c0_83 = arith.constant 0 : index
    %c5_84 = arith.constant 5 : index
    %c0_85 = arith.constant 0 : index
    %c0_86 = arith.constant 0 : index
    %100 = vector.load %arg2[%c0_83, %c5_84, %c0_85, %c0_86] : memref<1x8x128x16xbf16, #tpu.memory_space<vmem>>, vector<1x1x128x16xbf16>
    %101 = vector.shape_cast %100 : vector<1x1x128x16xbf16> to vector<128x16xbf16>
    %c0_87 = arith.constant 0 : index
    %c6 = arith.constant 6 : index
    %c0_88 = arith.constant 0 : index
    %c0_89 = arith.constant 0 : index
    %102 = vector.load %arg2[%c0_87, %c6, %c0_88, %c0_89] : memref<1x8x128x16xbf16, #tpu.memory_space<vmem>>, vector<1x1x128x16xbf16>
    %103 = vector.shape_cast %102 : vector<1x1x128x16xbf16> to vector<128x16xbf16>
    %104 = vector.extract_strided_slice %101 {offsets = [0, 0], sizes = [128, 15], strides = [1, 1]} : vector<128x16xbf16> to vector<128x15xbf16>
    %105 = vector.extract_strided_slice %101 {offsets = [0, 1], sizes = [128, 15], strides = [1, 1]} : vector<128x16xbf16> to vector<128x15xbf16>
    %106 = vector.extract_strided_slice %103 {offsets = [0, 0], sizes = [128, 15], strides = [1, 1]} : vector<128x16xbf16> to vector<128x15xbf16>
    %107 = vector.extract_strided_slice %103 {offsets = [0, 1], sizes = [128, 15], strides = [1, 1]} : vector<128x16xbf16> to vector<128x15xbf16>
    %108 = tpu.concatenate %104, %105, %106, %107 in 0 : vector<128x15xbf16>, vector<128x15xbf16>, vector<128x15xbf16>, vector<128x15xbf16> -> vector<512x15xbf16>
    %c0_90 = arith.constant 0 : index
    %c0_91 = arith.constant 0 : index
    %109 = vector.load %arg4[%c0_90, %c0_91] : memref<64x512xbf16, #tpu.memory_space<vmem>>, vector<64x512xbf16>
    %cst_92 = arith.constant dense<0.000000e+00> : vector<64x15xf32>
    %110 = tpu.matmul %109, %108, %cst_92 {dimension_numbers = #tpu.dot_dimension_numbers<[1], [0], [0], [1], [0, 0, 1, 1], [], []>} : vector<64x512xbf16>, vector<512x15xbf16>, vector<64x15xf32> -> vector<64x15xf32>
    %c0_93 = arith.constant 0 : index
    %c0_94 = arith.constant 0 : index
    %111 = vector.load %arg5[%c0_93, %c0_94] : memref<64x1xf32, #tpu.memory_space<vmem>>, vector<64x1xf32>
    %112 = vector.broadcast %111 : vector<64x1xf32> to vector<64x15xf32>
    %113 = arith.addf %110, %112 : vector<64x15xf32>
    %cst_95 = arith.constant 0.000000e+00 : f32
    %114 = vector.broadcast %cst_95 : f32 to vector<64x15xf32>
    %115 = arith.maximumf %113, %114 : vector<64x15xf32>
    %cst_96 = arith.constant dense<0xFF800000> : vector<15xf32>
    %116 = vector.multi_reduction <maximumf>, %115, %cst_96 [0] : vector<64x15xf32> to vector<15xf32>
    %c0_97 = arith.constant 0 : index
    %c5_98 = arith.constant 5 : index
    %c0_99 = arith.constant 0 : index
    %117 = vector.load %arg6[%c0_97, %c5_98, %c0_99] : memref<1x8x15xf32, #tpu.memory_space<vmem>>, vector<1x1x15xf32>
    %118 = vector.shape_cast %117 : vector<1x1x15xf32> to vector<15xf32>
    %119 = vector.shape_cast %116 : vector<15xf32> to vector<1x1x15xf32>
    tpu.vector_store %arg6[%c0_97, %c5_98, %c0_99], %119 {strides = array<i32>} : memref<1x8x15xf32, #tpu.memory_space<vmem>>, vector<1x1x15xf32>,
    %c0_100 = arith.constant 0 : index
    %c6_101 = arith.constant 6 : index
    %c0_102 = arith.constant 0 : index
    %c0_103 = arith.constant 0 : index
    %120 = vector.load %arg2[%c0_100, %c6_101, %c0_102, %c0_103] : memref<1x8x128x16xbf16, #tpu.memory_space<vmem>>, vector<1x1x128x16xbf16>
    %121 = vector.shape_cast %120 : vector<1x1x128x16xbf16> to vector<128x16xbf16>
    %c0_104 = arith.constant 0 : index
    %c7 = arith.constant 7 : index
    %c0_105 = arith.constant 0 : index
    %c0_106 = arith.constant 0 : index
    %122 = vector.load %arg2[%c0_104, %c7, %c0_105, %c0_106] : memref<1x8x128x16xbf16, #tpu.memory_space<vmem>>, vector<1x1x128x16xbf16>
    %123 = vector.shape_cast %122 : vector<1x1x128x16xbf16> to vector<128x16xbf16>
    %124 = vector.extract_strided_slice %121 {offsets = [0, 0], sizes = [128, 15], strides = [1, 1]} : vector<128x16xbf16> to vector<128x15xbf16>
    %125 = vector.extract_strided_slice %121 {offsets = [0, 1], sizes = [128, 15], strides = [1, 1]} : vector<128x16xbf16> to vector<128x15xbf16>
    %126 = vector.extract_strided_slice %123 {offsets = [0, 0], sizes = [128, 15], strides = [1, 1]} : vector<128x16xbf16> to vector<128x15xbf16>
    %127 = vector.extract_strided_slice %123 {offsets = [0, 1], sizes = [128, 15], strides = [1, 1]} : vector<128x16xbf16> to vector<128x15xbf16>
    %128 = tpu.concatenate %124, %125, %126, %127 in 0 : vector<128x15xbf16>, vector<128x15xbf16>, vector<128x15xbf16>, vector<128x15xbf16> -> vector<512x15xbf16>
    %c0_107 = arith.constant 0 : index
    %c0_108 = arith.constant 0 : index
    %129 = vector.load %arg4[%c0_107, %c0_108] : memref<64x512xbf16, #tpu.memory_space<vmem>>, vector<64x512xbf16>
    %cst_109 = arith.constant dense<0.000000e+00> : vector<64x15xf32>
    %130 = tpu.matmul %129, %128, %cst_109 {dimension_numbers = #tpu.dot_dimension_numbers<[1], [0], [0], [1], [0, 0, 1, 1], [], []>} : vector<64x512xbf16>, vector<512x15xbf16>, vector<64x15xf32> -> vector<64x15xf32>
    %c0_110 = arith.constant 0 : index
    %c0_111 = arith.constant 0 : index
    %131 = vector.load %arg5[%c0_110, %c0_111] : memref<64x1xf32, #tpu.memory_space<vmem>>, vector<64x1xf32>
    %132 = vector.broadcast %131 : vector<64x1xf32> to vector<64x15xf32>
    %133 = arith.addf %130, %132 : vector<64x15xf32>
    %cst_112 = arith.constant 0.000000e+00 : f32
    %134 = vector.broadcast %cst_112 : f32 to vector<64x15xf32>
    %135 = arith.maximumf %133, %134 : vector<64x15xf32>
    %cst_113 = arith.constant dense<0xFF800000> : vector<15xf32>
    %136 = vector.multi_reduction <maximumf>, %135, %cst_113 [0] : vector<64x15xf32> to vector<15xf32>
    %c0_114 = arith.constant 0 : index
    %c6_115 = arith.constant 6 : index
    %c0_116 = arith.constant 0 : index
    %137 = vector.load %arg6[%c0_114, %c6_115, %c0_116] : memref<1x8x15xf32, #tpu.memory_space<vmem>>, vector<1x1x15xf32>
    %138 = vector.shape_cast %137 : vector<1x1x15xf32> to vector<15xf32>
    %139 = vector.shape_cast %136 : vector<15xf32> to vector<1x1x15xf32>
    tpu.vector_store %arg6[%c0_114, %c6_115, %c0_116], %139 {strides = array<i32>} : memref<1x8x15xf32, #tpu.memory_space<vmem>>, vector<1x1x15xf32>,
    %c0_117 = arith.constant 0 : index
    %c7_118 = arith.constant 7 : index
    %c0_119 = arith.constant 0 : index
    %c0_120 = arith.constant 0 : index
    %140 = vector.load %arg2[%c0_117, %c7_118, %c0_119, %c0_120] : memref<1x8x128x16xbf16, #tpu.memory_space<vmem>>, vector<1x1x128x16xbf16>
    %141 = vector.shape_cast %140 : vector<1x1x128x16xbf16> to vector<128x16xbf16>
    %c0_121 = arith.constant 0 : index
    %c0_122 = arith.constant 0 : index
    %c0_123 = arith.constant 0 : index
    %c0_124 = arith.constant 0 : index
    %142 = vector.load %arg3[%c0_121, %c0_122, %c0_123, %c0_124] : memref<1x1x128x16xbf16, #tpu.memory_space<vmem>>, vector<1x1x128x16xbf16>
    %143 = vector.shape_cast %142 : vector<1x1x128x16xbf16> to vector<128x16xbf16>
    %144 = vector.extract_strided_slice %141 {offsets = [0, 0], sizes = [128, 15], strides = [1, 1]} : vector<128x16xbf16> to vector<128x15xbf16>
    %145 = vector.extract_strided_slice %141 {offsets = [0, 1], sizes = [128, 15], strides = [1, 1]} : vector<128x16xbf16> to vector<128x15xbf16>
    %146 = vector.extract_strided_slice %143 {offsets = [0, 0], sizes = [128, 15], strides = [1, 1]} : vector<128x16xbf16> to vector<128x15xbf16>
    %147 = vector.extract_strided_slice %143 {offsets = [0, 1], sizes = [128, 15], strides = [1, 1]} : vector<128x16xbf16> to vector<128x15xbf16>
    %148 = tpu.concatenate %144, %145, %146, %147 in 0 : vector<128x15xbf16>, vector<128x15xbf16>, vector<128x15xbf16>, vector<128x15xbf16> -> vector<512x15xbf16>
    %c0_125 = arith.constant 0 : index
    %c0_126 = arith.constant 0 : index
    %149 = vector.load %arg4[%c0_125, %c0_126] : memref<64x512xbf16, #tpu.memory_space<vmem>>, vector<64x512xbf16>
    %cst_127 = arith.constant dense<0.000000e+00> : vector<64x15xf32>
    %150 = tpu.matmul %149, %148, %cst_127 {dimension_numbers = #tpu.dot_dimension_numbers<[1], [0], [0], [1], [0, 0, 1, 1], [], []>} : vector<64x512xbf16>, vector<512x15xbf16>, vector<64x15xf32> -> vector<64x15xf32>
    %c0_128 = arith.constant 0 : index
    %c0_129 = arith.constant 0 : index
    %151 = vector.load %arg5[%c0_128, %c0_129] : memref<64x1xf32, #tpu.memory_space<vmem>>, vector<64x1xf32>
    %152 = vector.broadcast %151 : vector<64x1xf32> to vector<64x15xf32>
    %153 = arith.addf %150, %152 : vector<64x15xf32>
    %cst_130 = arith.constant 0.000000e+00 : f32
    %154 = vector.broadcast %cst_130 : f32 to vector<64x15xf32>
    %155 = arith.maximumf %153, %154 : vector<64x15xf32>
    %cst_131 = arith.constant dense<0xFF800000> : vector<15xf32>
    %156 = vector.multi_reduction <maximumf>, %155, %cst_131 [0] : vector<64x15xf32> to vector<15xf32>
    %c0_132 = arith.constant 0 : index
    %c7_133 = arith.constant 7 : index
    %c0_134 = arith.constant 0 : index
    %157 = vector.load %arg6[%c0_132, %c7_133, %c0_134] : memref<1x8x15xf32, #tpu.memory_space<vmem>>, vector<1x1x15xf32>
    %158 = vector.shape_cast %157 : vector<1x1x15xf32> to vector<15xf32>
    %159 = vector.shape_cast %156 : vector<15xf32> to vector<1x1x15xf32>
    tpu.vector_store %arg6[%c0_132, %c7_133, %c0_134], %159 {strides = array<i32>} : memref<1x8x15xf32, #tpu.memory_space<vmem>>, vector<1x1x15xf32>,
    return
  }
  func.func @transform_0(%arg0: i32, %arg1: i32) -> (i32, i32, i32, i32) {
    %c0_i32 = arith.constant 0 : i32
    %c0_i32_0 = arith.constant 0 : i32
    %c0_i32_1 = arith.constant 0 : i32
    return %arg0, %arg1, %c0_i32, %c0_i32_0 : i32, i32, i32, i32
  }
  func.func @transform_1(%arg0: i32, %arg1: i32) -> (i32, i32, i32, i32) {
    %c0_i32 = arith.constant 0 : i32
    %c0_i32_0 = arith.constant 0 : i32
    %c0_i32_1 = arith.constant 0 : i32
    return %arg0, %arg1, %c0_i32, %c0_i32_0 : i32, i32, i32, i32
  }
  func.func @transform_2(%arg0: i32, %arg1: i32) -> (i32, i32) {
    %c0_i32 = arith.constant 0 : i32
    %c0_i32_0 = arith.constant 0 : i32
    %c0_i32_1 = arith.constant 0 : i32
    return %c0_i32, %c0_i32_0 : i32, i32
  }
  func.func @transform_3(%arg0: i32, %arg1: i32) -> (i32, i32) {
    %c0_i32 = arith.constant 0 : i32
    %c0_i32_0 = arith.constant 0 : i32
    %c0_i32_1 = arith.constant 0 : i32
    return %c0_i32, %c0_i32_0 : i32, i32
  }
  func.func @transform_4(%arg0: i32, %arg1: i32) -> (i32, i32, i32) {
    %c0_i32 = arith.constant 0 : i32
    %c0_i32_0 = arith.constant 0 : i32
    return %arg0, %arg1, %c0_i32 : i32, i32, i32
  }
}

</mosaic_0001>

<llo_original>
// kernel: amer_loc_head.4
$region0: #{amer_loc_head.4}
  #allocation0 [shape = 'u32[]', space=smem, size = 0x4, offset = 0x4, fixed_abs, tag = 'smem constant byte address 0x4 - core index']
  #allocation1 [shape = 'u32[144,128]{1,0:T(1,128)}', space=vmem, size = 0x12000, scoped, tag = 'internal scratch']
  %s0 = inlined_call_operand.vmem [shape: bf16[2,256,64], index: 0, kind: input, shape index: {}]
  %s1 = inlined_call_operand.vmem [shape: bf16[128,256], index: 1, kind: input, shape index: {}]
  %s2 = inlined_call_operand.vmem [shape: f32[128,1], index: 2, kind: input, shape index: {}]
  %s3 = inlined_call_operand.vmem [shape: bf16[2,128,64], index: 3, kind: output, shape index: {}]
  %s4 = sld [smem:[#allocation0]]
  $region45: #{amer_loc_head.4} parent=0
    _
  %s6 = ssub.s32 1, %s4
  %s7 = scalar_select 0, %s6, %s4
  loop: start=0, step=1, limit=4
  $region2: #{amer_loc_head.4} parent=0 // loop_pre_header
    _
  $region3: #{amer_loc_head.4} parent=0 // loop_header
    %s9 = sphi 0, %s13
    %p10 = scmp.ge.s32.totalorder %s9, 4
    %s16 = sphi 0, %s28
    %s17 = sphi 0, %s24
    %s18 = sphi 0, %s16
    %s19 = sphi 0, %s17
    %s20 = sphi 0, %s18
    %s21 = sphi 0, %s19
    %s33 = sphi 0, %s35
    %s36 = sphi 0, %s33
    %s37 = sphi 0, %s36
    %s53 = sphi 0, %s37
    %s57 = sphi 0, %s57
    %s59 = sphi 0, %s57
    %s60 = sphi 0, %s59
    %s74 = sphi 0, %s60
    %s78 = sphi 0, %s78
    %s80 = sphi 0, %s78
    %s81 = sphi 0, %s80
    %s95 = sphi 0, %s81
    %s103 = sphi 0, %s105
    %s106 = sphi 0, %s103
    %s107 = sphi 0, %s106
    %s123 = sphi 0, %s107
  $region4: #{amer_loc_head.4} parent=0 // loop_header_branch
    %12 = sbr.rel (%p10) target = $region8
  $region5: #{amer_loc_head.4} parent=0 // loop_body
    %s14 = ssub.s32 %s9, 1
    %s15 = ssub.s32 %s9, 2
    %s22 = sadd.s32 1, %s17
    %p23 = scmp.ge.s32.totalorder %s22, 1
    %s24 = scalar_select %p23, 0, %s22
    %s25 = sadd.s32 1, %s16
    %s26 = scalar_select %p23, %s25, %s16
    %p27 = scmp.ge.s32.totalorder %s26, 2
    %s28 = scalar_select %p27, 0, %s26
    %s29 = ssub.s32 %s16, %s28
    %s30 = ssub.s32 %s17, %s24
    %s31 = sor.u32 %s29, %s30
    %p32 = scmp.eq.s32.totalorder %s31, 0
    %s34 = sadd.s32 %s33, 1
    %s35 = scalar_select %p32, %s33, %s34
    %p38 = pneg %p32
    %p39 = scmp.eq.s32.totalorder %s9, 1
    %p40 = por %p38, %p39
    %p41 = scmp.ne.s32.totalorder %s33, %s36
    %p42 = scmp.eq.s32.totalorder %s9, 0
    %p43 = por %p41, %p42
    %p44 = scmp.ne.s32.totalorder %s33, %s36
    %p45 = scmp.eq.s32.totalorder %s14, 1
    %p46 = por %p44, %p45
    %p47 = scmp.ne.s32.totalorder %s36, %s37
    %p48 = scmp.eq.s32.totalorder %s14, 0
    %p49 = por %p47, %p48
    %p50 = scmp.ne.s32.totalorder %s36, %s37
    %p51 = scmp.eq.s32.totalorder %s15, 1
    %p52 = por %p50, %p51
    %p54 = scmp.ne.s32.totalorder %s37, %s53
    %p55 = scmp.eq.s32.totalorder %s15, 0
    %p56 = por %p54, %p55
    %s58 = sadd.s32 %s57, 1
    %p61 = scmp.eq.s32.totalorder %s9, 1
    %p62 = scmp.ne.s32.totalorder %s57, %s59
    %p63 = scmp.eq.s32.totalorder %s9, 0
    %p64 = por %p62, %p63
    %p65 = scmp.ne.s32.totalorder %s57, %s59
    %p66 = scmp.eq.s32.totalorder %s14, 1
    %p67 = por %p65, %p66
    %p68 = scmp.ne.s32.totalorder %s59, %s60
    %p69 = scmp.eq.s32.totalorder %s14, 0
    %p70 = por %p68, %p69
    %p71 = scmp.ne.s32.totalorder %s59, %s60
    %p72 = scmp.eq.s32.totalorder %s15, 1
    %p73 = por %p71, %p72
    %p75 = scmp.ne.s32.totalorder %s60, %s74
    %p76 = scmp.eq.s32.totalorder %s15, 0
    %p77 = por %p75, %p76
    %s79 = sadd.s32 %s78, 1
    %p82 = scmp.eq.s32.totalorder %s9, 1
    %p83 = scmp.ne.s32.totalorder %s78, %s80
    %p84 = scmp.eq.s32.totalorder %s9, 0
    %p85 = por %p83, %p84
    %p86 = scmp.ne.s32.totalorder %s78, %s80
    %p87 = scmp.eq.s32.totalorder %s14, 1
    %p88 = por %p86, %p87
    %p89 = scmp.ne.s32.totalorder %s80, %s81
    %p90 = scmp.eq.s32.totalorder %s14, 0
    %p91 = por %p89, %p90
    %p92 = scmp.ne.s32.totalorder %s80, %s81
    %p93 = scmp.eq.s32.totalorder %s15, 1
    %p94 = por %p92, %p93
    %p96 = scmp.ne.s32.totalorder %s81, %s95
    %p97 = scmp.eq.s32.totalorder %s15, 0
    %p98 = por %p96, %p97
    %s99 = ssub.s32 %s16, %s28
    %s100 = ssub.s32 %s17, %s24
    %s101 = sor.u32 %s99, %s100
    %p102 = scmp.eq.s32.totalorder %s101, 0
    %s104 = sadd.s32 %s103, 1
    %s105 = scalar_select %p102, %s103, %s104
    %p108 = pneg %p102
    %p109 = scmp.eq.s32.totalorder %s9, 1
    %p110 = por %p108, %p109
    %p111 = scmp.ne.s32.totalorder %s103, %s106
    %p112 = scmp.eq.s32.totalorder %s9, 0
    %p113 = por %p111, %p112
    %p114 = scmp.ne.s32.totalorder %s103, %s106
    %p115 = scmp.eq.s32.totalorder %s14, 1
    %p116 = por %p114, %p115
    %p117 = scmp.ne.s32.totalorder %s106, %s107
    %p118 = scmp.eq.s32.totalorder %s14, 0
    %p119 = por %p117, %p118
    %p120 = scmp.ne.s32.totalorder %s106, %s107
    %p121 = scmp.eq.s32.totalorder %s15, 1
    %p122 = por %p120, %p121
    %p124 = scmp.ne.s32.totalorder %s107, %s123
    %p125 = scmp.eq.s32.totalorder %s15, 0
    %p126 = por %p124, %p125
    %p127 = scmp.le.s32.totalorder 1, %s9
    %p128 = scmp.lt.s32.totalorder %s9, 3
    %p129 = pnand %p127, %p128
    %p130 = pneg %p129
    // Predicated region
    $region9: #{amer_loc_head.4} parent=5 // pred_check
      _
    $region10: #{amer_loc_head.4} parent=5 // pred_check_branch
      %132 = sbr.rel (%p129) target = $region12
    $region11: #{amer_loc_head.4} parent=5 // pred_region
      %s133 = ssub.s32 %s9, 1
      // Predicated region
      $region13: #{amer_loc_head.4} parent=11 // pred_check
        %p134 = pneg %p70
      $region14: #{amer_loc_head.4} parent=11 // pred_check_branch
        %136 = sbr.rel (%p134) target = $region16
      $region15: #{amer_loc_head.4} parent=11 // pred_region
        _
      $region16: #{amer_loc_head.4} parent=11 // pred_fallthru
        _
      // Predicated region
      $region17: #{amer_loc_head.4} parent=11 // pred_check
        %p137 = pneg %p91
      $region18: #{amer_loc_head.4} parent=11 // pred_check_branch
        %139 = sbr.rel (%p137) target = $region20
      $region19: #{amer_loc_head.4} parent=11 // pred_region
        _
      $region20: #{amer_loc_head.4} parent=11 // pred_fallthru
        _
    $region12: #{amer_loc_head.4} parent=5 // pred_fallthru
      _
    %p140 = scmp.lt.s32.totalorder %s9, 2
    // Predicated region
    $region21: #{amer_loc_head.4} parent=5 // pred_check
      %p141 = pneg %p140
    $region22: #{amer_loc_head.4} parent=5 // pred_check_branch
      %143 = sbr.rel (%p141) target = $region24
    $region23: #{amer_loc_head.4} parent=5 // pred_region
      // Predicated region
      $region25: #{amer_loc_head.4} parent=23 // pred_check
        %p144 = pneg %p43
      $region26: #{amer_loc_head.4} parent=23 // pred_check_branch
        %146 = sbr.rel (%p144) target = $region28
      $region27: #{amer_loc_head.4} parent=23 // pred_region
        %p147 = scmp.lt.s32.totalorder %s16, 1
        %s148 = scalar_select %p147, %s16, 1
        %p149 = scmp.lt.s32.totalorder %s17, 0
        %s150 = scalar_select %p149, %s17, 0
        %s151 = smul.addr %s148, 32
        %s152 = sadd.s32 %s150, %s151
        %s153 = smul.addr %s152, 4
        %s154 = scalar_lea.vmem %s0, %s153
      $region28: #{amer_loc_head.4} parent=23 // pred_fallthru
        _
    $region24: #{amer_loc_head.4} parent=5 // pred_fallthru
      _
    %p155 = scmp.le.s32.totalorder 1, %s9
    %p156 = scmp.lt.s32.totalorder %s9, 3
    %p157 = pnand %p155, %p156
    %p158 = pneg %p157
    // Predicated region
    $region29: #{amer_loc_head.4} parent=5 // pred_check
      _
    $region30: #{amer_loc_head.4} parent=5 // pred_check_branch
      %160 = sbr.rel (%p157) target = $region32
    $region31: #{amer_loc_head.4} parent=5 // pred_region
      %s161 = ssub.s32 %s9, 1
      %p162 = scmp.lt.s32.totalorder %s18, 1
      %s163 = scalar_select %p162, %s18, 1
      %p164 = scmp.lt.s32.totalorder %s19, 0
      %s165 = scalar_select %p164, %s19, 0
      %s166 = smul.addr %s163, 32
      %s167 = sadd.s32 %s165, %s166
      %s168 = smul.addr %s167, 4
      %s169 = scalar_lea.vmem %s0, %s168
      %p170 = pneg %p49
      %p171 = pneg %p46
      %p172 = pneg %p70
      %p173 = pneg %p67
      %p174 = pneg %p91
      %p175 = pneg %p88
      %p176 = pneg %p119
      %p177 = pneg %p116
      %p178 = scmp.lt.s32.totalorder %s18, 1
      %s179 = scalar_select %p178, %s18, 1
      %p180 = scmp.lt.s32.totalorder %s19, 0
      %s181 = scalar_select %p180, %s19, 0
      %s182 = smul.addr %s179, 16
      %s183 = sadd.s32 %s181, %s182
      %s184 = smul.addr %s183, 4
      %s185 = scalar_lea.vmem %s3, %s184
      %p186 = scmp.lt.s32.totalorder %s18, 1
      %s187 = scalar_select %p186, %s18, 1
      %p188 = scmp.lt.s32.totalorder %s19, 0
      %s189 = scalar_select %p188, %s19, 0
      %s190 = smul.addr %s187, 32
      %s191 = sadd.s32 %s189, %s190
      %s192 = smul.addr %s191, 4
      %s193 = scalar_lea.vmem %s0, %s192
      %p194 = scmp.lt.s32.totalorder %s18, 1
      %s195 = scalar_select %p194, %s18, 1
      %p196 = scmp.lt.s32.totalorder %s19, 0
      %s197 = scalar_select %p196, %s19, 0
      %s198 = smul.addr %s195, 16
      %s199 = sadd.s32 %s197, %s198
      %s200 = smul.addr %s199, 4
      %s201 = scalar_lea.vmem %s3, %s200
      %v203 = vld [vmem:[%s193] sm:$0xf]
      %v204 = vld [vmem:[%s193 + $0x4] sm:$0xf]
      %v205 = vld [vmem:[%s193 + $0x8] sm:$0xf]
      %v206 = vld [vmem:[%s193 + $0xc] sm:$0xf]
      %v207 = vld [vmem:[%s193 + $0x10] sm:$0xf]
      %v208 = vld [vmem:[%s193 + $0x14] sm:$0xf]
      %v209 = vld [vmem:[%s193 + $0x18] sm:$0xf]
      %v210 = vld [vmem:[%s193 + $0x1c] sm:$0xf]
      %v211 = vld [vmem:[%s193 + $0x20] sm:$0xf]
      %v212 = vld [vmem:[%s193 + $0x24] sm:$0xf]
      %v213 = vld [vmem:[%s193 + $0x28] sm:$0xf]
      %v214 = vld [vmem:[%s193 + $0x2c] sm:$0xf]
      %v215 = vld [vmem:[%s193 + $0x30] sm:$0xf]
      %v216 = vld [vmem:[%s193 + $0x34] sm:$0xf]
      %v217 = vld [vmem:[%s193 + $0x38] sm:$0xf]
      %v218 = vld [vmem:[%s193 + $0x3c] sm:$0xf]
      %v219 = vld [vmem:[%s193 + $0x40] sm:$0xf]
      %v220 = vld [vmem:[%s193 + $0x44] sm:$0xf]
      %v221 = vld [vmem:[%s193 + $0x48] sm:$0xf]
      %v222 = vld [vmem:[%s193 + $0x4c] sm:$0xf]
      %v223 = vld [vmem:[%s193 + $0x50] sm:$0xf]
      %v224 = vld [vmem:[%s193 + $0x54] sm:$0xf]
      %v225 = vld [vmem:[%s193 + $0x58] sm:$0xf]
      %v226 = vld [vmem:[%s193 + $0x5c] sm:$0xf]
      %v227 = vld [vmem:[%s193 + $0x60] sm:$0xf]
      %v228 = vld [vmem:[%s193 + $0x64] sm:$0xf]
      %v229 = vld [vmem:[%s193 + $0x68] sm:$0xf]
      %v230 = vld [vmem:[%s193 + $0x6c] sm:$0xf]
      %v231 = vld [vmem:[%s193 + $0x70] sm:$0xf]
      %v232 = vld [vmem:[%s193 + $0x74] sm:$0xf]
      %v233 = vld [vmem:[%s193 + $0x78] sm:$0xf]
      %v234 = vld [vmem:[%s193 + $0x7c] sm:$0xf]
      %v235 = vld [vmem:[%s1] sm:$0xff]
      %v236 = vld [vmem:[%s1 + $0x8] sm:$0xff]
      %v237 = vld [vmem:[%s1 + $0x10] sm:$0xff]
      %v238 = vld [vmem:[%s1 + $0x18] sm:$0xff]
      %v239 = vld [vmem:[%s1 + $0x20] sm:$0xff]
      %v240 = vld [vmem:[%s1 + $0x28] sm:$0xff]
      %v241 = vld [vmem:[%s1 + $0x30] sm:$0xff]
      %v242 = vld [vmem:[%s1 + $0x38] sm:$0xff]
      %v243 = vld [vmem:[%s1 + $0x40] sm:$0xff]
      %v244 = vld [vmem:[%s1 + $0x48] sm:$0xff]
      %v245 = vld [vmem:[%s1 + $0x50] sm:$0xff]
      %v246 = vld [vmem:[%s1 + $0x58] sm:$0xff]
      %v247 = vld [vmem:[%s1 + $0x60] sm:$0xff]
      %v248 = vld [vmem:[%s1 + $0x68] sm:$0xff]
      %v249 = vld [vmem:[%s1 + $0x70] sm:$0xff]
      %v250 = vld [vmem:[%s1 + $0x78] sm:$0xff]
      %v251 = vld [vmem:[%s2] sm:$0xff]
      %v252 = vld [vmem:[%s2 + $0x8] sm:$0xff]
      %v253 = vld [vmem:[%s2 + $0x10] sm:$0xff]
      %v254 = vld [vmem:[%s2 + $0x18] sm:$0xff]
      %v255 = vld [vmem:[%s2 + $0x20] sm:$0xff]
      %v256 = vld [vmem:[%s2 + $0x28] sm:$0xff]
      %v257 = vld [vmem:[%s2 + $0x30] sm:$0xff]
      %v258 = vld [vmem:[%s2 + $0x38] sm:$0xff]
      %v259 = vld [vmem:[%s2 + $0x40] sm:$0xff]
      %v260 = vld [vmem:[%s2 + $0x48] sm:$0xff]
      %v261 = vld [vmem:[%s2 + $0x50] sm:$0xff]
      %v262 = vld [vmem:[%s2 + $0x58] sm:$0xff]
      %v263 = vld [vmem:[%s2 + $0x60] sm:$0xff]
      %v264 = vld [vmem:[%s2 + $0x68] sm:$0xff]
      %v265 = vld [vmem:[%s2 + $0x70] sm:$0xff]
      %v266 = vld [vmem:[%s2 + $0x78] sm:$0xff]
      %268 = vset.pattern.permute.xlu0 0
      %269 = vperm.xlu0 %268, %v251
      %v270 = vpop.permute.xlu0 %269
      %273 = vset.pattern.permute.xlu0 0
      %274 = vperm.xlu0 %273, %v252
      %v275 = vpop.permute.xlu0 %274
      %278 = vset.pattern.permute.xlu0 0
      %279 = vperm.xlu0 %278, %v253
      %v280 = vpop.permute.xlu0 %279
      %283 = vset.pattern.permute.xlu0 0
      %284 = vperm.xlu0 %283, %v254
      %v285 = vpop.permute.xlu0 %284
      %288 = vset.pattern.permute.xlu0 0
      %289 = vperm.xlu0 %288, %v255
      %v290 = vpop.permute.xlu0 %289
      %293 = vset.pattern.permute.xlu0 0
      %294 = vperm.xlu0 %293, %v256
      %v295 = vpop.permute.xlu0 %294
      %298 = vset.pattern.permute.xlu0 0
      %299 = vperm.xlu0 %298, %v257
      %v300 = vpop.permute.xlu0 %299
      %303 = vset.pattern.permute.xlu0 0
      %304 = vperm.xlu0 %303, %v258
      %v305 = vpop.permute.xlu0 %304
      %308 = vset.pattern.permute.xlu0 0
      %309 = vperm.xlu0 %308, %v259
      %v310 = vpop.permute.xlu0 %309
      %313 = vset.pattern.permute.xlu0 0
      %314 = vperm.xlu0 %313, %v260
      %v315 = vpop.permute.xlu0 %314
      %318 = vset.pattern.permute.xlu0 0
      %319 = vperm.xlu0 %318, %v261
      %v320 = vpop.permute.xlu0 %319
      %323 = vset.pattern.permute.xlu0 0
      %324 = vperm.xlu0 %323, %v262
      %v325 = vpop.permute.xlu0 %324
      %328 = vset.pattern.permute.xlu0 0
      %329 = vperm.xlu0 %328, %v263
      %v330 = vpop.permute.xlu0 %329
      %333 = vset.pattern.permute.xlu0 0
      %334 = vperm.xlu0 %333, %v264
      %v335 = vpop.permute.xlu0 %334
      %338 = vset.pattern.permute.xlu0 0
      %339 = vperm.xlu0 %338, %v265
      %v340 = vpop.permute.xlu0 %339
      %343 = vset.pattern.permute.xlu0 0
      %344 = vperm.xlu0 %343, %v266
      %v345 = vpop.permute.xlu0 %344
      %v363 = vunpack.c.l.b16 %v235
      %v364 = vunpack.c.h.b16 %v235
      %v365 = vunpack.c.l.b16 %v236
      %v366 = vunpack.c.h.b16 %v236
      %v367 = vunpack.c.l.b16 %v237
      %v368 = vunpack.c.h.b16 %v237
      %v369 = vunpack.c.l.b16 %v238
      %v370 = vunpack.c.h.b16 %v238
      %v371 = vunpack.c.l.b16 %v239
      %v372 = vunpack.c.h.b16 %v239
      %v373 = vunpack.c.l.b16 %v240
      %v374 = vunpack.c.h.b16 %v240
      %v375 = vunpack.c.l.b16 %v241
      %v376 = vunpack.c.h.b16 %v241
      %v377 = vunpack.c.l.b16 %v242
      %v378 = vunpack.c.h.b16 %v242
      %v379 = vunpack.c.l.b16 %v243
      %v380 = vunpack.c.h.b16 %v243
      %v381 = vunpack.c.l.b16 %v244
      %v382 = vunpack.c.h.b16 %v244
      %v383 = vunpack.c.l.b16 %v245
      %v384 = vunpack.c.h.b16 %v245
      %v385 = vunpack.c.l.b16 %v246
      %v386 = vunpack.c.h.b16 %v246
      %v387 = vunpack.c.l.b16 %v247
      %v388 = vunpack.c.h.b16 %v247
      %v389 = vunpack.c.l.b16 %v248
      %v390 = vunpack.c.h.b16 %v248
      %v391 = vunpack.c.l.b16 %v249
      %v392 = vunpack.c.h.b16 %v249
      %v393 = vunpack.c.l.b16 %v250
      %v394 = vunpack.c.h.b16 %v250
      %v395 = vpack.c.b16 %v365, %v363
      %v396 = vpack.c.b16 %v366, %v364
      %v397 = vpack.c.b16 %v369, %v367
      %v398 = vpack.c.b16 %v370, %v368
      %v399 = vpack.c.b16 %v373, %v371
      %v400 = vpack.c.b16 %v374, %v372
      %v401 = vpack.c.b16 %v377, %v375
      %v402 = vpack.c.b16 %v378, %v376
      %v403 = vpack.c.b16 %v381, %v379
      %v404 = vpack.c.b16 %v382, %v380
      %v405 = vpack.c.b16 %v385, %v383
      %v406 = vpack.c.b16 %v386, %v384
      %v407 = vpack.c.b16 %v389, %v387
      %v408 = vpack.c.b16 %v390, %v388
      %v409 = vpack.c.b16 %v393, %v391
      %v410 = vpack.c.b16 %v394, %v392
      %v459 = vunpack.c.l.b16 %v203
      %v460 = vunpack.c.l.b16 %v204
      %v461 = vunpack.c.l.b16 %v205
      %v462 = vunpack.c.l.b16 %v206
      %v463 = vunpack.c.l.b16 %v207
      %v464 = vunpack.c.l.b16 %v208
      %v465 = vunpack.c.l.b16 %v209
      %v466 = vunpack.c.l.b16 %v210
      %v467 = vunpack.c.l.b16 %v211
      %v468 = vunpack.c.l.b16 %v212
      %v469 = vunpack.c.l.b16 %v213
      %v470 = vunpack.c.l.b16 %v214
      %v471 = vunpack.c.l.b16 %v215
      %v472 = vunpack.c.l.b16 %v216
      %v473 = vunpack.c.l.b16 %v217
      %v474 = vunpack.c.l.b16 %v218
      %v475 = vunpack.c.l.b16 %v219
      %v476 = vunpack.c.l.b16 %v220
      %v477 = vunpack.c.l.b16 %v221
      %v478 = vunpack.c.l.b16 %v222
      %v479 = vunpack.c.l.b16 %v223
      %v480 = vunpack.c.l.b16 %v224
      %v481 = vunpack.c.l.b16 %v225
      %v482 = vunpack.c.l.b16 %v226
      %v483 = vunpack.c.l.b16 %v227
      %v484 = vunpack.c.l.b16 %v228
      %v485 = vunpack.c.l.b16 %v229
      %v486 = vunpack.c.l.b16 %v230
      %v487 = vunpack.c.l.b16 %v231
      %v488 = vunpack.c.l.b16 %v232
      %v489 = vunpack.c.l.b16 %v233
      %v490 = vunpack.c.l.b16 %v234
      %v491 = vpack.c.b16 %v460, %v459
      %v492 = vpack.c.b16 %v462, %v461
      %v493 = vpack.c.b16 %v464, %v463
      %v494 = vpack.c.b16 %v466, %v465
      %v495 = vpack.c.b16 %v468, %v467
      %v496 = vpack.c.b16 %v470, %v469
      %v497 = vpack.c.b16 %v472, %v471
      %v498 = vpack.c.b16 %v474, %v473
      %v499 = vpack.c.b16 %v476, %v475
      %v500 = vpack.c.b16 %v478, %v477
      %v501 = vpack.c.b16 %v480, %v479
      %v502 = vpack.c.b16 %v482, %v481
      %v503 = vpack.c.b16 %v484, %v483
      %v504 = vpack.c.b16 %v486, %v485
      %v505 = vpack.c.b16 %v488, %v487
      %v506 = vpack.c.b16 %v490, %v489
      %523 = vmatprep.subr.bf16.mxu0 0
      %524 = vmatpush1.bf16.msra.mxu0 %v491
      %525 = vmatprep.subr.bf16.mxu0 0
      %526 = vmatpush1.bf16.msra.mxu0 %v492
      %527 = vmatprep.subr.bf16.mxu0 0
      %528 = vmatpush1.bf16.msra.mxu0 %v493
      %529 = vmatprep.subr.bf16.mxu0 0
      %530 = vmatpush1.bf16.msra.mxu0 %v494
      %531 = vmatprep.subr.bf16.mxu0 0
      %532 = vmatpush1.bf16.msra.mxu0 %v495
      %533 = vmatprep.subr.bf16.mxu0 0
      %534 = vmatpush1.bf16.msra.mxu0 %v496
      %535 = vmatprep.subr.bf16.mxu0 0
      %536 = vmatpush1.bf16.msra.mxu0 %v497
      %537 = vmatprep.subr.bf16.mxu0 0
      %538 = vmatpush1.bf16.msra.mxu0 %v498
      %539 = vmatprep.subr.bf16.mxu0 0
      %540 = vmatpush1.bf16.msra.mxu0 %v499
      %541 = vmatprep.subr.bf16.mxu0 0
      %542 = vmatpush1.bf16.msra.mxu0 %v500
      %543 = vmatprep.subr.bf16.mxu0 0
      %544 = vmatpush1.bf16.msra.mxu0 %v501
      %545 = vmatprep.subr.bf16.mxu0 0
      %546 = vmatpush1.bf16.msra.mxu0 %v502
      %547 = vmatprep.subr.bf16.mxu0 0
      %548 = vmatpush1.bf16.msra.mxu0 %v503
      %549 = vmatprep.subr.bf16.mxu0 0
      %550 = vmatpush1.bf16.msra.mxu0 %v504
      %551 = vmatprep.subr.bf16.mxu0 0
      %552 = vmatpush1.bf16.msra.mxu0 %v505
      %553 = vmatprep.subr.bf16.mxu0 0
      %554 = vmatpush1.bf16.msra.mxu0 %v506
      %555 = vmatprep.mubr.bf16.mxu0 %v396
      %556 = vmatmul.mubr.bf16.gmra.mrb[0].mxu0 %v395
      %v557 = vpop.f32.mrb[0].mxu0
      %v558 = vadd.f32 %v270, %v557
      %v559 = vpop.f32.mrb[0].mxu0
      %v560 = vpop.f32.mrb[0].mxu0
      %v561 = vadd.f32 %v275, %v560
      %v562 = vpop.f32.mrb[0].mxu0
      %563 = vmatprep.mubr.bf16.mxu0 %v398
      %564 = vmatmul.mubr.bf16.gmra.mrb[0].mxu0 %v397
      %v565 = vpop.f32.mrb[0].mxu0
      %v566 = vadd.f32 %v280, %v565
      %v567 = vpop.f32.mrb[0].mxu0
      %v568 = vpop.f32.mrb[0].mxu0
      %v569 = vadd.f32 %v285, %v568
      %v570 = vpop.f32.mrb[0].mxu0
      %571 = vmatprep.mubr.bf16.mxu0 %v400
      %572 = vmatmul.mubr.bf16.gmra.mrb[0].mxu0 %v399
      %v573 = vpop.f32.mrb[0].mxu0
      %v574 = vadd.f32 %v290, %v573
      %v575 = vpop.f32.mrb[0].mxu0
      %v576 = vpop.f32.mrb[0].mxu0
      %v577 = vadd.f32 %v295, %v576
      %v578 = vpop.f32.mrb[0].mxu0
      %579 = vmatprep.mubr.bf16.mxu0 %v402
      %580 = vmatmul.mubr.bf16.gmra.mrb[0].mxu0 %v401
      %v581 = vpop.f32.mrb[0].mxu0
      %v582 = vadd.f32 %v300, %v581
      %v583 = vpop.f32.mrb[0].mxu0
      %v584 = vpop.f32.mrb[0].mxu0
      %v585 = vadd.f32 %v305, %v584
      %v586 = vpop.f32.mrb[0].mxu0
      %587 = vmatprep.mubr.bf16.mxu0 %v404
      %588 = vmatmul.mubr.bf16.gmra.mrb[0].mxu0 %v403
      %v589 = vpop.f32.mrb[0].mxu0
      %v590 = vadd.f32 %v310, %v589
      %v591 = vpop.f32.mrb[0].mxu0
      %v592 = vpop.f32.mrb[0].mxu0
      %v593 = vadd.f32 %v315, %v592
      %v594 = vpop.f32.mrb[0].mxu0
      %595 = vmatprep.mubr.bf16.mxu0 %v406
      %596 = vmatmul.mubr.bf16.gmra.mrb[0].mxu0 %v405
      %v597 = vpop.f32.mrb[0].mxu0
      %v598 = vadd.f32 %v320, %v597
      %v599 = vpop.f32.mrb[0].mxu0
      %v600 = vpop.f32.mrb[0].mxu0
      %v601 = vadd.f32 %v325, %v600
      %v602 = vpop.f32.mrb[0].mxu0
      %603 = vmatprep.mubr.bf16.mxu0 %v408
      %604 = vmatmul.mubr.bf16.gmra.mrb[0].mxu0 %v407
      %v605 = vpop.f32.mrb[0].mxu0
      %v606 = vadd.f32 %v330, %v605
      %v607 = vpop.f32.mrb[0].mxu0
      %v608 = vpop.f32.mrb[0].mxu0
      %v609 = vadd.f32 %v335, %v608
      %v610 = vpop.f32.mrb[0].mxu0
      %611 = vmatprep.mubr.bf16.mxu0 %v410
      %612 = vmatmul.mubr.bf16.gmra.mrb[0].mxu0 %v409
      %v613 = vpop.f32.mrb[0].mxu0
      %v614 = vadd.f32 %v340, %v613
      %v615 = vpop.f32.mrb[0].mxu0
      %v616 = vpop.f32.mrb[0].mxu0
      %v617 = vadd.f32 %v345, %v616
      %v618 = vpop.f32.mrb[0].mxu0
      %619 = vdwg.mxu0
      %v620 = vpack.c.bf16 %v561, %v558
      %v621 = vpack.c.bf16 %v569, %v566
      %v622 = vpack.c.bf16 %v577, %v574
      %v623 = vpack.c.bf16 %v585, %v582
      %v624 = vpack.c.bf16 %v593, %v590
      %v625 = vpack.c.bf16 %v601, %v598
      %v626 = vpack.c.bf16 %v609, %v606
      %v627 = vpack.c.bf16 %v617, %v614
      %v636 = vunpack.c.l.b16 %v620
      %v637 = vunpack.c.h.b16 %v620
      %v638 = vunpack.c.l.b16 %v621
      %v639 = vunpack.c.h.b16 %v621
      %v640 = vunpack.c.l.b16 %v622
      %v641 = vunpack.c.h.b16 %v622
      %v642 = vunpack.c.l.b16 %v623
      %v643 = vunpack.c.h.b16 %v623
      %v644 = vunpack.c.l.b16 %v624
      %v645 = vunpack.c.h.b16 %v624
      %v646 = vunpack.c.l.b16 %v625
      %v647 = vunpack.c.h.b16 %v625
      %v648 = vunpack.c.l.b16 %v626
      %v649 = vunpack.c.h.b16 %v626
      %v650 = vunpack.c.l.b16 %v627
      %v651 = vunpack.c.h.b16 %v627
      %v652 = vpack.c.b16 %v636, %v636
      %v653 = vpack.c.b16 %v637, %v637
      %v654 = vpack.c.b16 %v638, %v638
      %v655 = vpack.c.b16 %v639, %v639
      %v656 = vpack.c.b16 %v640, %v640
      %v657 = vpack.c.b16 %v641, %v641
      %v658 = vpack.c.b16 %v642, %v642
      %v659 = vpack.c.b16 %v643, %v643
      %v660 = vpack.c.b16 %v644, %v644
      %v661 = vpack.c.b16 %v645, %v645
      %v662 = vpack.c.b16 %v646, %v646
      %v663 = vpack.c.b16 %v647, %v647
      %v664 = vpack.c.b16 %v648, %v648
      %v665 = vpack.c.b16 %v649, %v649
      %v666 = vpack.c.b16 %v650, %v650
      %v667 = vpack.c.b16 %v651, %v651
      %vm684 = vcmask 519168
      %685 = vst.msk [vmem:[%s201] sm:$0xf] %vm684, %v652
      %686 = vst.msk [vmem:[%s201 + $0x4] sm:$0xf] %vm684, %v653
      %687 = vst.msk [vmem:[%s201 + $0x8] sm:$0xf] %vm684, %v654
      %688 = vst.msk [vmem:[%s201 + $0xc] sm:$0xf] %vm684, %v655
      %689 = vst.msk [vmem:[%s201 + $0x10] sm:$0xf] %vm684, %v656
      %690 = vst.msk [vmem:[%s201 + $0x14] sm:$0xf] %vm684, %v657
      %691 = vst.msk [vmem:[%s201 + $0x18] sm:$0xf] %vm684, %v658
      %692 = vst.msk [vmem:[%s201 + $0x1c] sm:$0xf] %vm684, %v659
      %693 = vst.msk [vmem:[%s201 + $0x20] sm:$0xf] %vm684, %v660
      %694 = vst.msk [vmem:[%s201 + $0x24] sm:$0xf] %vm684, %v661
      %695 = vst.msk [vmem:[%s201 + $0x28] sm:$0xf] %vm684, %v662
      %696 = vst.msk [vmem:[%s201 + $0x2c] sm:$0xf] %vm684, %v663
      %697 = vst.msk [vmem:[%s201 + $0x30] sm:$0xf] %vm684, %v664
      %698 = vst.msk [vmem:[%s201 + $0x34] sm:$0xf] %vm684, %v665
      %699 = vst.msk [vmem:[%s201 + $0x38] sm:$0xf] %vm684, %v666
      %700 = vst.msk [vmem:[%s201 + $0x3c] sm:$0xf] %vm684, %v667
      %p701 = scmp.lt.s32.totalorder %s18, 1
      %s702 = scalar_select %p701, %s18, 1
      %p703 = scmp.lt.s32.totalorder %s19, 0
      %s704 = scalar_select %p703, %s19, 0
      %s705 = smul.addr %s702, 16
      %s706 = sadd.s32 %s704, %s705
      %s707 = smul.addr %s706, 4
      %s708 = scalar_lea.vmem %s3, %s707
      // Predicated region
      $region33: #{amer_loc_head.4} parent=31 // pred_check
        %p709 = pneg %p116
      $region34: #{amer_loc_head.4} parent=31 // pred_check_branch
        %711 = sbr.rel (%p709) target = $region36
      $region35: #{amer_loc_head.4} parent=31 // pred_region
        _
      $region36: #{amer_loc_head.4} parent=31 // pred_fallthru
        _
    $region32: #{amer_loc_head.4} parent=5 // pred_fallthru
      _
    %p712 = scmp.le.s32.totalorder 2, %s9
    // Predicated region
    $region37: #{amer_loc_head.4} parent=5 // pred_check
      %p713 = pneg %p712
    $region38: #{amer_loc_head.4} parent=5 // pred_check_branch
      %715 = sbr.rel (%p713) target = $region40
    $region39: #{amer_loc_head.4} parent=5 // pred_region
      %s716 = ssub.s32 %s9, 2
      // Predicated region
      $region41: #{amer_loc_head.4} parent=39 // pred_check
        %p717 = pneg %p122
      $region42: #{amer_loc_head.4} parent=39 // pred_check_branch
        %719 = sbr.rel (%p717) target = $region44
      $region43: #{amer_loc_head.4} parent=39 // pred_region
        %p720 = scmp.lt.s32.totalorder %s20, 1
        %s721 = scalar_select %p720, %s20, 1
        %p722 = scmp.lt.s32.totalorder %s21, 0
        %s723 = scalar_select %p722, %s21, 0
        %s724 = smul.addr %s721, 16
        %s725 = sadd.s32 %s723, %s724
        %s726 = smul.addr %s725, 4
        %s727 = scalar_lea.vmem %s3, %s726
      $region44: #{amer_loc_head.4} parent=39 // pred_fallthru
        _
    $region40: #{amer_loc_head.4} parent=5 // pred_fallthru
      _
  $region6: #{amer_loc_head.4} parent=0 // loop_footer
    %s13 = sadd.s32 1, %s9
  $region7: #{amer_loc_head.4} parent=0 // loop_footer_branch
    %8 = sbr.rel target = $region3
  $region8: #{amer_loc_head.4} parent=0 // loop_exit
    _

// kernel: amer_loc_head.3
$region0: #{amer_loc_head.3}
  #allocation0 [shape = 'u32[]', space=smem, size = 0x4, offset = 0x4, fixed_abs, tag = 'smem constant byte address 0x4 - core index']
  #allocation1 [shape = 'u32[144,128]{1,0:T(1,128)}', space=vmem, size = 0x12000, scoped, tag = 'internal scratch']
  %s0 = inlined_call_operand.vmem [shape: f32[2,512,16], index: 0, kind: input, shape index: {}]
  %s1 = inlined_call_operand.hbm [shape: bf16[256,512], index: 1, kind: input, shape index: {}]
  %s2 = inlined_call_operand.vmem [shape: f32[256,1], index: 2, kind: input, shape index: {}]
  %s3 = inlined_call_operand.vmem [shape: bf16[2,256,16], index: 3, kind: output, shape index: {}]
  %s4 = sld [smem:[#allocation0]]
  $region49: #{amer_loc_head.3} parent=0
    _
  %s6 = ssub.s32 1, %s4
  %s7 = scalar_select 0, %s6, %s4
  $region1: #{amer_loc_head.3} parent=0
    #allocation2 [shape = 'u8[262144]{0}', space=vmem, size = 0x40000, scoped, tag = 'input window, operand 1, single buffered']
    #allocation3 [shape = 's32[2]{0}', space=sflag, size = 0x8, scoped, tag = 'scoped memory for amer_loc_head.3']
    %8 = vsyncpa [#allocation3], 0
    loop: start=0, step=1, limit=4
    $region2: #{amer_loc_head.3} parent=1 // loop_pre_header
      _
    $region3: #{amer_loc_head.3} parent=1 // loop_header
      %s10 = sphi 0, %s14
      %p11 = scmp.ge.s32.totalorder %s10, 4
      %s17 = sphi 0, %s29
      %s18 = sphi 0, %s25
      %s19 = sphi 0, %s17
      %s20 = sphi 0, %s18
      %s21 = sphi 0, %s19
      %s22 = sphi 0, %s20
      %s34 = sphi 0, %s36
      %s37 = sphi 0, %s34
      %s38 = sphi 0, %s37
      %s54 = sphi 0, %s38
      %s58 = sphi 0, %s58
      %s60 = sphi 0, %s58
      %s61 = sphi 0, %s60
      %s75 = sphi 0, %s61
      %s79 = sphi 0, %s79
      %s81 = sphi 0, %s79
      %s82 = sphi 0, %s81
      %s96 = sphi 0, %s82
      %s104 = sphi 0, %s106
      %s107 = sphi 0, %s104
      %s108 = sphi 0, %s107
      %s124 = sphi 0, %s108
    $region4: #{amer_loc_head.3} parent=1 // loop_header_branch
      %13 = sbr.rel (%p11) target = $region8
    $region5: #{amer_loc_head.3} parent=1 // loop_body
      %s15 = ssub.s32 %s10, 1
      %s16 = ssub.s32 %s10, 2
      %s23 = sadd.s32 1, %s18
      %p24 = scmp.ge.s32.totalorder %s23, 1
      %s25 = scalar_select %p24, 0, %s23
      %s26 = sadd.s32 1, %s17
      %s27 = scalar_select %p24, %s26, %s17
      %p28 = scmp.ge.s32.totalorder %s27, 2
      %s29 = scalar_select %p28, 0, %s27
      %s30 = ssub.s32 %s17, %s29
      %s31 = ssub.s32 %s18, %s25
      %s32 = sor.u32 %s30, %s31
      %p33 = scmp.eq.s32.totalorder %s32, 0
      %s35 = sadd.s32 %s34, 1
      %s36 = scalar_select %p33, %s34, %s35
      %p39 = pneg %p33
      %p40 = scmp.eq.s32.totalorder %s10, 1
      %p41 = por %p39, %p40
      %p42 = scmp.ne.s32.totalorder %s34, %s37
      %p43 = scmp.eq.s32.totalorder %s10, 0
      %p44 = por %p42, %p43
      %p45 = scmp.ne.s32.totalorder %s34, %s37
      %p46 = scmp.eq.s32.totalorder %s15, 1
      %p47 = por %p45, %p46
      %p48 = scmp.ne.s32.totalorder %s37, %s38
      %p49 = scmp.eq.s32.totalorder %s15, 0
      %p50 = por %p48, %p49
      %p51 = scmp.ne.s32.totalorder %s37, %s38
      %p52 = scmp.eq.s32.totalorder %s16, 1
      %p53 = por %p51, %p52
      %p55 = scmp.ne.s32.totalorder %s38, %s54
      %p56 = scmp.eq.s32.totalorder %s16, 0
      %p57 = por %p55, %p56
      %s59 = sadd.s32 %s58, 1
      %p62 = scmp.eq.s32.totalorder %s10, 1
      %p63 = scmp.ne.s32.totalorder %s58, %s60
      %p64 = scmp.eq.s32.totalorder %s10, 0
      %p65 = por %p63, %p64
      %p66 = scmp.ne.s32.totalorder %s58, %s60
      %p67 = scmp.eq.s32.totalorder %s15, 1
      %p68 = por %p66, %p67
      %p69 = scmp.ne.s32.totalorder %s60, %s61
      %p70 = scmp.eq.s32.totalorder %s15, 0
      %p71 = por %p69, %p70
      %p72 = scmp.ne.s32.totalorder %s60, %s61
      %p73 = scmp.eq.s32.totalorder %s16, 1
      %p74 = por %p72, %p73
      %p76 = scmp.ne.s32.totalorder %s61, %s75
      %p77 = scmp.eq.s32.totalorder %s16, 0
      %p78 = por %p76, %p77
      %s80 = sadd.s32 %s79, 1
      %p83 = scmp.eq.s32.totalorder %s10, 1
      %p84 = scmp.ne.s32.totalorder %s79, %s81
      %p85 = scmp.eq.s32.totalorder %s10, 0
      %p86 = por %p84, %p85
      %p87 = scmp.ne.s32.totalorder %s79, %s81
      %p88 = scmp.eq.s32.totalorder %s15, 1
      %p89 = por %p87, %p88
      %p90 = scmp.ne.s32.totalorder %s81, %s82
      %p91 = scmp.eq.s32.totalorder %s15, 0
      %p92 = por %p90, %p91
      %p93 = scmp.ne.s32.totalorder %s81, %s82
      %p94 = scmp.eq.s32.totalorder %s16, 1
      %p95 = por %p93, %p94
      %p97 = scmp.ne.s32.totalorder %s82, %s96
      %p98 = scmp.eq.s32.totalorder %s16, 0
      %p99 = por %p97, %p98
      %s100 = ssub.s32 %s17, %s29
      %s101 = ssub.s32 %s18, %s25
      %s102 = sor.u32 %s100, %s101
      %p103 = scmp.eq.s32.totalorder %s102, 0
      %s105 = sadd.s32 %s104, 1
      %s106 = scalar_select %p103, %s104, %s105
      %p109 = pneg %p103
      %p110 = scmp.eq.s32.totalorder %s10, 1
      %p111 = por %p109, %p110
      %p112 = scmp.ne.s32.totalorder %s104, %s107
      %p113 = scmp.eq.s32.totalorder %s10, 0
      %p114 = por %p112, %p113
      %p115 = scmp.ne.s32.totalorder %s104, %s107
      %p116 = scmp.eq.s32.totalorder %s15, 1
      %p117 = por %p115, %p116
      %p118 = scmp.ne.s32.totalorder %s107, %s108
      %p119 = scmp.eq.s32.totalorder %s15, 0
      %p120 = por %p118, %p119
      %p121 = scmp.ne.s32.totalorder %s107, %s108
      %p122 = scmp.eq.s32.totalorder %s16, 1
      %p123 = por %p121, %p122
      %p125 = scmp.ne.s32.totalorder %s108, %s124
      %p126 = scmp.eq.s32.totalorder %s16, 0
      %p127 = por %p125, %p126
      %p128 = scmp.le.s32.totalorder 1, %s10
      %p129 = scmp.lt.s32.totalorder %s10, 3
      %p130 = pnand %p128, %p129
      %p131 = pneg %p130
      // Predicated region
      $region9: #{amer_loc_head.3} parent=5 // pred_check
        _
      $region10: #{amer_loc_head.3} parent=5 // pred_check_branch
        %133 = sbr.rel (%p130) target = $region12
      $region11: #{amer_loc_head.3} parent=5 // pred_region
        %s134 = ssub.s32 %s10, 1
        // Predicated region
        $region13: #{amer_loc_head.3} parent=11 // pred_check
          %p135 = pneg %p71
        $region14: #{amer_loc_head.3} parent=11 // pred_check_branch
          %137 = sbr.rel (%p135) target = $region16
        $region15: #{amer_loc_head.3} parent=11 // pred_region
          %s139 = ssub.s32 8192, 8192
          %140 = vsyncadd [#allocation3], %s139
          %s141 = sshll.u32 [#allocation2], 4
          %s142 = int_to_ptr.vmem [resolvable:$true] %s141
          %147 = dma.hbm_to_vmem [thread:$0]  %s1, 8192, %s142, [#allocation3], 256, 256, 16
        $region16: #{amer_loc_head.3} parent=11 // pred_fallthru
          _
        // Predicated region
        $region17: #{amer_loc_head.3} parent=11 // pred_check
          %p148 = pneg %p92
        $region18: #{amer_loc_head.3} parent=11 // pred_check_branch
          %150 = sbr.rel (%p148) target = $region20
        $region19: #{amer_loc_head.3} parent=11 // pred_region
          _
        $region20: #{amer_loc_head.3} parent=11 // pred_fallthru
          _
      $region12: #{amer_loc_head.3} parent=5 // pred_fallthru
        _
      %p151 = scmp.lt.s32.totalorder %s10, 2
      // Predicated region
      $region21: #{amer_loc_head.3} parent=5 // pred_check
        %p152 = pneg %p151
      $region22: #{amer_loc_head.3} parent=5 // pred_check_branch
        %154 = sbr.rel (%p152) target = $region24
      $region23: #{amer_loc_head.3} parent=5 // pred_region
        // Predicated region
        $region25: #{amer_loc_head.3} parent=23 // pred_check
          %p155 = pneg %p44
        $region26: #{amer_loc_head.3} parent=23 // pred_check_branch
          %157 = sbr.rel (%p155) target = $region28
        $region27: #{amer_loc_head.3} parent=23 // pred_region
          %p158 = scmp.lt.s32.totalorder %s17, 1
          %s159 = scalar_select %p158, %s17, 1
          %p160 = scmp.lt.s32.totalorder %s18, 0
          %s161 = scalar_select %p160, %s18, 0
          %s162 = smul.addr %s159, 64
          %s163 = sadd.s32 %s161, %s162
          %s164 = smul.addr %s163, 8
          %s165 = scalar_lea.vmem %s0, %s164
        $region28: #{amer_loc_head.3} parent=23 // pred_fallthru
          _
      $region24: #{amer_loc_head.3} parent=5 // pred_fallthru
        _
      %p166 = scmp.le.s32.totalorder 1, %s10
      %p167 = scmp.lt.s32.totalorder %s10, 3
      %p168 = pnand %p166, %p167
      %p169 = pneg %p168
      // Predicated region
      $region29: #{amer_loc_head.3} parent=5 // pred_check
        _
      $region30: #{amer_loc_head.3} parent=5 // pred_check_branch
        %171 = sbr.rel (%p168) target = $region32
      $region31: #{amer_loc_head.3} parent=5 // pred_region
        %s172 = ssub.s32 %s10, 1
        // Predicated region
        $region33: #{amer_loc_head.3} parent=31 // pred_check
          %p173 = pneg %p71
        $region34: #{amer_loc_head.3} parent=31 // pred_check_branch
          %175 = sbr.rel (%p173) target = $region36
        $region35: #{amer_loc_head.3} parent=31 // pred_region
          %176 = dma.done [#allocation3], 8192
        $region36: #{amer_loc_head.3} parent=31 // pred_fallthru
          _
        %p177 = scmp.lt.s32.totalorder %s19, 1
        %s178 = scalar_select %p177, %s19, 1
        %p179 = scmp.lt.s32.totalorder %s20, 0
        %s180 = scalar_select %p179, %s20, 0
        %s181 = smul.addr %s178, 64
        %s182 = sadd.s32 %s180, %s181
        %s183 = smul.addr %s182, 8
        %s184 = scalar_lea.vmem %s0, %s183
        %p185 = pneg %p50
        %p186 = pneg %p47
        %p187 = pneg %p71
        %p188 = pneg %p68
        %p189 = pneg %p92
        %p190 = pneg %p89
        %p191 = pneg %p120
        %p192 = pneg %p117
        %p193 = scmp.lt.s32.totalorder %s19, 1
        %s194 = scalar_select %p193, %s19, 1
        %p195 = scmp.lt.s32.totalorder %s20, 0
        %s196 = scalar_select %p195, %s20, 0
        %s197 = smul.addr %s194, 32
        %s198 = sadd.s32 %s196, %s197
        %s199 = smul.addr %s198, 4
        %s200 = scalar_lea.vmem %s3, %s199
        %p201 = scmp.lt.s32.totalorder %s19, 1
        %s202 = scalar_select %p201, %s19, 1
        %p203 = scmp.lt.s32.totalorder %s20, 0
        %s204 = scalar_select %p203, %s20, 0
        %s205 = smul.addr %s202, 64
        %s206 = sadd.s32 %s204, %s205
        %s207 = smul.addr %s206, 8
        %s208 = scalar_lea.vmem %s0, %s207
        %p209 = scmp.lt.s32.totalorder %s19, 1
        %s210 = scalar_select %p209, %s19, 1
        %p211 = scmp.lt.s32.totalorder %s20, 0
        %s212 = scalar_select %p211, %s20, 0
        %s213 = smul.addr %s210, 32
        %s214 = sadd.s32 %s212, %s213
        %s215 = smul.addr %s214, 4
        %s216 = scalar_lea.vmem %s3, %s215
        %v218 = vld [vmem:[%s208] sm:$0xff]
        %v219 = vld [vmem:[%s208 + $0x8] sm:$0xff]
        %v220 = vld [vmem:[%s208 + $0x10] sm:$0xff]
        %v221 = vld [vmem:[%s208 + $0x18] sm:$0xff]
        %v222 = vld [vmem:[%s208 + $0x20] sm:$0xff]
        %v223 = vld [vmem:[%s208 + $0x28] sm:$0xff]
        %v224 = vld [vmem:[%s208 + $0x30] sm:$0xff]
        %v225 = vld [vmem:[%s208 + $0x38] sm:$0xff]
        %v226 = vld [vmem:[%s208 + $0x40] sm:$0xff]
        %v227 = vld [vmem:[%s208 + $0x48] sm:$0xff]
        %v228 = vld [vmem:[%s208 + $0x50] sm:$0xff]
        %v229 = vld [vmem:[%s208 + $0x58] sm:$0xff]
        %v230 = vld [vmem:[%s208 + $0x60] sm:$0xff]
        %v231 = vld [vmem:[%s208 + $0x68] sm:$0xff]
        %v232 = vld [vmem:[%s208 + $0x70] sm:$0xff]
        %v233 = vld [vmem:[%s208 + $0x78] sm:$0xff]
        %v234 = vld [vmem:[%s208 + $0x80] sm:$0xff]
        %v235 = vld [vmem:[%s208 + $0x88] sm:$0xff]
        %v236 = vld [vmem:[%s208 + $0x90] sm:$0xff]
        %v237 = vld [vmem:[%s208 + $0x98] sm:$0xff]
        %v238 = vld [vmem:[%s208 + $0xa0] sm:$0xff]
        %v239 = vld [vmem:[%s208 + $0xa8] sm:$0xff]
        %v240 = vld [vmem:[%s208 + $0xb0] sm:$0xff]
        %v241 = vld [vmem:[%s208 + $0xb8] sm:$0xff]
        %v242 = vld [vmem:[%s208 + $0xc0] sm:$0xff]
        %v243 = vld [vmem:[%s208 + $0xc8] sm:$0xff]
        %v244 = vld [vmem:[%s208 + $0xd0] sm:$0xff]
        %v245 = vld [vmem:[%s208 + $0xd8] sm:$0xff]
        %v246 = vld [vmem:[%s208 + $0xe0] sm:$0xff]
        %v247 = vld [vmem:[%s208 + $0xe8] sm:$0xff]
        %v248 = vld [vmem:[%s208 + $0xf0] sm:$0xff]
        %v249 = vld [vmem:[%s208 + $0xf8] sm:$0xff]
        %v250 = vld [vmem:[%s208 + $0x100] sm:$0xff]
        %v251 = vld [vmem:[%s208 + $0x108] sm:$0xff]
        %v252 = vld [vmem:[%s208 + $0x110] sm:$0xff]
        %v253 = vld [vmem:[%s208 + $0x118] sm:$0xff]
        %v254 = vld [vmem:[%s208 + $0x120] sm:$0xff]
        %v255 = vld [vmem:[%s208 + $0x128] sm:$0xff]
        %v256 = vld [vmem:[%s208 + $0x130] sm:$0xff]
        %v257 = vld [vmem:[%s208 + $0x138] sm:$0xff]
        %v258 = vld [vmem:[%s208 + $0x140] sm:$0xff]
        %v259 = vld [vmem:[%s208 + $0x148] sm:$0xff]
        %v260 = vld [vmem:[%s208 + $0x150] sm:$0xff]
        %v261 = vld [vmem:[%s208 + $0x158] sm:$0xff]
        %v262 = vld [vmem:[%s208 + $0x160] sm:$0xff]
        %v263 = vld [vmem:[%s208 + $0x168] sm:$0xff]
        %v264 = vld [vmem:[%s208 + $0x170] sm:$0xff]
        %v265 = vld [vmem:[%s208 + $0x178] sm:$0xff]
        %v266 = vld [vmem:[%s208 + $0x180] sm:$0xff]
        %v267 = vld [vmem:[%s208 + $0x188] sm:$0xff]
        %v268 = vld [vmem:[%s208 + $0x190] sm:$0xff]
        %v269 = vld [vmem:[%s208 + $0x198] sm:$0xff]
        %v270 = vld [vmem:[%s208 + $0x1a0] sm:$0xff]
        %v271 = vld [vmem:[%s208 + $0x1a8] sm:$0xff]
        %v272 = vld [vmem:[%s208 + $0x1b0] sm:$0xff]
        %v273 = vld [vmem:[%s208 + $0x1b8] sm:$0xff]
        %v274 = vld [vmem:[%s208 + $0x1c0] sm:$0xff]
        %v275 = vld [vmem:[%s208 + $0x1c8] sm:$0xff]
        %v276 = vld [vmem:[%s208 + $0x1d0] sm:$0xff]
        %v277 = vld [vmem:[%s208 + $0x1d8] sm:$0xff]
        %v278 = vld [vmem:[%s208 + $0x1e0] sm:$0xff]
        %v279 = vld [vmem:[%s208 + $0x1e8] sm:$0xff]
        %v280 = vld [vmem:[%s208 + $0x1f0] sm:$0xff]
        %v281 = vld [vmem:[%s208 + $0x1f8] sm:$0xff]
        %v282 = vpack.c.bf16 %v219, %v218
        %v283 = vpack.c.bf16 %v221, %v220
        %v284 = vpack.c.bf16 %v223, %v222
        %v285 = vpack.c.bf16 %v225, %v224
        %v286 = vpack.c.bf16 %v227, %v226
        %v287 = vpack.c.bf16 %v229, %v228
        %v288 = vpack.c.bf16 %v231, %v230
        %v289 = vpack.c.bf16 %v233, %v232
        %v290 = vpack.c.bf16 %v235, %v234
        %v291 = vpack.c.bf16 %v237, %v236
        %v292 = vpack.c.bf16 %v239, %v238
        %v293 = vpack.c.bf16 %v241, %v240
        %v294 = vpack.c.bf16 %v243, %v242
        %v295 = vpack.c.bf16 %v245, %v244
        %v296 = vpack.c.bf16 %v247, %v246
        %v297 = vpack.c.bf16 %v249, %v248
        %v298 = vpack.c.bf16 %v251, %v250
        %v299 = vpack.c.bf16 %v253, %v252
        %v300 = vpack.c.bf16 %v255, %v254
        %v301 = vpack.c.bf16 %v257, %v256
        %v302 = vpack.c.bf16 %v259, %v258
        %v303 = vpack.c.bf16 %v261, %v260
        %v304 = vpack.c.bf16 %v263, %v262
        %v305 = vpack.c.bf16 %v265, %v264
        %v306 = vpack.c.bf16 %v267, %v266
        %v307 = vpack.c.bf16 %v269, %v268
        %v308 = vpack.c.bf16 %v271, %v270
        %v309 = vpack.c.bf16 %v273, %v272
        %v310 = vpack.c.bf16 %v275, %v274
        %v311 = vpack.c.bf16 %v277, %v276
        %v312 = vpack.c.bf16 %v279, %v278
        %v313 = vpack.c.bf16 %v281, %v280
        %v314 = vld [vmem:[#allocation2] sm:$0xff]
        %v315 = vld [vmem:[#allocation2 + $0x8] sm:$0xff]
        %v316 = vld [vmem:[#allocation2 + $0x10] sm:$0xff]
        %v317 = vld [vmem:[#allocation2 + $0x18] sm:$0xff]
        %v318 = vld [vmem:[#allocation2 + $0x20] sm:$0xff]
        %v319 = vld [vmem:[#allocation2 + $0x28] sm:$0xff]
        %v320 = vld [vmem:[#allocation2 + $0x30] sm:$0xff]
        %v321 = vld [vmem:[#allocation2 + $0x38] sm:$0xff]
        %v322 = vld [vmem:[#allocation2 + $0x40] sm:$0xff]
        %v323 = vld [vmem:[#allocation2 + $0x48] sm:$0xff]
        %v324 = vld [vmem:[#allocation2 + $0x50] sm:$0xff]
        %v325 = vld [vmem:[#allocation2 + $0x58] sm:$0xff]
        %v326 = vld [vmem:[#allocation2 + $0x60] sm:$0xff]
        %v327 = vld [vmem:[#allocation2 + $0x68] sm:$0xff]
        %v328 = vld [vmem:[#allocation2 + $0x70] sm:$0xff]
        %v329 = vld [vmem:[#allocation2 + $0x78] sm:$0xff]
        %v330 = vld [vmem:[#allocation2 + $0x80] sm:$0xff]
        %v331 = vld [vmem:[#allocation2 + $0x88] sm:$0xff]
        %v332 = vld [vmem:[#allocation2 + $0x90] sm:$0xff]
        %v333 = vld [vmem:[#allocation2 + $0x98] sm:$0xff]
        %v334 = vld [vmem:[#allocation2 + $0xa0] sm:$0xff]
        %v335 = vld [vmem:[#allocation2 + $0xa8] sm:$0xff]
        %v336 = vld [vmem:[#allocation2 + $0xb0] sm:$0xff]
        %v337 = vld [vmem:[#allocation2 + $0xb8] sm:$0xff]
        %v338 = vld [vmem:[#allocation2 + $0xc0] sm:$0xff]
        %v339 = vld [vmem:[#allocation2 + $0xc8] sm:$0xff]
        %v340 = vld [vmem:[#allocation2 + $0xd0] sm:$0xff]
        %v341 = vld [vmem:[#allocation2 + $0xd8] sm:$0xff]
        %v342 = vld [vmem:[#allocation2 + $0xe0] sm:$0xff]
        %v343 = vld [vmem:[#allocation2 + $0xe8] sm:$0xff]
        %v344 = vld [vmem:[#allocation2 + $0xf0] sm:$0xff]
        %v345 = vld [vmem:[#allocation2 + $0xf8] sm:$0xff]
        %v346 = vld [vmem:[#allocation2 + $0x100] sm:$0xff]
        %v347 = vld [vmem:[#allocation2 + $0x108] sm:$0xff]
        %v348 = vld [vmem:[#allocation2 + $0x110] sm:$0xff]
        %v349 = vld [vmem:[#allocation2 + $0x118] sm:$0xff]
        %v350 = vld [vmem:[#allocation2 + $0x120] sm:$0xff]
        %v351 = vld [vmem:[#allocation2 + $0x128] sm:$0xff]
        %v352 = vld [vmem:[#allocation2 + $0x130] sm:$0xff]
        %v353 = vld [vmem:[#allocation2 + $0x138] sm:$0xff]
        %v354 = vld [vmem:[#allocation2 + $0x140] sm:$0xff]
        %v355 = vld [vmem:[#allocation2 + $0x148] sm:$0xff]
        %v356 = vld [vmem:[#allocation2 + $0x150] sm:$0xff]
        %v357 = vld [vmem:[#allocation2 + $0x158] sm:$0xff]
        %v358 = vld [vmem:[#allocation2 + $0x160] sm:$0xff]
        %v359 = vld [vmem:[#allocation2 + $0x168] sm:$0xff]
        %v360 = vld [vmem:[#allocation2 + $0x170] sm:$0xff]
        %v361 = vld [vmem:[#allocation2 + $0x178] sm:$0xff]
        %v362 = vld [vmem:[#allocation2 + $0x180] sm:$0xff]
        %v363 = vld [vmem:[#allocation2 + $0x188] sm:$0xff]
        %v364 = vld [vmem:[#allocation2 + $0x190] sm:$0xff]
        %v365 = vld [vmem:[#allocation2 + $0x198] sm:$0xff]
        %v366 = vld [vmem:[#allocation2 + $0x1a0] sm:$0xff]
        %v367 = vld [vmem:[#allocation2 + $0x1a8] sm:$0xff]
        %v368 = vld [vmem:[#allocation2 + $0x1b0] sm:$0xff]
        %v369 = vld [vmem:[#allocation2 + $0x1b8] sm:$0xff]
        %v370 = vld [vmem:[#allocation2 + $0x1c0] sm:$0xff]
        %v371 = vld [vmem:[#allocation2 + $0x1c8] sm:$0xff]
        %v372 = vld [vmem:[#allocation2 + $0x1d0] sm:$0xff]
        %v373 = vld [vmem:[#allocation2 + $0x1d8] sm:$0xff]
        %v374 = vld [vmem:[#allocation2 + $0x1e0] sm:$0xff]
        %v375 = vld [vmem:[#allocation2 + $0x1e8] sm:$0xff]
        %v376 = vld [vmem:[#allocation2 + $0x1f0] sm:$0xff]
        %v377 = vld [vmem:[#allocation2 + $0x1f8] sm:$0xff]
        %v378 = vld [vmem:[%s2] sm:$0xff]
        %v379 = vld [vmem:[%s2 + $0x8] sm:$0xff]
        %v380 = vld [vmem:[%s2 + $0x10] sm:$0xff]
        %v381 = vld [vmem:[%s2 + $0x18] sm:$0xff]
        %v382 = vld [vmem:[%s2 + $0x20] sm:$0xff]
        %v383 = vld [vmem:[%s2 + $0x28] sm:$0xff]
        %v384 = vld [vmem:[%s2 + $0x30] sm:$0xff]
        %v385 = vld [vmem:[%s2 + $0x38] sm:$0xff]
        %v386 = vld [vmem:[%s2 + $0x40] sm:$0xff]
        %v387 = vld [vmem:[%s2 + $0x48] sm:$0xff]
        %v388 = vld [vmem:[%s2 + $0x50] sm:$0xff]
        %v389 = vld [vmem:[%s2 + $0x58] sm:$0xff]
        %v390 = vld [vmem:[%s2 + $0x60] sm:$0xff]
        %v391 = vld [vmem:[%s2 + $0x68] sm:$0xff]
        %v392 = vld [vmem:[%s2 + $0x70] sm:$0xff]
        %v393 = vld [vmem:[%s2 + $0x78] sm:$0xff]
        %v394 = vld [vmem:[%s2 + $0x80] sm:$0xff]
        %v395 = vld [vmem:[%s2 + $0x88] sm:$0xff]
        %v396 = vld [vmem:[%s2 + $0x90] sm:$0xff]
        %v397 = vld [vmem:[%s2 + $0x98] sm:$0xff]
        %v398 = vld [vmem:[%s2 + $0xa0] sm:$0xff]
        %v399 = vld [vmem:[%s2 + $0xa8] sm:$0xff]
        %v400 = vld [vmem:[%s2 + $0xb0] sm:$0xff]
        %v401 = vld [vmem:[%s2 + $0xb8] sm:$0xff]
        %v402 = vld [vmem:[%s2 + $0xc0] sm:$0xff]
        %v403 = vld [vmem:[%s2 + $0xc8] sm:$0xff]
        %v404 = vld [vmem:[%s2 + $0xd0] sm:$0xff]
        %v405 = vld [vmem:[%s2 + $0xd8] sm:$0xff]
        %v406 = vld [vmem:[%s2 + $0xe0] sm:$0xff]
        %v407 = vld [vmem:[%s2 + $0xe8] sm:$0xff]
        %v408 = vld [vmem:[%s2 + $0xf0] sm:$0xff]
        %v409 = vld [vmem:[%s2 + $0xf8] sm:$0xff]
        %411 = vset.pattern.permute.xlu0 0
        %412 = vperm.xlu0 %411, %v378
        %v413 = vpop.permute.xlu0 %412
        %416 = vset.pattern.permute.xlu0 0
        %417 = vperm.xlu0 %416, %v379
        %v418 = vpop.permute.xlu0 %417
        %421 = vset.pattern.permute.xlu0 0
        %422 = vperm.xlu0 %421, %v380
        %v423 = vpop.permute.xlu0 %422
        %426 = vset.pattern.permute.xlu0 0
        %427 = vperm.xlu0 %426, %v381
        %v428 = vpop.permute.xlu0 %427
        %431 = vset.pattern.permute.xlu0 0
        %432 = vperm.xlu0 %431, %v382
        %v433 = vpop.permute.xlu0 %432
        %436 = vset.pattern.permute.xlu0 0
        %437 = vperm.xlu0 %436, %v383
        %v438 = vpop.permute.xlu0 %437
        %441 = vset.pattern.permute.xlu0 0
        %442 = vperm.xlu0 %441, %v384
        %v443 = vpop.permute.xlu0 %442
        %446 = vset.pattern.permute.xlu0 0
        %447 = vperm.xlu0 %446, %v385
        %v448 = vpop.permute.xlu0 %447
        %451 = vset.pattern.permute.xlu0 0
        %452 = vperm.xlu0 %451, %v386
        %v453 = vpop.permute.xlu0 %452
        %456 = vset.pattern.permute.xlu0 0
        %457 = vperm.xlu0 %456, %v387
        %v458 = vpop.permute.xlu0 %457
        %461 = vset.pattern.permute.xlu0 0
        %462 = vperm.xlu0 %461, %v388
        %v463 = vpop.permute.xlu0 %462
        %466 = vset.pattern.permute.xlu0 0
        %467 = vperm.xlu0 %466, %v389
        %v468 = vpop.permute.xlu0 %467
        %471 = vset.pattern.permute.xlu0 0
        %472 = vperm.xlu0 %471, %v390
        %v473 = vpop.permute.xlu0 %472
        %476 = vset.pattern.permute.xlu0 0
        %477 = vperm.xlu0 %476, %v391
        %v478 = vpop.permute.xlu0 %477
        %481 = vset.pattern.permute.xlu0 0
        %482 = vperm.xlu0 %481, %v392
        %v483 = vpop.permute.xlu0 %482
        %486 = vset.pattern.permute.xlu0 0
        %487 = vperm.xlu0 %486, %v393
        %v488 = vpop.permute.xlu0 %487
        %491 = vset.pattern.permute.xlu0 0
        %492 = vperm.xlu0 %491, %v394
        %v493 = vpop.permute.xlu0 %492
        %496 = vset.pattern.permute.xlu0 0
        %497 = vperm.xlu0 %496, %v395
        %v498 = vpop.permute.xlu0 %497
        %501 = vset.pattern.permute.xlu0 0
        %502 = vperm.xlu0 %501, %v396
        %v503 = vpop.permute.xlu0 %502
        %506 = vset.pattern.permute.xlu0 0
        %507 = vperm.xlu0 %506, %v397
        %v508 = vpop.permute.xlu0 %507
        %511 = vset.pattern.permute.xlu0 0
        %512 = vperm.xlu0 %511, %v398
        %v513 = vpop.permute.xlu0 %512
        %516 = vset.pattern.permute.xlu0 0
        %517 = vperm.xlu0 %516, %v399
        %v518 = vpop.permute.xlu0 %517
        %521 = vset.pattern.permute.xlu0 0
        %522 = vperm.xlu0 %521, %v400
        %v523 = vpop.permute.xlu0 %522
        %526 = vset.pattern.permute.xlu0 0
        %527 = vperm.xlu0 %526, %v401
        %v528 = vpop.permute.xlu0 %527
        %531 = vset.pattern.permute.xlu0 0
        %532 = vperm.xlu0 %531, %v402
        %v533 = vpop.permute.xlu0 %532
        %536 = vset.pattern.permute.xlu0 0
        %537 = vperm.xlu0 %536, %v403
        %v538 = vpop.permute.xlu0 %537
        %541 = vset.pattern.permute.xlu0 0
        %542 = vperm.xlu0 %541, %v404
        %v543 = vpop.permute.xlu0 %542
        %546 = vset.pattern.permute.xlu0 0
        %547 = vperm.xlu0 %546, %v405
        %v548 = vpop.permute.xlu0 %547
        %551 = vset.pattern.permute.xlu0 0
        %552 = vperm.xlu0 %551, %v406
        %v553 = vpop.permute.xlu0 %552
        %556 = vset.pattern.permute.xlu0 0
        %557 = vperm.xlu0 %556, %v407
        %v558 = vpop.permute.xlu0 %557
        %561 = vset.pattern.permute.xlu0 0
        %562 = vperm.xlu0 %561, %v408
        %v563 = vpop.permute.xlu0 %562
        %566 = vset.pattern.permute.xlu0 0
        %567 = vperm.xlu0 %566, %v409
        %v568 = vpop.permute.xlu0 %567
        %v634 = vunpack.c.l.b16 %v314
        %v635 = vunpack.c.h.b16 %v314
        %v636 = vunpack.c.l.b16 %v315
        %v637 = vunpack.c.h.b16 %v315
        %v638 = vunpack.c.l.b16 %v316
        %v639 = vunpack.c.h.b16 %v316
        %v640 = vunpack.c.l.b16 %v317
        %v641 = vunpack.c.h.b16 %v317
        %v642 = vunpack.c.l.b16 %v318
        %v643 = vunpack.c.h.b16 %v318
        %v644 = vunpack.c.l.b16 %v319
        %v645 = vunpack.c.h.b16 %v319
        %v646 = vunpack.c.l.b16 %v320
        %v647 = vunpack.c.h.b16 %v320
        %v648 = vunpack.c.l.b16 %v321
        %v649 = vunpack.c.h.b16 %v321
        %v650 = vunpack.c.l.b16 %v322
        %v651 = vunpack.c.h.b16 %v322
        %v652 = vunpack.c.l.b16 %v323
        %v653 = vunpack.c.h.b16 %v323
        %v654 = vunpack.c.l.b16 %v324
        %v655 = vunpack.c.h.b16 %v324
        %v656 = vunpack.c.l.b16 %v325
        %v657 = vunpack.c.h.b16 %v325
        %v658 = vunpack.c.l.b16 %v326
        %v659 = vunpack.c.h.b16 %v326
        %v660 = vunpack.c.l.b16 %v327
        %v661 = vunpack.c.h.b16 %v327
        %v662 = vunpack.c.l.b16 %v328
        %v663 = vunpack.c.h.b16 %v328
        %v664 = vunpack.c.l.b16 %v329
        %v665 = vunpack.c.h.b16 %v329
        %v666 = vunpack.c.l.b16 %v330
        %v667 = vunpack.c.h.b16 %v330
        %v668 = vunpack.c.l.b16 %v331
        %v669 = vunpack.c.h.b16 %v331
        %v670 = vunpack.c.l.b16 %v332
        %v671 = vunpack.c.h.b16 %v332
        %v672 = vunpack.c.l.b16 %v333
        %v673 = vunpack.c.h.b16 %v333
        %v674 = vunpack.c.l.b16 %v334
        %v675 = vunpack.c.h.b16 %v334
        %v676 = vunpack.c.l.b16 %v335
        %v677 = vunpack.c.h.b16 %v335
        %v678 = vunpack.c.l.b16 %v336
        %v679 = vunpack.c.h.b16 %v336
        %v680 = vunpack.c.l.b16 %v337
        %v681 = vunpack.c.h.b16 %v337
        %v682 = vunpack.c.l.b16 %v338
        %v683 = vunpack.c.h.b16 %v338
        %v684 = vunpack.c.l.b16 %v339
        %v685 = vunpack.c.h.b16 %v339
        %v686 = vunpack.c.l.b16 %v340
        %v687 = vunpack.c.h.b16 %v340
        %v688 = vunpack.c.l.b16 %v341
        %v689 = vunpack.c.h.b16 %v341
        %v690 = vunpack.c.l.b16 %v342
        %v691 = vunpack.c.h.b16 %v342
        %v692 = vunpack.c.l.b16 %v343
        %v693 = vunpack.c.h.b16 %v343
        %v694 = vunpack.c.l.b16 %v344
        %v695 = vunpack.c.h.b16 %v344
        %v696 = vunpack.c.l.b16 %v345
        %v697 = vunpack.c.h.b16 %v345
        %v698 = vunpack.c.l.b16 %v346
        %v699 = vunpack.c.h.b16 %v346
        %v700 = vunpack.c.l.b16 %v347
        %v701 = vunpack.c.h.b16 %v347
        %v702 = vunpack.c.l.b16 %v348
        %v703 = vunpack.c.h.b16 %v348
        %v704 = vunpack.c.l.b16 %v349
        %v705 = vunpack.c.h.b16 %v349
        %v706 = vunpack.c.l.b16 %v350
        %v707 = vunpack.c.h.b16 %v350
        %v708 = vunpack.c.l.b16 %v351
        %v709 = vunpack.c.h.b16 %v351
        %v710 = vunpack.c.l.b16 %v352
        %v711 = vunpack.c.h.b16 %v352
        %v712 = vunpack.c.l.b16 %v353
        %v713 = vunpack.c.h.b16 %v353
        %v714 = vunpack.c.l.b16 %v354
        %v715 = vunpack.c.h.b16 %v354
        %v716 = vunpack.c.l.b16 %v355
        %v717 = vunpack.c.h.b16 %v355
        %v718 = vunpack.c.l.b16 %v356
        %v719 = vunpack.c.h.b16 %v356
        %v720 = vunpack.c.l.b16 %v357
        %v721 = vunpack.c.h.b16 %v357
        %v722 = vunpack.c.l.b16 %v358
        %v723 = vunpack.c.h.b16 %v358
        %v724 = vunpack.c.l.b16 %v359
        %v725 = vunpack.c.h.b16 %v359
        %v726 = vunpack.c.l.b16 %v360
        %v727 = vunpack.c.h.b16 %v360
        %v728 = vunpack.c.l.b16 %v361
        %v729 = vunpack.c.h.b16 %v361
        %v730 = vunpack.c.l.b16 %v362
        %v731 = vunpack.c.h.b16 %v362
        %v732 = vunpack.c.l.b16 %v363
        %v733 = vunpack.c.h.b16 %v363
        %v734 = vunpack.c.l.b16 %v364
        %v735 = vunpack.c.h.b16 %v364
        %v736 = vunpack.c.l.b16 %v365
        %v737 = vunpack.c.h.b16 %v365
        %v738 = vunpack.c.l.b16 %v366
        %v739 = vunpack.c.h.b16 %v366
        %v740 = vunpack.c.l.b16 %v367
        %v741 = vunpack.c.h.b16 %v367
        %v742 = vunpack.c.l.b16 %v368
        %v743 = vunpack.c.h.b16 %v368
        %v744 = vunpack.c.l.b16 %v369
        %v745 = vunpack.c.h.b16 %v369
        %v746 = vunpack.c.l.b16 %v370
        %v747 = vunpack.c.h.b16 %v370
        %v748 = vunpack.c.l.b16 %v371
        %v749 = vunpack.c.h.b16 %v371
        %v750 = vunpack.c.l.b16 %v372
        %v751 = vunpack.c.h.b16 %v372
        %v752 = vunpack.c.l.b16 %v373
        %v753 = vunpack.c.h.b16 %v373
        %v754 = vunpack.c.l.b16 %v374
        %v755 = vunpack.c.h.b16 %v374
        %v756 = vunpack.c.l.b16 %v375
        %v757 = vunpack.c.h.b16 %v375
        %v758 = vunpack.c.l.b16 %v376
        %v759 = vunpack.c.h.b16 %v376
        %v760 = vunpack.c.l.b16 %v377
        %v761 = vunpack.c.h.b16 %v377
        %v762 = vpack.c.b16 %v638, %v634
        %v763 = vpack.c.b16 %v639, %v635
        %v764 = vpack.c.b16 %v640, %v636
        %v765 = vpack.c.b16 %v641, %v637
        %v766 = vpack.c.b16 %v646, %v642
        %v767 = vpack.c.b16 %v647, %v643
        %v768 = vpack.c.b16 %v648, %v644
        %v769 = vpack.c.b16 %v649, %v645
        %v770 = vpack.c.b16 %v654, %v650
        %v771 = vpack.c.b16 %v655, %v651
        %v772 = vpack.c.b16 %v656, %v652
        %v773 = vpack.c.b16 %v657, %v653
        %v774 = vpack.c.b16 %v662, %v658
        %v775 = vpack.c.b16 %v663, %v659
        %v776 = vpack.c.b16 %v664, %v660
        %v777 = vpack.c.b16 %v665, %v661
        %v778 = vpack.c.b16 %v670, %v666
        %v779 = vpack.c.b16 %v671, %v667
        %v780 = vpack.c.b16 %v672, %v668
        %v781 = vpack.c.b16 %v673, %v669
        %v782 = vpack.c.b16 %v678, %v674
        %v783 = vpack.c.b16 %v679, %v675
        %v784 = vpack.c.b16 %v680, %v676
        %v785 = vpack.c.b16 %v681, %v677
        %v786 = vpack.c.b16 %v686, %v682
        %v787 = vpack.c.b16 %v687, %v683
        %v788 = vpack.c.b16 %v688, %v684
        %v789 = vpack.c.b16 %v689, %v685
        %v790 = vpack.c.b16 %v694, %v690
        %v791 = vpack.c.b16 %v695, %v691
        %v792 = vpack.c.b16 %v696, %v692
        %v793 = vpack.c.b16 %v697, %v693
        %v794 = vpack.c.b16 %v702, %v698
        %v795 = vpack.c.b16 %v703, %v699
        %v796 = vpack.c.b16 %v704, %v700
        %v797 = vpack.c.b16 %v705, %v701
        %v798 = vpack.c.b16 %v710, %v706
        %v799 = vpack.c.b16 %v711, %v707
        %v800 = vpack.c.b16 %v712, %v708
        %v801 = vpack.c.b16 %v713, %v709
        %v802 = vpack.c.b16 %v718, %v714
        %v803 = vpack.c.b16 %v719, %v715
        %v804 = vpack.c.b16 %v720, %v716
        %v805 = vpack.c.b16 %v721, %v717
        %v806 = vpack.c.b16 %v726, %v722
        %v807 = vpack.c.b16 %v727, %v723
        %v808 = vpack.c.b16 %v728, %v724
        %v809 = vpack.c.b16 %v729, %v725
        %v810 = vpack.c.b16 %v734, %v730
        %v811 = vpack.c.b16 %v735, %v731
        %v812 = vpack.c.b16 %v736, %v732
        %v813 = vpack.c.b16 %v737, %v733
        %v814 = vpack.c.b16 %v742, %v738
        %v815 = vpack.c.b16 %v743, %v739
        %v816 = vpack.c.b16 %v744, %v740
        %v817 = vpack.c.b16 %v745, %v741
        %v818 = vpack.c.b16 %v750, %v746
        %v819 = vpack.c.b16 %v751, %v747
        %v820 = vpack.c.b16 %v752, %v748
        %v821 = vpack.c.b16 %v753, %v749
        %v822 = vpack.c.b16 %v758, %v754
        %v823 = vpack.c.b16 %v759, %v755
        %v824 = vpack.c.b16 %v760, %v756
        %v825 = vpack.c.b16 %v761, %v757
        %890 = vmatprep.subr.bf16.mxu0 0
        %891 = vmatpush1.bf16.msra.mxu0 %v282
        %892 = vmatprep.subr.bf16.mxu0 0
        %893 = vmatpush1.bf16.msra.mxu0 %v283
        %894 = vmatprep.subr.bf16.mxu0 0
        %895 = vmatpush1.bf16.msra.mxu0 %v284
        %896 = vmatprep.subr.bf16.mxu0 0
        %897 = vmatpush1.bf16.msra.mxu0 %v285
        %898 = vmatprep.subr.bf16.mxu0 0
        %899 = vmatpush1.bf16.msra.mxu0 %v286
        %900 = vmatprep.subr.bf16.mxu0 0
        %901 = vmatpush1.bf16.msra.mxu0 %v287
        %902 = vmatprep.subr.bf16.mxu0 0
        %903 = vmatpush1.bf16.msra.mxu0 %v288
        %904 = vmatprep.subr.bf16.mxu0 0
        %905 = vmatpush1.bf16.msra.mxu0 %v289
        %906 = vmatprep.subr.bf16.mxu0 0
        %907 = vmatpush1.bf16.msra.mxu0 %v290
        %908 = vmatprep.subr.bf16.mxu0 0
        %909 = vmatpush1.bf16.msra.mxu0 %v291
        %910 = vmatprep.subr.bf16.mxu0 0
        %911 = vmatpush1.bf16.msra.mxu0 %v292
        %912 = vmatprep.subr.bf16.mxu0 0
        %913 = vmatpush1.bf16.msra.mxu0 %v293
        %914 = vmatprep.subr.bf16.mxu0 0
        %915 = vmatpush1.bf16.msra.mxu0 %v294
        %916 = vmatprep.subr.bf16.mxu0 0
        %917 = vmatpush1.bf16.msra.mxu0 %v295
        %918 = vmatprep.subr.bf16.mxu0 0
        %919 = vmatpush1.bf16.msra.mxu0 %v296
        %920 = vmatprep.subr.bf16.mxu0 0
        %921 = vmatpush1.bf16.msra.mxu0 %v297
        %922 = vmatprep.mubr.bf16.mxu0 %v763
        %923 = vmatmul.mubr.bf16.gmra.mrb[0].mxu0 %v762
        %v924 = vpop.f32.mrb[0].mxu0
        %v925 = vadd.f32 %v413, %v924
        %v926 = vpop.f32.mrb[0].mxu0
        %v927 = vpop.f32.mrb[0].mxu0
        %v928 = vadd.f32 %v418, %v927
        %v929 = vpop.f32.mrb[0].mxu0
        %930 = vmatprep.mubr.bf16.mxu0 %v767
        %931 = vmatmul.mubr.bf16.gmra.mrb[0].mxu0 %v766
        %v932 = vpop.f32.mrb[0].mxu0
        %v933 = vadd.f32 %v423, %v932
        %v934 = vpop.f32.mrb[0].mxu0
        %v935 = vpop.f32.mrb[0].mxu0
        %v936 = vadd.f32 %v428, %v935
        %v937 = vpop.f32.mrb[0].mxu0
        %938 = vmatprep.mubr.bf16.mxu0 %v771
        %939 = vmatmul.mubr.bf16.gmra.mrb[0].mxu0 %v770
        %v940 = vpop.f32.mrb[0].mxu0
        %v941 = vadd.f32 %v433, %v940
        %v942 = vpop.f32.mrb[0].mxu0
        %v943 = vpop.f32.mrb[0].mxu0
        %v944 = vadd.f32 %v438, %v943
        %v945 = vpop.f32.mrb[0].mxu0
        %946 = vmatprep.mubr.bf16.mxu0 %v775
        %947 = vmatmul.mubr.bf16.gmra.mrb[0].mxu0 %v774
        %v948 = vpop.f32.mrb[0].mxu0
        %v949 = vadd.f32 %v443, %v948
        %v950 = vpop.f32.mrb[0].mxu0
        %v951 = vpop.f32.mrb[0].mxu0
        %v952 = vadd.f32 %v448, %v951
        %v953 = vpop.f32.mrb[0].mxu0
        %954 = vmatprep.mubr.bf16.mxu0 %v779
        %955 = vmatmul.mubr.bf16.gmra.mrb[0].mxu0 %v778
        %v956 = vpop.f32.mrb[0].mxu0
        %v957 = vadd.f32 %v453, %v956
        %v958 = vpop.f32.mrb[0].mxu0
        %v959 = vpop.f32.mrb[0].mxu0
        %v960 = vadd.f32 %v458, %v959
        %v961 = vpop.f32.mrb[0].mxu0
        %962 = vmatprep.mubr.bf16.mxu0 %v783
        %963 = vmatmul.mubr.bf16.gmra.mrb[0].mxu0 %v782
        %v964 = vpop.f32.mrb[0].mxu0
        %v965 = vadd.f32 %v463, %v964
        %v966 = vpop.f32.mrb[0].mxu0
        %v967 = vpop.f32.mrb[0].mxu0
        %v968 = vadd.f32 %v468, %v967
        %v969 = vpop.f32.mrb[0].mxu0
        %970 = vmatprep.mubr.bf16.mxu0 %v787
        %971 = vmatmul.mubr.bf16.gmra.mrb[0].mxu0 %v786
        %v972 = vpop.f32.mrb[0].mxu0
        %v973 = vadd.f32 %v473, %v972
        %v974 = vpop.f32.mrb[0].mxu0
        %v975 = vpop.f32.mrb[0].mxu0
        %v976 = vadd.f32 %v478, %v975
        %v977 = vpop.f32.mrb[0].mxu0
        %978 = vmatprep.mubr.bf16.mxu0 %v791
        %979 = vmatmul.mubr.bf16.gmra.mrb[0].mxu0 %v790
        %v980 = vpop.f32.mrb[0].mxu0
        %v981 = vadd.f32 %v483, %v980
        %v982 = vpop.f32.mrb[0].mxu0
        %v983 = vpop.f32.mrb[0].mxu0
        %v984 = vadd.f32 %v488, %v983
        %v985 = vpop.f32.mrb[0].mxu0
        %986 = vmatprep.mubr.bf16.mxu0 %v795
        %987 = vmatmul.mubr.bf16.gmra.mrb[0].mxu0 %v794
        %v988 = vpop.f32.mrb[0].mxu0
        %v989 = vadd.f32 %v493, %v988
        %v990 = vpop.f32.mrb[0].mxu0
        %v991 = vpop.f32.mrb[0].mxu0
        %v992 = vadd.f32 %v498, %v991
        %v993 = vpop.f32.mrb[0].mxu0
        %994 = vmatprep.mubr.bf16.mxu0 %v799
        %995 = vmatmul.mubr.bf16.gmra.mrb[0].mxu0 %v798
        %v996 = vpop.f32.mrb[0].mxu0
        %v997 = vadd.f32 %v503, %v996
        %v998 = vpop.f32.mrb[0].mxu0
        %v999 = vpop.f32.mrb[0].mxu0
        %v1000 = vadd.f32 %v508, %v999
        %v1001 = vpop.f32.mrb[0].mxu0
        %1002 = vmatprep.mubr.bf16.mxu0 %v803
        %1003 = vmatmul.mubr.bf16.gmra.mrb[0].mxu0 %v802
        %v1004 = vpop.f32.mrb[0].mxu0
        %v1005 = vadd.f32 %v513, %v1004
        %v1006 = vpop.f32.mrb[0].mxu0
        %v1007 = vpop.f32.mrb[0].mxu0
        %v1008 = vadd.f32 %v518, %v1007
        %v1009 = vpop.f32.mrb[0].mxu0
        %1010 = vmatprep.mubr.bf16.mxu0 %v807
        %1011 = vmatmul.mubr.bf16.gmra.mrb[0].mxu0 %v806
        %v1012 = vpop.f32.mrb[0].mxu0
        %v1013 = vadd.f32 %v523, %v1012
        %v1014 = vpop.f32.mrb[0].mxu0
        %v1015 = vpop.f32.mrb[0].mxu0
        %v1016 = vadd.f32 %v528, %v1015
        %v1017 = vpop.f32.mrb[0].mxu0
        %1018 = vmatprep.mubr.bf16.mxu0 %v811
        %1019 = vmatmul.mubr.bf16.gmra.mrb[0].mxu0 %v810
        %v1020 = vpop.f32.mrb[0].mxu0
        %v1021 = vadd.f32 %v533, %v1020
        %v1022 = vpop.f32.mrb[0].mxu0
        %v1023 = vpop.f32.mrb[0].mxu0
        %v1024 = vadd.f32 %v538, %v1023
        %v1025 = vpop.f32.mrb[0].mxu0
        %1026 = vmatprep.mubr.bf16.mxu0 %v815
        %1027 = vmatmul.mubr.bf16.gmra.mrb[0].mxu0 %v814
        %v1028 = vpop.f32.mrb[0].mxu0
        %v1029 = vadd.f32 %v543, %v1028
        %v1030 = vpop.f32.mrb[0].mxu0
        %v1031 = vpop.f32.mrb[0].mxu0
        %v1032 = vadd.f32 %v548, %v1031
        %v1033 = vpop.f32.mrb[0].mxu0
        %1034 = vmatprep.mubr.bf16.mxu0 %v819
        %1035 = vmatmul.mubr.bf16.gmra.mrb[0].mxu0 %v818
        %v1036 = vpop.f32.mrb[0].mxu0
        %v1037 = vadd.f32 %v553, %v1036
        %v1038 = vpop.f32.mrb[0].mxu0
        %v1039 = vpop.f32.mrb[0].mxu0
        %v1040 = vadd.f32 %v558, %v1039
        %v1041 = vpop.f32.mrb[0].mxu0
        %1042 = vmatprep.mubr.bf16.mxu0 %v823
        %1043 = vmatmul.mubr.bf16.gmra.mrb[0].mxu0 %v822
        %v1044 = vpop.f32.mrb[0].mxu0
        %v1045 = vadd.f32 %v563, %v1044
        %v1046 = vpop.f32.mrb[0].mxu0
        %v1047 = vpop.f32.mrb[0].mxu0
        %v1048 = vadd.f32 %v568, %v1047
        %v1049 = vpop.f32.mrb[0].mxu0
        %1050 = vdwg.mxu0
        %1051 = vmatprep.subr.bf16.mxu0 0
        %1052 = vmatpush1.bf16.msra.mxu0 %v298
        %1053 = vmatprep.subr.bf16.mxu0 0
        %1054 = vmatpush1.bf16.msra.mxu0 %v299
        %1055 = vmatprep.subr.bf16.mxu0 0
        %1056 = vmatpush1.bf16.msra.mxu0 %v300
        %1057 = vmatprep.subr.bf16.mxu0 0
        %1058 = vmatpush1.bf16.msra.mxu0 %v301
        %1059 = vmatprep.subr.bf16.mxu0 0
        %1060 = vmatpush1.bf16.msra.mxu0 %v302
        %1061 = vmatprep.subr.bf16.mxu0 0
        %1062 = vmatpush1.bf16.msra.mxu0 %v303
        %1063 = vmatprep.subr.bf16.mxu0 0
        %1064 = vmatpush1.bf16.msra.mxu0 %v304
        %1065 = vmatprep.subr.bf16.mxu0 0
        %1066 = vmatpush1.bf16.msra.mxu0 %v305
        %1067 = vmatprep.subr.bf16.mxu0 0
        %1068 = vmatpush1.bf16.msra.mxu0 %v306
        %1069 = vmatprep.subr.bf16.mxu0 0
        %1070 = vmatpush1.bf16.msra.mxu0 %v307
        %1071 = vmatprep.subr.bf16.mxu0 0
        %1072 = vmatpush1.bf16.msra.mxu0 %v308
        %1073 = vmatprep.subr.bf16.mxu0 0
        %1074 = vmatpush1.bf16.msra.mxu0 %v309
        %1075 = vmatprep.subr.bf16.mxu0 0
        %1076 = vmatpush1.bf16.msra.mxu0 %v310
        %1077 = vmatprep.subr.bf16.mxu0 0
        %1078 = vmatpush1.bf16.msra.mxu0 %v311
        %1079 = vmatprep.subr.bf16.mxu0 0
        %1080 = vmatpush1.bf16.msra.mxu0 %v312
        %1081 = vmatprep.subr.bf16.mxu0 0
        %1082 = vmatpush1.bf16.msra.mxu0 %v313
        %1083 = vmatprep.mubr.bf16.mxu0 %v765
        %1084 = vmatmul.mubr.bf16.gmra.mrb[0].mxu0 %v764
        %v1085 = vpop.f32.mrb[0].mxu0
        %v1086 = vadd.f32 %v925, %v1085
        %v1087 = vpop.f32.mrb[0].mxu0
        %v1088 = vpop.f32.mrb[0].mxu0
        %v1089 = vadd.f32 %v928, %v1088
        %v1090 = vpop.f32.mrb[0].mxu0
        %1091 = vmatprep.mubr.bf16.mxu0 %v769
        %1092 = vmatmul.mubr.bf16.gmra.mrb[0].mxu0 %v768
        %v1093 = vpop.f32.mrb[0].mxu0
        %v1094 = vadd.f32 %v933, %v1093
        %v1095 = vpop.f32.mrb[0].mxu0
        %v1096 = vpop.f32.mrb[0].mxu0
        %v1097 = vadd.f32 %v936, %v1096
        %v1098 = vpop.f32.mrb[0].mxu0
        %1099 = vmatprep.mubr.bf16.mxu0 %v773
        %1100 = vmatmul.mubr.bf16.gmra.mrb[0].mxu0 %v772
        %v1101 = vpop.f32.mrb[0].mxu0
        %v1102 = vadd.f32 %v941, %v1101
        %v1103 = vpop.f32.mrb[0].mxu0
        %v1104 = vpop.f32.mrb[0].mxu0
        %v1105 = vadd.f32 %v944, %v1104
        %v1106 = vpop.f32.mrb[0].mxu0
        %1107 = vmatprep.mubr.bf16.mxu0 %v777
        %1108 = vmatmul.mubr.bf16.gmra.mrb[0].mxu0 %v776
        %v1109 = vpop.f32.mrb[0].mxu0
        %v1110 = vadd.f32 %v949, %v1109
        %v1111 = vpop.f32.mrb[0].mxu0
        %v1112 = vpop.f32.mrb[0].mxu0
        %v1113 = vadd.f32 %v952, %v1112
        %v1114 = vpop.f32.mrb[0].mxu0
        %1115 = vmatprep.mubr.bf16.mxu0 %v781
        %1116 = vmatmul.mubr.bf16.gmra.mrb[0].mxu0 %v780
        %v1117 = vpop.f32.mrb[0].mxu0
        %v1118 = vadd.f32 %v957, %v1117
        %v1119 = vpop.f32.mrb[0].mxu0
        %v1120 = vpop.f32.mrb[0].mxu0
        %v1121 = vadd.f32 %v960, %v1120
        %v1122 = vpop.f32.mrb[0].mxu0
        %1123 = vmatprep.mubr.bf16.mxu0 %v785
        %1124 = vmatmul.mubr.bf16.gmra.mrb[0].mxu0 %v784
        %v1125 = vpop.f32.mrb[0].mxu0
        %v1126 = vadd.f32 %v965, %v1125
        %v1127 = vpop.f32.mrb[0].mxu0
        %v1128 = vpop.f32.mrb[0].mxu0
        %v1129 = vadd.f32 %v968, %v1128
        %v1130 = vpop.f32.mrb[0].mxu0
        %1131 = vmatprep.mubr.bf16.mxu0 %v789
        %1132 = vmatmul.mubr.bf16.gmra.mrb[0].mxu0 %v788
        %v1133 = vpop.f32.mrb[0].mxu0
        %v1134 = vadd.f32 %v973, %v1133
        %v1135 = vpop.f32.mrb[0].mxu0
        %v1136 = vpop.f32.mrb[0].mxu0
        %v1137 = vadd.f32 %v976, %v1136
        %v1138 = vpop.f32.mrb[0].mxu0
        %1139 = vmatprep.mubr.bf16.mxu0 %v793
        %1140 = vmatmul.mubr.bf16.gmra.mrb[0].mxu0 %v792
        %v1141 = vpop.f32.mrb[0].mxu0
        %v1142 = vadd.f32 %v981, %v1141
        %v1143 = vpop.f32.mrb[0].mxu0
        %v1144 = vpop.f32.mrb[0].mxu0
        %v1145 = vadd.f32 %v984, %v1144
        %v1146 = vpop.f32.mrb[0].mxu0
        %1147 = vmatprep.mubr.bf16.mxu0 %v797
        %1148 = vmatmul.mubr.bf16.gmra.mrb[0].mxu0 %v796
        %v1149 = vpop.f32.mrb[0].mxu0
        %v1150 = vadd.f32 %v989, %v1149
        %v1151 = vpop.f32.mrb[0].mxu0
        %v1152 = vpop.f32.mrb[0].mxu0
        %v1153 = vadd.f32 %v992, %v1152
        %v1154 = vpop.f32.mrb[0].mxu0
        %1155 = vmatprep.mubr.bf16.mxu0 %v801
        %1156 = vmatmul.mubr.bf16.gmra.mrb[0].mxu0 %v800
        %v1157 = vpop.f32.mrb[0].mxu0
        %v1158 = vadd.f32 %v997, %v1157
        %v1159 = vpop.f32.mrb[0].mxu0
        %v1160 = vpop.f32.mrb[0].mxu0
        %v1161 = vadd.f32 %v1000, %v1160
        %v1162 = vpop.f32.mrb[0].mxu0
        %1163 = vmatprep.mubr.bf16.mxu0 %v805
        %1164 = vmatmul.mubr.bf16.gmra.mrb[0].mxu0 %v804
        %v1165 = vpop.f32.mrb[0].mxu0
        %v1166 = vadd.f32 %v1005, %v1165
        %v1167 = vpop.f32.mrb[0].mxu0
        %v1168 = vpop.f32.mrb[0].mxu0
        %v1169 = vadd.f32 %v1008, %v1168
        %v1170 = vpop.f32.mrb[0].mxu0
        %1171 = vmatprep.mubr.bf16.mxu0 %v809
        %1172 = vmatmul.mubr.bf16.gmra.mrb[0].mxu0 %v808
        %v1173 = vpop.f32.mrb[0].mxu0
        %v1174 = vadd.f32 %v1013, %v1173
        %v1175 = vpop.f32.mrb[0].mxu0
        %v1176 = vpop.f32.mrb[0].mxu0
        %v1177 = vadd.f32 %v1016, %v1176
        %v1178 = vpop.f32.mrb[0].mxu0
        %1179 = vmatprep.mubr.bf16.mxu0 %v813
        %1180 = vmatmul.mubr.bf16.gmra.mrb[0].mxu0 %v812
        %v1181 = vpop.f32.mrb[0].mxu0
        %v1182 = vadd.f32 %v1021, %v1181
        %v1183 = vpop.f32.mrb[0].mxu0
        %v1184 = vpop.f32.mrb[0].mxu0
        %v1185 = vadd.f32 %v1024, %v1184
        %v1186 = vpop.f32.mrb[0].mxu0
        %1187 = vmatprep.mubr.bf16.mxu0 %v817
        %1188 = vmatmul.mubr.bf16.gmra.mrb[0].mxu0 %v816
        %v1189 = vpop.f32.mrb[0].mxu0
        %v1190 = vadd.f32 %v1029, %v1189
        %v1191 = vpop.f32.mrb[0].mxu0
        %v1192 = vpop.f32.mrb[0].mxu0
        %v1193 = vadd.f32 %v1032, %v1192
        %v1194 = vpop.f32.mrb[0].mxu0
        %1195 = vmatprep.mubr.bf16.mxu0 %v821
        %1196 = vmatmul.mubr.bf16.gmra.mrb[0].mxu0 %v820
        %v1197 = vpop.f32.mrb[0].mxu0
        %v1198 = vadd.f32 %v1037, %v1197
        %v1199 = vpop.f32.mrb[0].mxu0
        %v1200 = vpop.f32.mrb[0].mxu0
        %v1201 = vadd.f32 %v1040, %v1200
        %v1202 = vpop.f32.mrb[0].mxu0
        %1203 = vmatprep.mubr.bf16.mxu0 %v825
        %1204 = vmatmul.mubr.bf16.gmra.mrb[0].mxu0 %v824
        %v1205 = vpop.f32.mrb[0].mxu0
        %v1206 = vadd.f32 %v1045, %v1205
        %v1207 = vpop.f32.mrb[0].mxu0
        %v1208 = vpop.f32.mrb[0].mxu0
        %v1209 = vadd.f32 %v1048, %v1208
        %v1210 = vpop.f32.mrb[0].mxu0
        %1211 = vdwg.mxu0
        %v1212 = vpack.c.bf16 %v1089, %v1086
        %v1213 = vpack.c.bf16 %v1097, %v1094
        %v1214 = vpack.c.bf16 %v1105, %v1102
        %v1215 = vpack.c.bf16 %v1113, %v1110
        %v1216 = vpack.c.bf16 %v1121, %v1118
        %v1217 = vpack.c.bf16 %v1129, %v1126
        %v1218 = vpack.c.bf16 %v1137, %v1134
        %v1219 = vpack.c.bf16 %v1145, %v1142
        %v1220 = vpack.c.bf16 %v1153, %v1150
        %v1221 = vpack.c.bf16 %v1161, %v1158
        %v1222 = vpack.c.bf16 %v1169, %v1166
        %v1223 = vpack.c.bf16 %v1177, %v1174
        %v1224 = vpack.c.bf16 %v1185, %v1182
        %v1225 = vpack.c.bf16 %v1193, %v1190
        %v1226 = vpack.c.bf16 %v1201, %v1198
        %v1227 = vpack.c.bf16 %v1209, %v1206
        %v1244 = vunpack.c.l.b16 %v1212
        %v1245 = vunpack.c.h.b16 %v1212
        %v1246 = vunpack.c.l.b16 %v1213
        %v1247 = vunpack.c.h.b16 %v1213
        %v1248 = vunpack.c.l.b16 %v1214
        %v1249 = vunpack.c.h.b16 %v1214
        %v1250 = vunpack.c.l.b16 %v1215
        %v1251 = vunpack.c.h.b16 %v1215
        %v1252 = vunpack.c.l.b16 %v1216
        %v1253 = vunpack.c.h.b16 %v1216
        %v1254 = vunpack.c.l.b16 %v1217
        %v1255 = vunpack.c.h.b16 %v1217
        %v1256 = vunpack.c.l.b16 %v1218
        %v1257 = vunpack.c.h.b16 %v1218
        %v1258 = vunpack.c.l.b16 %v1219
        %v1259 = vunpack.c.h.b16 %v1219
        %v1260 = vunpack.c.l.b16 %v1220
        %v1261 = vunpack.c.h.b16 %v1220
        %v1262 = vunpack.c.l.b16 %v1221
        %v1263 = vunpack.c.h.b16 %v1221
        %v1264 = vunpack.c.l.b16 %v1222
        %v1265 = vunpack.c.h.b16 %v1222
        %v1266 = vunpack.c.l.b16 %v1223
        %v1267 = vunpack.c.h.b16 %v1223
        %v1268 = vunpack.c.l.b16 %v1224
        %v1269 = vunpack.c.h.b16 %v1224
        %v1270 = vunpack.c.l.b16 %v1225
        %v1271 = vunpack.c.h.b16 %v1225
        %v1272 = vunpack.c.l.b16 %v1226
        %v1273 = vunpack.c.h.b16 %v1226
        %v1274 = vunpack.c.l.b16 %v1227
        %v1275 = vunpack.c.h.b16 %v1227
        %v1276 = vpack.c.b16 %v1244, %v1244
        %v1277 = vpack.c.b16 %v1245, %v1245
        %v1278 = vpack.c.b16 %v1246, %v1246
        %v1279 = vpack.c.b16 %v1247, %v1247
        %v1280 = vpack.c.b16 %v1248, %v1248
        %v1281 = vpack.c.b16 %v1249, %v1249
        %v1282 = vpack.c.b16 %v1250, %v1250
        %v1283 = vpack.c.b16 %v1251, %v1251
        %v1284 = vpack.c.b16 %v1252, %v1252
        %v1285 = vpack.c.b16 %v1253, %v1253
        %v1286 = vpack.c.b16 %v1254, %v1254
        %v1287 = vpack.c.b16 %v1255, %v1255
        %v1288 = vpack.c.b16 %v1256, %v1256
        %v1289 = vpack.c.b16 %v1257, %v1257
        %v1290 = vpack.c.b16 %v1258, %v1258
        %v1291 = vpack.c.b16 %v1259, %v1259
        %v1292 = vpack.c.b16 %v1260, %v1260
        %v1293 = vpack.c.b16 %v1261, %v1261
        %v1294 = vpack.c.b16 %v1262, %v1262
        %v1295 = vpack.c.b16 %v1263, %v1263
        %v1296 = vpack.c.b16 %v1264, %v1264
        %v1297 = vpack.c.b16 %v1265, %v1265
        %v1298 = vpack.c.b16 %v1266, %v1266
        %v1299 = vpack.c.b16 %v1267, %v1267
        %v1300 = vpack.c.b16 %v1268, %v1268
        %v1301 = vpack.c.b16 %v1269, %v1269
        %v1302 = vpack.c.b16 %v1270, %v1270
        %v1303 = vpack.c.b16 %v1271, %v1271
        %v1304 = vpack.c.b16 %v1272, %v1272
        %v1305 = vpack.c.b16 %v1273, %v1273
        %v1306 = vpack.c.b16 %v1274, %v1274
        %v1307 = vpack.c.b16 %v1275, %v1275
        %vm1340 = vcmask 125952
        %1341 = vst.msk [vmem:[%s216] sm:$0xf] %vm1340, %v1276
        %1342 = vst.msk [vmem:[%s216 + $0x4] sm:$0xf] %vm1340, %v1277
        %1343 = vst.msk [vmem:[%s216 + $0x8] sm:$0xf] %vm1340, %v1278
        %1344 = vst.msk [vmem:[%s216 + $0xc] sm:$0xf] %vm1340, %v1279
        %1345 = vst.msk [vmem:[%s216 + $0x10] sm:$0xf] %vm1340, %v1280
        %1346 = vst.msk [vmem:[%s216 + $0x14] sm:$0xf] %vm1340, %v1281
        %1347 = vst.msk [vmem:[%s216 + $0x18] sm:$0xf] %vm1340, %v1282
        %1348 = vst.msk [vmem:[%s216 + $0x1c] sm:$0xf] %vm1340, %v1283
        %1349 = vst.msk [vmem:[%s216 + $0x20] sm:$0xf] %vm1340, %v1284
        %1350 = vst.msk [vmem:[%s216 + $0x24] sm:$0xf] %vm1340, %v1285
        %1351 = vst.msk [vmem:[%s216 + $0x28] sm:$0xf] %vm1340, %v1286
        %1352 = vst.msk [vmem:[%s216 + $0x2c] sm:$0xf] %vm1340, %v1287
        %1353 = vst.msk [vmem:[%s216 + $0x30] sm:$0xf] %vm1340, %v1288
        %1354 = vst.msk [vmem:[%s216 + $0x34] sm:$0xf] %vm1340, %v1289
        %1355 = vst.msk [vmem:[%s216 + $0x38] sm:$0xf] %vm1340, %v1290
        %1356 = vst.msk [vmem:[%s216 + $0x3c] sm:$0xf] %vm1340, %v1291
        %1357 = vst.msk [vmem:[%s216 + $0x40] sm:$0xf] %vm1340, %v1292
        %1358 = vst.msk [vmem:[%s216 + $0x44] sm:$0xf] %vm1340, %v1293
        %1359 = vst.msk [vmem:[%s216 + $0x48] sm:$0xf] %vm1340, %v1294
        %1360 = vst.msk [vmem:[%s216 + $0x4c] sm:$0xf] %vm1340, %v1295
        %1361 = vst.msk [vmem:[%s216 + $0x50] sm:$0xf] %vm1340, %v1296
        %1362 = vst.msk [vmem:[%s216 + $0x54] sm:$0xf] %vm1340, %v1297
        %1363 = vst.msk [vmem:[%s216 + $0x58] sm:$0xf] %vm1340, %v1298
        %1364 = vst.msk [vmem:[%s216 + $0x5c] sm:$0xf] %vm1340, %v1299
        %1365 = vst.msk [vmem:[%s216 + $0x60] sm:$0xf] %vm1340, %v1300
        %1366 = vst.msk [vmem:[%s216 + $0x64] sm:$0xf] %vm1340, %v1301
        %1367 = vst.msk [vmem:[%s216 + $0x68] sm:$0xf] %vm1340, %v1302
        %1368 = vst.msk [vmem:[%s216 + $0x6c] sm:$0xf] %vm1340, %v1303
        %1369 = vst.msk [vmem:[%s216 + $0x70] sm:$0xf] %vm1340, %v1304
        %1370 = vst.msk [vmem:[%s216 + $0x74] sm:$0xf] %vm1340, %v1305
        %1371 = vst.msk [vmem:[%s216 + $0x78] sm:$0xf] %vm1340, %v1306
        %1372 = vst.msk [vmem:[%s216 + $0x7c] sm:$0xf] %vm1340, %v1307
        %p1373 = scmp.lt.s32.totalorder %s19, 1
        %s1374 = scalar_select %p1373, %s19, 1
        %p1375 = scmp.lt.s32.totalorder %s20, 0
        %s1376 = scalar_select %p1375, %s20, 0
        %s1377 = smul.addr %s1374, 32
        %s1378 = sadd.s32 %s1376, %s1377
        %s1379 = smul.addr %s1378, 4
        %s1380 = scalar_lea.vmem %s3, %s1379
        // Predicated region
        $region37: #{amer_loc_head.3} parent=31 // pred_check
          %p1381 = pneg %p117
        $region38: #{amer_loc_head.3} parent=31 // pred_check_branch
          %1383 = sbr.rel (%p1381) target = $region40
        $region39: #{amer_loc_head.3} parent=31 // pred_region
          _
        $region40: #{amer_loc_head.3} parent=31 // pred_fallthru
          _
      $region32: #{amer_loc_head.3} parent=5 // pred_fallthru
        _
      %p1384 = scmp.le.s32.totalorder 2, %s10
      // Predicated region
      $region41: #{amer_loc_head.3} parent=5 // pred_check
        %p1385 = pneg %p1384
      $region42: #{amer_loc_head.3} parent=5 // pred_check_branch
        %1387 = sbr.rel (%p1385) target = $region44
      $region43: #{amer_loc_head.3} parent=5 // pred_region
        %s1388 = ssub.s32 %s10, 2
        // Predicated region
        $region45: #{amer_loc_head.3} parent=43 // pred_check
          %p1389 = pneg %p123
        $region46: #{amer_loc_head.3} parent=43 // pred_check_branch
          %1391 = sbr.rel (%p1389) target = $region48
        $region47: #{amer_loc_head.3} parent=43 // pred_region
          %p1392 = scmp.lt.s32.totalorder %s21, 1
          %s1393 = scalar_select %p1392, %s21, 1
          %p1394 = scmp.lt.s32.totalorder %s22, 0
          %s1395 = scalar_select %p1394, %s22, 0
          %s1396 = smul.addr %s1393, 32
          %s1397 = sadd.s32 %s1395, %s1396
          %s1398 = smul.addr %s1397, 4
          %s1399 = scalar_lea.vmem %s3, %s1398
        $region48: #{amer_loc_head.3} parent=43 // pred_fallthru
          _
      $region44: #{amer_loc_head.3} parent=5 // pred_fallthru
        _
    $region6: #{amer_loc_head.3} parent=1 // loop_footer
      %s14 = sadd.s32 1, %s10
    $region7: #{amer_loc_head.3} parent=1 // loop_footer_branch
      %9 = sbr.rel target = $region3
    $region8: #{amer_loc_head.3} parent=1 // loop_exit
      _
    %1400 = vsyncpa [#allocation3], 1
    %s1401 = scalar_lea.sflag [#allocation3], 1
    %1402 = vsyncpa %s1401, 1

// kernel: amer_loc_head.5
$region0: #{amer_loc_head.5}
  #allocation0 [shape = 'u32[]', space=smem, size = 0x4, offset = 0x4, fixed_abs, tag = 'smem constant byte address 0x4 - core index']
  #allocation1 [shape = 'u32[144,128]{1,0:T(1,128)}', space=vmem, size = 0x12000, scoped, tag = 'internal scratch']
  %s0 = inlined_call_operand.vmem [shape: bf16[2,16,128,16], index: 0, kind: input, shape index: {}]
  %s1 = inlined_call_operand.vmem [shape: bf16[2,2,128,16], index: 1, kind: input, shape index: {}]
  %s2 = inlined_call_operand.vmem [shape: bf16[64,512], index: 2, kind: input, shape index: {}]
  %s3 = inlined_call_operand.vmem [shape: f32[64,1], index: 3, kind: input, shape index: {}]
  %s4 = inlined_call_operand.vmem [shape: f32[2,16,15], index: 4, kind: output, shape index: {}]
  %s5 = sld [smem:[#allocation0]]
  $region49: #{amer_loc_head.5} parent=0
    _
  %s7 = ssub.s32 1, %s5
  %s8 = scalar_select 0, %s7, %s5
  loop: start=0, step=1, limit=6
  $region2: #{amer_loc_head.5} parent=0 // loop_pre_header
    _
  $region3: #{amer_loc_head.5} parent=0 // loop_header
    %s10 = sphi 0, %s14
    %p11 = scmp.ge.s32.totalorder %s10, 6
    %s17 = sphi 0, %s29
    %s18 = sphi 0, %s25
    %s19 = sphi 0, %s17
    %s20 = sphi 0, %s18
    %s21 = sphi 0, %s19
    %s22 = sphi 0, %s20
    %s34 = sphi 0, %s36
    %s37 = sphi 0, %s34
    %s38 = sphi 0, %s37
    %s54 = sphi 0, %s38
    %s62 = sphi 0, %s64
    %s65 = sphi 0, %s62
    %s66 = sphi 0, %s65
    %s82 = sphi 0, %s66
    %s86 = sphi 0, %s86
    %s88 = sphi 0, %s86
    %s89 = sphi 0, %s88
    %s103 = sphi 0, %s89
    %s107 = sphi 0, %s107
    %s109 = sphi 0, %s107
    %s110 = sphi 0, %s109
    %s124 = sphi 0, %s110
    %s132 = sphi 0, %s134
    %s135 = sphi 0, %s132
    %s136 = sphi 0, %s135
    %s152 = sphi 0, %s136
  $region4: #{amer_loc_head.5} parent=0 // loop_header_branch
    %13 = sbr.rel (%p11) target = $region8
  $region5: #{amer_loc_head.5} parent=0 // loop_body
    %s15 = ssub.s32 %s10, 1
    %s16 = ssub.s32 %s10, 2
    %s23 = sadd.s32 1, %s18
    %p24 = scmp.ge.s32.totalorder %s23, 2
    %s25 = scalar_select %p24, 0, %s23
    %s26 = sadd.s32 1, %s17
    %s27 = scalar_select %p24, %s26, %s17
    %p28 = scmp.ge.s32.totalorder %s27, 2
    %s29 = scalar_select %p28, 0, %s27
    %s30 = ssub.s32 %s17, %s29
    %s31 = ssub.s32 %s18, %s25
    %s32 = sor.u32 %s30, %s31
    %p33 = scmp.eq.s32.totalorder %s32, 0
    %s35 = sadd.s32 %s34, 1
    %s36 = scalar_select %p33, %s34, %s35
    %p39 = pneg %p33
    %p40 = scmp.eq.s32.totalorder %s10, 3
    %p41 = por %p39, %p40
    %p42 = scmp.ne.s32.totalorder %s34, %s37
    %p43 = scmp.eq.s32.totalorder %s10, 0
    %p44 = por %p42, %p43
    %p45 = scmp.ne.s32.totalorder %s34, %s37
    %p46 = scmp.eq.s32.totalorder %s15, 3
    %p47 = por %p45, %p46
    %p48 = scmp.ne.s32.totalorder %s37, %s38
    %p49 = scmp.eq.s32.totalorder %s15, 0
    %p50 = por %p48, %p49
    %p51 = scmp.ne.s32.totalorder %s37, %s38
    %p52 = scmp.eq.s32.totalorder %s16, 3
    %p53 = por %p51, %p52
    %p55 = scmp.ne.s32.totalorder %s38, %s54
    %p56 = scmp.eq.s32.totalorder %s16, 0
    %p57 = por %p55, %p56
    %s58 = ssub.s32 %s17, %s29
    %s59 = ssub.s32 %s18, %s25
    %s60 = sor.u32 %s58, %s59
    %p61 = scmp.eq.s32.totalorder %s60, 0
    %s63 = sadd.s32 %s62, 1
    %s64 = scalar_select %p61, %s62, %s63
    %p67 = pneg %p61
    %p68 = scmp.eq.s32.totalorder %s10, 3
    %p69 = por %p67, %p68
    %p70 = scmp.ne.s32.totalorder %s62, %s65
    %p71 = scmp.eq.s32.totalorder %s10, 0
    %p72 = por %p70, %p71
    %p73 = scmp.ne.s32.totalorder %s62, %s65
    %p74 = scmp.eq.s32.totalorder %s15, 3
    %p75 = por %p73, %p74
    %p76 = scmp.ne.s32.totalorder %s65, %s66
    %p77 = scmp.eq.s32.totalorder %s15, 0
    %p78 = por %p76, %p77
    %p79 = scmp.ne.s32.totalorder %s65, %s66
    %p80 = scmp.eq.s32.totalorder %s16, 3
    %p81 = por %p79, %p80
    %p83 = scmp.ne.s32.totalorder %s66, %s82
    %p84 = scmp.eq.s32.totalorder %s16, 0
    %p85 = por %p83, %p84
    %s87 = sadd.s32 %s86, 1
    %p90 = scmp.eq.s32.totalorder %s10, 3
    %p91 = scmp.ne.s32.totalorder %s86, %s88
    %p92 = scmp.eq.s32.totalorder %s10, 0
    %p93 = por %p91, %p92
    %p94 = scmp.ne.s32.totalorder %s86, %s88
    %p95 = scmp.eq.s32.totalorder %s15, 3
    %p96 = por %p94, %p95
    %p97 = scmp.ne.s32.totalorder %s88, %s89
    %p98 = scmp.eq.s32.totalorder %s15, 0
    %p99 = por %p97, %p98
    %p100 = scmp.ne.s32.totalorder %s88, %s89
    %p101 = scmp.eq.s32.totalorder %s16, 3
    %p102 = por %p100, %p101
    %p104 = scmp.ne.s32.totalorder %s89, %s103
    %p105 = scmp.eq.s32.totalorder %s16, 0
    %p106 = por %p104, %p105
    %s108 = sadd.s32 %s107, 1
    %p111 = scmp.eq.s32.totalorder %s10, 3
    %p112 = scmp.ne.s32.totalorder %s107, %s109
    %p113 = scmp.eq.s32.totalorder %s10, 0
    %p114 = por %p112, %p113
    %p115 = scmp.ne.s32.totalorder %s107, %s109
    %p116 = scmp.eq.s32.totalorder %s15, 3
    %p117 = por %p115, %p116
    %p118 = scmp.ne.s32.totalorder %s109, %s110
    %p119 = scmp.eq.s32.totalorder %s15, 0
    %p120 = por %p118, %p119
    %p121 = scmp.ne.s32.totalorder %s109, %s110
    %p122 = scmp.eq.s32.totalorder %s16, 3
    %p123 = por %p121, %p122
    %p125 = scmp.ne.s32.totalorder %s110, %s124
    %p126 = scmp.eq.s32.totalorder %s16, 0
    %p127 = por %p125, %p126
    %s128 = ssub.s32 %s17, %s29
    %s129 = ssub.s32 %s18, %s25
    %s130 = sor.u32 %s128, %s129
    %p131 = scmp.eq.s32.totalorder %s130, 0
    %s133 = sadd.s32 %s132, 1
    %s134 = scalar_select %p131, %s132, %s133
    %p137 = pneg %p131
    %p138 = scmp.eq.s32.totalorder %s10, 3
    %p139 = por %p137, %p138
    %p140 = scmp.ne.s32.totalorder %s132, %s135
    %p141 = scmp.eq.s32.totalorder %s10, 0
    %p142 = por %p140, %p141
    %p143 = scmp.ne.s32.totalorder %s132, %s135
    %p144 = scmp.eq.s32.totalorder %s15, 3
    %p145 = por %p143, %p144
    %p146 = scmp.ne.s32.totalorder %s135, %s136
    %p147 = scmp.eq.s32.totalorder %s15, 0
    %p148 = por %p146, %p147
    %p149 = scmp.ne.s32.totalorder %s135, %s136
    %p150 = scmp.eq.s32.totalorder %s16, 3
    %p151 = por %p149, %p150
    %p153 = scmp.ne.s32.totalorder %s136, %s152
    %p154 = scmp.eq.s32.totalorder %s16, 0
    %p155 = por %p153, %p154
    %p156 = scmp.le.s32.totalorder 1, %s10
    %p157 = scmp.lt.s32.totalorder %s10, 5
    %p158 = pnand %p156, %p157
    %p159 = pneg %p158
    // Predicated region
    $region9: #{amer_loc_head.5} parent=5 // pred_check
      _
    $region10: #{amer_loc_head.5} parent=5 // pred_check_branch
      %161 = sbr.rel (%p158) target = $region12
    $region11: #{amer_loc_head.5} parent=5 // pred_region
      %s162 = ssub.s32 %s10, 1
      // Predicated region
      $region13: #{amer_loc_head.5} parent=11 // pred_check
        %p163 = pneg %p99
      $region14: #{amer_loc_head.5} parent=11 // pred_check_branch
        %165 = sbr.rel (%p163) target = $region16
      $region15: #{amer_loc_head.5} parent=11 // pred_region
        _
      $region16: #{amer_loc_head.5} parent=11 // pred_fallthru
        _
      // Predicated region
      $region17: #{amer_loc_head.5} parent=11 // pred_check
        %p166 = pneg %p120
      $region18: #{amer_loc_head.5} parent=11 // pred_check_branch
        %168 = sbr.rel (%p166) target = $region20
      $region19: #{amer_loc_head.5} parent=11 // pred_region
        _
      $region20: #{amer_loc_head.5} parent=11 // pred_fallthru
        _
    $region12: #{amer_loc_head.5} parent=5 // pred_fallthru
      _
    %p169 = scmp.lt.s32.totalorder %s10, 4
    // Predicated region
    $region21: #{amer_loc_head.5} parent=5 // pred_check
      %p170 = pneg %p169
    $region22: #{amer_loc_head.5} parent=5 // pred_check_branch
      %172 = sbr.rel (%p170) target = $region24
    $region23: #{amer_loc_head.5} parent=5 // pred_region
      // Predicated region
      $region25: #{amer_loc_head.5} parent=23 // pred_check
        %p173 = pneg %p44
      $region26: #{amer_loc_head.5} parent=23 // pred_check_branch
        %175 = sbr.rel (%p173) target = $region28
      $region27: #{amer_loc_head.5} parent=23 // pred_region
        %s176 = smul.u32 8, %s18
        %p177 = scmp.lt.s32.totalorder %s17, 1
        %s178 = scalar_select %p177, %s17, 1
        %p179 = scmp.lt.s32.totalorder %s176, 15
        %s180 = scalar_select %p179, %s176, 15
        %s181 = smul.addr %s180, 16
        %s182 = smul.addr %s178, 256
        %s183 = sadd.s32 %s181, %s182
        %s184 = smul.addr %s183, 4
        %s185 = scalar_lea.vmem %s0, %s184
        %s186 = smul.u32 8, %s18
      $region28: #{amer_loc_head.5} parent=23 // pred_fallthru
        _
      // Predicated region
      $region29: #{amer_loc_head.5} parent=23 // pred_check
        %p187 = pneg %p72
      $region30: #{amer_loc_head.5} parent=23 // pred_check_branch
        %189 = sbr.rel (%p187) target = $region32
      $region31: #{amer_loc_head.5} parent=23 // pred_region
        %p190 = scmp.lt.s32.totalorder %s17, 1
        %s191 = scalar_select %p190, %s17, 1
        %p192 = scmp.lt.s32.totalorder %s18, 1
        %s193 = scalar_select %p192, %s18, 1
        %s194 = smul.addr %s193, 16
        %s195 = smul.addr %s191, 32
        %s196 = sadd.s32 %s194, %s195
        %s197 = smul.addr %s196, 4
        %s198 = scalar_lea.vmem %s1, %s197
      $region32: #{amer_loc_head.5} parent=23 // pred_fallthru
        _
    $region24: #{amer_loc_head.5} parent=5 // pred_fallthru
      _
    %p199 = scmp.le.s32.totalorder 1, %s10
    %p200 = scmp.lt.s32.totalorder %s10, 5
    %p201 = pnand %p199, %p200
    %p202 = pneg %p201
    // Predicated region
    $region33: #{amer_loc_head.5} parent=5 // pred_check
      _
    $region34: #{amer_loc_head.5} parent=5 // pred_check_branch
      %204 = sbr.rel (%p201) target = $region36
    $region35: #{amer_loc_head.5} parent=5 // pred_region
      %s205 = ssub.s32 %s10, 1
      %s206 = smul.u32 8, %s20
      %p207 = scmp.lt.s32.totalorder %s19, 1
      %s208 = scalar_select %p207, %s19, 1
      %p209 = scmp.lt.s32.totalorder %s206, 15
      %s210 = scalar_select %p209, %s206, 15
      %s211 = smul.addr %s210, 16
      %s212 = smul.addr %s208, 256
      %s213 = sadd.s32 %s211, %s212
      %s214 = smul.addr %s213, 4
      %s215 = scalar_lea.vmem %s0, %s214
      %p216 = pneg %p50
      %p217 = pneg %p47
      %p218 = scmp.lt.s32.totalorder %s19, 1
      %s219 = scalar_select %p218, %s19, 1
      %p220 = scmp.lt.s32.totalorder %s20, 1
      %s221 = scalar_select %p220, %s20, 1
      %s222 = smul.addr %s221, 16
      %s223 = smul.addr %s219, 32
      %s224 = sadd.s32 %s222, %s223
      %s225 = smul.addr %s224, 4
      %s226 = scalar_lea.vmem %s1, %s225
      %p227 = pneg %p78
      %p228 = pneg %p75
      %p229 = pneg %p99
      %p230 = pneg %p96
      %p231 = pneg %p120
      %p232 = pneg %p117
      %p233 = pneg %p148
      %p234 = pneg %p145
      %p235 = scmp.lt.s32.totalorder %s19, 1
      %s236 = scalar_select %p235, %s19, 1
      %p237 = scmp.lt.s32.totalorder %s20, 1
      %s238 = scalar_select %p237, %s20, 1
      %s239 = smul.addr %s236, 2
      %s240 = sadd.s32 %s238, %s239
      %s241 = smul.addr %s240, 8
      %s242 = scalar_lea.vmem %s4, %s241
      %s243 = smul.u32 8, %s20
      %p244 = scmp.lt.s32.totalorder %s19, 1
      %s245 = scalar_select %p244, %s19, 1
      %p246 = scmp.lt.s32.totalorder %s243, 15
      %s247 = scalar_select %p246, %s243, 15
      %s248 = smul.addr %s247, 16
      %s249 = smul.addr %s245, 256
      %s250 = sadd.s32 %s248, %s249
      %s251 = smul.addr %s250, 4
      %s252 = scalar_lea.vmem %s0, %s251
      %s253 = smul.u32 8, %s20
      %p254 = scmp.lt.s32.totalorder %s19, 1
      %s255 = scalar_select %p254, %s19, 1
      %p256 = scmp.lt.s32.totalorder %s20, 1
      %s257 = scalar_select %p256, %s20, 1
      %s258 = smul.addr %s257, 16
      %s259 = smul.addr %s255, 32
      %s260 = sadd.s32 %s258, %s259
      %s261 = smul.addr %s260, 4
      %s262 = scalar_lea.vmem %s1, %s261
      %p263 = scmp.lt.s32.totalorder %s19, 1
      %s264 = scalar_select %p263, %s19, 1
      %p265 = scmp.lt.s32.totalorder %s20, 1
      %s266 = scalar_select %p265, %s20, 1
      %s267 = smul.addr %s264, 2
      %s268 = sadd.s32 %s266, %s267
      %s269 = smul.addr %s268, 8
      %s270 = scalar_lea.vmem %s4, %s269
      %v272 = vld [vmem:[%s252] sm:$0xf]
      %v273 = vld [vmem:[%s252 + $0x4] sm:$0xf]
      %v274 = vld [vmem:[%s252 + $0x8] sm:$0xf]
      %v275 = vld [vmem:[%s252 + $0xc] sm:$0xf]
      %v276 = vld [vmem:[%s252 + $0x10] sm:$0xf]
      %v277 = vld [vmem:[%s252 + $0x14] sm:$0xf]
      %v278 = vld [vmem:[%s252 + $0x18] sm:$0xf]
      %v279 = vld [vmem:[%s252 + $0x1c] sm:$0xf]
      %v280 = vld [vmem:[%s252 + $0x20] sm:$0xf]
      %v281 = vld [vmem:[%s252 + $0x24] sm:$0xf]
      %v282 = vld [vmem:[%s252 + $0x28] sm:$0xf]
      %v283 = vld [vmem:[%s252 + $0x2c] sm:$0xf]
      %v284 = vld [vmem:[%s252 + $0x30] sm:$0xf]
      %v285 = vld [vmem:[%s252 + $0x34] sm:$0xf]
      %v286 = vld [vmem:[%s252 + $0x38] sm:$0xf]
      %v287 = vld [vmem:[%s252 + $0x3c] sm:$0xf]
      %s288 = scalar_lea.vmem %s252, 64
      %v289 = vld [vmem:[%s288] sm:$0xf]
      %v290 = vld [vmem:[%s288 + $0x4] sm:$0xf]
      %v291 = vld [vmem:[%s288 + $0x8] sm:$0xf]
      %v292 = vld [vmem:[%s288 + $0xc] sm:$0xf]
      %v293 = vld [vmem:[%s288 + $0x10] sm:$0xf]
      %v294 = vld [vmem:[%s288 + $0x14] sm:$0xf]
      %v295 = vld [vmem:[%s288 + $0x18] sm:$0xf]
      %v296 = vld [vmem:[%s288 + $0x1c] sm:$0xf]
      %v297 = vld [vmem:[%s288 + $0x20] sm:$0xf]
      %v298 = vld [vmem:[%s288 + $0x24] sm:$0xf]
      %v299 = vld [vmem:[%s288 + $0x28] sm:$0xf]
      %v300 = vld [vmem:[%s288 + $0x2c] sm:$0xf]
      %v301 = vld [vmem:[%s288 + $0x30] sm:$0xf]
      %v302 = vld [vmem:[%s288 + $0x34] sm:$0xf]
      %v303 = vld [vmem:[%s288 + $0x38] sm:$0xf]
      %v304 = vld [vmem:[%s288 + $0x3c] sm:$0xf]
      %v321 = vunpack.c.l.b16 %v272
      %v322 = vunpack.c.l.b16 %v273
      %v323 = vunpack.c.l.b16 %v274
      %v324 = vunpack.c.l.b16 %v275
      %v325 = vunpack.c.l.b16 %v276
      %v326 = vunpack.c.l.b16 %v277
      %v327 = vunpack.c.l.b16 %v278
      %v328 = vunpack.c.l.b16 %v279
      %v329 = vunpack.c.l.b16 %v280
      %v330 = vunpack.c.l.b16 %v281
      %v331 = vunpack.c.l.b16 %v282
      %v332 = vunpack.c.l.b16 %v283
      %v333 = vunpack.c.l.b16 %v284
      %v334 = vunpack.c.l.b16 %v285
      %v335 = vunpack.c.l.b16 %v286
      %v336 = vunpack.c.l.b16 %v287
      %v337 = vpack.c.b16 %v322, %v321
      %v338 = vpack.c.b16 %v324, %v323
      %v339 = vpack.c.b16 %v326, %v325
      %v340 = vpack.c.b16 %v328, %v327
      %v341 = vpack.c.b16 %v330, %v329
      %v342 = vpack.c.b16 %v332, %v331
      %v343 = vpack.c.b16 %v334, %v333
      %v344 = vpack.c.b16 %v336, %v335
      %353 = vrot.lane.b32.xlu0 %v337, 127
      %v354 = vpop.permute.xlu0 %353
      %355 = vrot.lane.b32.xlu0 %v338, 127
      %v356 = vpop.permute.xlu0 %355
      %357 = vrot.lane.b32.xlu0 %v339, 127
      %v358 = vpop.permute.xlu0 %357
      %359 = vrot.lane.b32.xlu0 %v340, 127
      %v360 = vpop.permute.xlu0 %359
      %361 = vrot.lane.b32.xlu0 %v341, 127
      %v362 = vpop.permute.xlu0 %361
      %363 = vrot.lane.b32.xlu0 %v342, 127
      %v364 = vpop.permute.xlu0 %363
      %365 = vrot.lane.b32.xlu0 %v343, 127
      %v366 = vpop.permute.xlu0 %365
      %367 = vrot.lane.b32.xlu0 %v344, 127
      %v368 = vpop.permute.xlu0 %367
      %v393 = vunpack.c.l.b16 %v289
      %v394 = vunpack.c.l.b16 %v290
      %v395 = vunpack.c.l.b16 %v291
      %v396 = vunpack.c.l.b16 %v292
      %v397 = vunpack.c.l.b16 %v293
      %v398 = vunpack.c.l.b16 %v294
      %v399 = vunpack.c.l.b16 %v295
      %v400 = vunpack.c.l.b16 %v296
      %v401 = vunpack.c.l.b16 %v297
      %v402 = vunpack.c.l.b16 %v298
      %v403 = vunpack.c.l.b16 %v299
      %v404 = vunpack.c.l.b16 %v300
      %v405 = vunpack.c.l.b16 %v301
      %v406 = vunpack.c.l.b16 %v302
      %v407 = vunpack.c.l.b16 %v303
      %v408 = vunpack.c.l.b16 %v304
      %v409 = vpack.c.b16 %v394, %v393
      %v410 = vpack.c.b16 %v396, %v395
      %v411 = vpack.c.b16 %v398, %v397
      %v412 = vpack.c.b16 %v400, %v399
      %v413 = vpack.c.b16 %v402, %v401
      %v414 = vpack.c.b16 %v404, %v403
      %v415 = vpack.c.b16 %v406, %v405
      %v416 = vpack.c.b16 %v408, %v407
      %425 = vrot.lane.b32.xlu0 %v409, 127
      %v426 = vpop.permute.xlu0 %425
      %427 = vrot.lane.b32.xlu0 %v410, 127
      %v428 = vpop.permute.xlu0 %427
      %429 = vrot.lane.b32.xlu0 %v411, 127
      %v430 = vpop.permute.xlu0 %429
      %431 = vrot.lane.b32.xlu0 %v412, 127
      %v432 = vpop.permute.xlu0 %431
      %433 = vrot.lane.b32.xlu0 %v413, 127
      %v434 = vpop.permute.xlu0 %433
      %435 = vrot.lane.b32.xlu0 %v414, 127
      %v436 = vpop.permute.xlu0 %435
      %437 = vrot.lane.b32.xlu0 %v415, 127
      %v438 = vpop.permute.xlu0 %437
      %439 = vrot.lane.b32.xlu0 %v416, 127
      %v440 = vpop.permute.xlu0 %439
      %v449 = vld [vmem:[%s2] sm:$0xff]
      %v450 = vld [vmem:[%s2 + $0x8] sm:$0xff]
      %v451 = vld [vmem:[%s2 + $0x10] sm:$0xff]
      %v452 = vld [vmem:[%s2 + $0x18] sm:$0xff]
      %v453 = vld [vmem:[%s2 + $0x20] sm:$0xff]
      %v454 = vld [vmem:[%s2 + $0x28] sm:$0xff]
      %v455 = vld [vmem:[%s2 + $0x30] sm:$0xff]
      %v456 = vld [vmem:[%s2 + $0x38] sm:$0xff]
      %v457 = vld [vmem:[%s2 + $0x40] sm:$0xff]
      %v458 = vld [vmem:[%s2 + $0x48] sm:$0xff]
      %v459 = vld [vmem:[%s2 + $0x50] sm:$0xff]
      %v460 = vld [vmem:[%s2 + $0x58] sm:$0xff]
      %v461 = vld [vmem:[%s2 + $0x60] sm:$0xff]
      %v462 = vld [vmem:[%s2 + $0x68] sm:$0xff]
      %v463 = vld [vmem:[%s2 + $0x70] sm:$0xff]
      %v464 = vld [vmem:[%s2 + $0x78] sm:$0xff]
      %v465 = vld [vmem:[%s3] sm:$0xff]
      %v466 = vld [vmem:[%s3 + $0x8] sm:$0xff]
      %v467 = vld [vmem:[%s3 + $0x10] sm:$0xff]
      %v468 = vld [vmem:[%s3 + $0x18] sm:$0xff]
      %v469 = vld [vmem:[%s3 + $0x20] sm:$0xff]
      %v470 = vld [vmem:[%s3 + $0x28] sm:$0xff]
      %v471 = vld [vmem:[%s3 + $0x30] sm:$0xff]
      %v472 = vld [vmem:[%s3 + $0x38] sm:$0xff]
      %474 = vset.pattern.permute.xlu0 0
      %475 = vperm.xlu0 %474, %v465
      %v476 = vpop.permute.xlu0 %475
      %479 = vset.pattern.permute.xlu0 0
      %480 = vperm.xlu0 %479, %v466
      %v481 = vpop.permute.xlu0 %480
      %484 = vset.pattern.permute.xlu0 0
      %485 = vperm.xlu0 %484, %v467
      %v486 = vpop.permute.xlu0 %485
      %489 = vset.pattern.permute.xlu0 0
      %490 = vperm.xlu0 %489, %v468
      %v491 = vpop.permute.xlu0 %490
      %494 = vset.pattern.permute.xlu0 0
      %495 = vperm.xlu0 %494, %v469
      %v496 = vpop.permute.xlu0 %495
      %499 = vset.pattern.permute.xlu0 0
      %500 = vperm.xlu0 %499, %v470
      %v501 = vpop.permute.xlu0 %500
      %504 = vset.pattern.permute.xlu0 0
      %505 = vperm.xlu0 %504, %v471
      %v506 = vpop.permute.xlu0 %505
      %509 = vset.pattern.permute.xlu0 0
      %510 = vperm.xlu0 %509, %v472
      %v511 = vpop.permute.xlu0 %510
      %v529 = vunpack.c.l.b16 %v449
      %v530 = vunpack.c.h.b16 %v449
      %v531 = vunpack.c.l.b16 %v450
      %v532 = vunpack.c.h.b16 %v450
      %v533 = vunpack.c.l.b16 %v451
      %v534 = vunpack.c.h.b16 %v451
      %v535 = vunpack.c.l.b16 %v452
      %v536 = vunpack.c.h.b16 %v452
      %v537 = vunpack.c.l.b16 %v453
      %v538 = vunpack.c.h.b16 %v453
      %v539 = vunpack.c.l.b16 %v454
      %v540 = vunpack.c.h.b16 %v454
      %v541 = vunpack.c.l.b16 %v455
      %v542 = vunpack.c.h.b16 %v455
      %v543 = vunpack.c.l.b16 %v456
      %v544 = vunpack.c.h.b16 %v456
      %v545 = vunpack.c.l.b16 %v457
      %v546 = vunpack.c.h.b16 %v457
      %v547 = vunpack.c.l.b16 %v458
      %v548 = vunpack.c.h.b16 %v458
      %v549 = vunpack.c.l.b16 %v459
      %v550 = vunpack.c.h.b16 %v459
      %v551 = vunpack.c.l.b16 %v460
      %v552 = vunpack.c.h.b16 %v460
      %v553 = vunpack.c.l.b16 %v461
      %v554 = vunpack.c.h.b16 %v461
      %v555 = vunpack.c.l.b16 %v462
      %v556 = vunpack.c.h.b16 %v462
      %v557 = vunpack.c.l.b16 %v463
      %v558 = vunpack.c.h.b16 %v463
      %v559 = vunpack.c.l.b16 %v464
      %v560 = vunpack.c.h.b16 %v464
      %v561 = vpack.c.b16 %v533, %v529
      %v562 = vpack.c.b16 %v534, %v530
      %v563 = vpack.c.b16 %v535, %v531
      %v564 = vpack.c.b16 %v536, %v532
      %v565 = vpack.c.b16 %v541, %v537
      %v566 = vpack.c.b16 %v542, %v538
      %v567 = vpack.c.b16 %v543, %v539
      %v568 = vpack.c.b16 %v544, %v540
      %v569 = vpack.c.b16 %v549, %v545
      %v570 = vpack.c.b16 %v550, %v546
      %v571 = vpack.c.b16 %v551, %v547
      %v572 = vpack.c.b16 %v552, %v548
      %v573 = vpack.c.b16 %v557, %v553
      %v574 = vpack.c.b16 %v558, %v554
      %v575 = vpack.c.b16 %v559, %v555
      %v576 = vpack.c.b16 %v560, %v556
      %593 = vmatprep.subr.bf16.mxu0 0
      %594 = vmatpush1.bf16.msra.mxu0 %v337
      %595 = vmatprep.subr.bf16.mxu0 0
      %596 = vmatpush1.bf16.msra.mxu0 %v338
      %597 = vmatprep.subr.bf16.mxu0 0
      %598 = vmatpush1.bf16.msra.mxu0 %v339
      %599 = vmatprep.subr.bf16.mxu0 0
      %600 = vmatpush1.bf16.msra.mxu0 %v340
      %601 = vmatprep.subr.bf16.mxu0 0
      %602 = vmatpush1.bf16.msra.mxu0 %v341
      %603 = vmatprep.subr.bf16.mxu0 0
      %604 = vmatpush1.bf16.msra.mxu0 %v342
      %605 = vmatprep.subr.bf16.mxu0 0
      %606 = vmatpush1.bf16.msra.mxu0 %v343
      %607 = vmatprep.subr.bf16.mxu0 0
      %608 = vmatpush1.bf16.msra.mxu0 %v344
      %609 = vmatprep.subr.bf16.mxu0 0
      %610 = vmatpush1.bf16.msra.mxu0 %v354
      %611 = vmatprep.subr.bf16.mxu0 0
      %612 = vmatpush1.bf16.msra.mxu0 %v356
      %613 = vmatprep.subr.bf16.mxu0 0
      %614 = vmatpush1.bf16.msra.mxu0 %v358
      %615 = vmatprep.subr.bf16.mxu0 0
      %616 = vmatpush1.bf16.msra.mxu0 %v360
      %617 = vmatprep.subr.bf16.mxu0 0
      %618 = vmatpush1.bf16.msra.mxu0 %v362
      %619 = vmatprep.subr.bf16.mxu0 0
      %620 = vmatpush1.bf16.msra.mxu0 %v364
      %621 = vmatprep.subr.bf16.mxu0 0
      %622 = vmatpush1.bf16.msra.mxu0 %v366
      %623 = vmatprep.subr.bf16.mxu0 0
      %624 = vmatpush1.bf16.msra.mxu0 %v368
      %625 = vmatprep.mubr.bf16.mxu0 %v562
      %626 = vmatmul.mubr.bf16.gmra.mrb[0].mxu0 %v561
      %v627 = vpop.f32.mrb[0].mxu0
      %v628 = vadd.f32 %v476, %v627
      %v629 = vpop.f32.mrb[0].mxu0
      %v630 = vpop.f32.mrb[0].mxu0
      %v631 = vadd.f32 %v481, %v630
      %v632 = vpop.f32.mrb[0].mxu0
      %633 = vmatprep.mubr.bf16.mxu0 %v566
      %634 = vmatmul.mubr.bf16.gmra.mrb[0].mxu0 %v565
      %v635 = vpop.f32.mrb[0].mxu0
      %v636 = vadd.f32 %v486, %v635
      %v637 = vpop.f32.mrb[0].mxu0
      %v638 = vpop.f32.mrb[0].mxu0
      %v639 = vadd.f32 %v491, %v638
      %v640 = vpop.f32.mrb[0].mxu0
      %641 = vmatprep.mubr.bf16.mxu0 %v570
      %642 = vmatmul.mubr.bf16.gmra.mrb[0].mxu0 %v569
      %v643 = vpop.f32.mrb[0].mxu0
      %v644 = vadd.f32 %v496, %v643
      %v645 = vpop.f32.mrb[0].mxu0
      %v646 = vpop.f32.mrb[0].mxu0
      %v647 = vadd.f32 %v501, %v646
      %v648 = vpop.f32.mrb[0].mxu0
      %649 = vmatprep.mubr.bf16.mxu0 %v574
      %650 = vmatmul.mubr.bf16.gmra.mrb[0].mxu0 %v573
      %v651 = vpop.f32.mrb[0].mxu0
      %v652 = vadd.f32 %v506, %v651
      %v653 = vpop.f32.mrb[0].mxu0
      %v654 = vpop.f32.mrb[0].mxu0
      %v655 = vadd.f32 %v511, %v654
      %v656 = vpop.f32.mrb[0].mxu0
      %657 = vdwg.mxu0
      %658 = vmatprep.subr.bf16.mxu0 0
      %659 = vmatpush1.bf16.msra.mxu0 %v409
      %660 = vmatprep.subr.bf16.mxu0 0
      %661 = vmatpush1.bf16.msra.mxu0 %v410
      %662 = vmatprep.subr.bf16.mxu0 0
      %663 = vmatpush1.bf16.msra.mxu0 %v411
      %664 = vmatprep.subr.bf16.mxu0 0
      %665 = vmatpush1.bf16.msra.mxu0 %v412
      %666 = vmatprep.subr.bf16.mxu0 0
      %667 = vmatpush1.bf16.msra.mxu0 %v413
      %668 = vmatprep.subr.bf16.mxu0 0
      %669 = vmatpush1.bf16.msra.mxu0 %v414
      %670 = vmatprep.subr.bf16.mxu0 0
      %671 = vmatpush1.bf16.msra.mxu0 %v415
      %672 = vmatprep.subr.bf16.mxu0 0
      %673 = vmatpush1.bf16.msra.mxu0 %v416
      %674 = vmatprep.subr.bf16.mxu0 0
      %675 = vmatpush1.bf16.msra.mxu0 %v426
      %676 = vmatprep.subr.bf16.mxu0 0
      %677 = vmatpush1.bf16.msra.mxu0 %v428
      %678 = vmatprep.subr.bf16.mxu0 0
      %679 = vmatpush1.bf16.msra.mxu0 %v430
      %680 = vmatprep.subr.bf16.mxu0 0
      %681 = vmatpush1.bf16.msra.mxu0 %v432
      %682 = vmatprep.subr.bf16.mxu0 0
      %683 = vmatpush1.bf16.msra.mxu0 %v434
      %684 = vmatprep.subr.bf16.mxu0 0
      %685 = vmatpush1.bf16.msra.mxu0 %v436
      %686 = vmatprep.subr.bf16.mxu0 0
      %687 = vmatpush1.bf16.msra.mxu0 %v438
      %688 = vmatprep.subr.bf16.mxu0 0
      %689 = vmatpush1.bf16.msra.mxu0 %v440
      %690 = vmatprep.mubr.bf16.mxu0 %v564
      %691 = vmatmul.mubr.bf16.gmra.mrb[0].mxu0 %v563
      %v692 = vpop.f32.mrb[0].mxu0
      %v693 = vadd.f32 %v628, %v692
      %v694 = vpop.f32.mrb[0].mxu0
      %v695 = vpop.f32.mrb[0].mxu0
      %v696 = vadd.f32 %v631, %v695
      %v697 = vpop.f32.mrb[0].mxu0
      %698 = vmatprep.mubr.bf16.mxu0 %v568
      %699 = vmatmul.mubr.bf16.gmra.mrb[0].mxu0 %v567
      %v700 = vpop.f32.mrb[0].mxu0
      %v701 = vadd.f32 %v636, %v700
      %v702 = vpop.f32.mrb[0].mxu0
      %v703 = vpop.f32.mrb[0].mxu0
      %v704 = vadd.f32 %v639, %v703
      %v705 = vpop.f32.mrb[0].mxu0
      %706 = vmatprep.mubr.bf16.mxu0 %v572
      %707 = vmatmul.mubr.bf16.gmra.mrb[0].mxu0 %v571
      %v708 = vpop.f32.mrb[0].mxu0
      %v709 = vadd.f32 %v644, %v708
      %v710 = vpop.f32.mrb[0].mxu0
      %v711 = vpop.f32.mrb[0].mxu0
      %v712 = vadd.f32 %v647, %v711
      %v713 = vpop.f32.mrb[0].mxu0
      %714 = vmatprep.mubr.bf16.mxu0 %v576
      %715 = vmatmul.mubr.bf16.gmra.mrb[0].mxu0 %v575
      %v716 = vpop.f32.mrb[0].mxu0
      %v717 = vadd.f32 %v652, %v716
      %v718 = vpop.f32.mrb[0].mxu0
      %v719 = vpop.f32.mrb[0].mxu0
      %v720 = vadd.f32 %v655, %v719
      %v721 = vpop.f32.mrb[0].mxu0
      %722 = vdwg.mxu0
      %v723 = vmax.f32 %v693, 0.0
      %v724 = vmax.f32 %v696, 0.0
      %v725 = vmax.f32 %v701, 0.0
      %v726 = vmax.f32 %v704, 0.0
      %v727 = vmax.f32 %v709, 0.0
      %v728 = vmax.f32 %v712, 0.0
      %v729 = vmax.f32 %v717, 0.0
      %v730 = vmax.f32 %v720, 0.0
      %vm731 = vcmask 121856
      %v732 = vsel %vm731, %v723, -inf
      %v733 = vsel %vm731, %v724, -inf
      %v734 = vsel %vm731, %v725, -inf
      %v735 = vsel %vm731, %v726, -inf
      %v736 = vsel %vm731, %v727, -inf
      %v737 = vmax.f32 %v732, %v736
      %v738 = vsel %vm731, %v728, -inf
      %v739 = vmax.f32 %v733, %v738
      %v740 = vsel %vm731, %v729, -inf
      %v741 = vmax.f32 %v734, %v740
      %v742 = vsel %vm731, %v730, -inf
      %v743 = vmax.f32 %v735, %v742
      %v744 = vmax.f32 %v737, %v739
      %v745 = vmax.f32 %v741, %v743
      %v746 = vmax.f32 %v744, %v745
      %v747 = vrot.slane %v746, 4
      %v748 = vmax.f32 %v746, %v747
      %v749 = vrot.slane %v748, 2
      %v750 = vmax.f32 %v748, %v749
      %v751 = vrot.slane %v750, 1
      %v752 = vmax.f32 %v750, %v751
      %vm753 = vcmask 114688
      %754 = vst.msk [vmem:[%s270] sm:$0x1] %vm753, %v752
      %v755 = vld [vmem:[%s288] sm:$0xf]
      %v756 = vld [vmem:[%s288 + $0x4] sm:$0xf]
      %v757 = vld [vmem:[%s288 + $0x8] sm:$0xf]
      %v758 = vld [vmem:[%s288 + $0xc] sm:$0xf]
      %v759 = vld [vmem:[%s288 + $0x10] sm:$0xf]
      %v760 = vld [vmem:[%s288 + $0x14] sm:$0xf]
      %v761 = vld [vmem:[%s288 + $0x18] sm:$0xf]
      %v762 = vld [vmem:[%s288 + $0x1c] sm:$0xf]
      %v763 = vld [vmem:[%s288 + $0x20] sm:$0xf]
      %v764 = vld [vmem:[%s288 + $0x24] sm:$0xf]
      %v765 = vld [vmem:[%s288 + $0x28] sm:$0xf]
      %v766 = vld [vmem:[%s288 + $0x2c] sm:$0xf]
      %v767 = vld [vmem:[%s288 + $0x30] sm:$0xf]
      %v768 = vld [vmem:[%s288 + $0x34] sm:$0xf]
      %v769 = vld [vmem:[%s288 + $0x38] sm:$0xf]
      %v770 = vld [vmem:[%s288 + $0x3c] sm:$0xf]
      %s771 = scalar_lea.vmem %s252, 128
      %v772 = vld [vmem:[%s771] sm:$0xf]
      %v773 = vld [vmem:[%s771 + $0x4] sm:$0xf]
      %v774 = vld [vmem:[%s771 + $0x8] sm:$0xf]
      %v775 = vld [vmem:[%s771 + $0xc] sm:$0xf]
      %v776 = vld [vmem:[%s771 + $0x10] sm:$0xf]
      %v777 = vld [vmem:[%s771 + $0x14] sm:$0xf]
      %v778 = vld [vmem:[%s771 + $0x18] sm:$0xf]
      %v779 = vld [vmem:[%s771 + $0x1c] sm:$0xf]
      %v780 = vld [vmem:[%s771 + $0x20] sm:$0xf]
      %v781 = vld [vmem:[%s771 + $0x24] sm:$0xf]
      %v782 = vld [vmem:[%s771 + $0x28] sm:$0xf]
      %v783 = vld [vmem:[%s771 + $0x2c] sm:$0xf]
      %v784 = vld [vmem:[%s771 + $0x30] sm:$0xf]
      %v785 = vld [vmem:[%s771 + $0x34] sm:$0xf]
      %v786 = vld [vmem:[%s771 + $0x38] sm:$0xf]
      %v787 = vld [vmem:[%s771 + $0x3c] sm:$0xf]
      %v804 = vunpack.c.l.b16 %v755
      %v805 = vunpack.c.l.b16 %v756
      %v806 = vunpack.c.l.b16 %v757
      %v807 = vunpack.c.l.b16 %v758
      %v808 = vunpack.c.l.b16 %v759
      %v809 = vunpack.c.l.b16 %v760
      %v810 = vunpack.c.l.b16 %v761
      %v811 = vunpack.c.l.b16 %v762
      %v812 = vunpack.c.l.b16 %v763
      %v813 = vunpack.c.l.b16 %v764
      %v814 = vunpack.c.l.b16 %v765
      %v815 = vunpack.c.l.b16 %v766
      %v816 = vunpack.c.l.b16 %v767
      %v817 = vunpack.c.l.b16 %v768
      %v818 = vunpack.c.l.b16 %v769
      %v819 = vunpack.c.l.b16 %v770
      %v820 = vpack.c.b16 %v805, %v804
      %v821 = vpack.c.b16 %v807, %v806
      %v822 = vpack.c.b16 %v809, %v808
      %v823 = vpack.c.b16 %v811, %v810
      %v824 = vpack.c.b16 %v813, %v812
      %v825 = vpack.c.b16 %v815, %v814
      %v826 = vpack.c.b16 %v817, %v816
      %v827 = vpack.c.b16 %v819, %v818
      %836 = vrot.lane.b32.xlu0 %v820, 127
      %v837 = vpop.permute.xlu0 %836
      %838 = vrot.lane.b32.xlu0 %v821, 127
      %v839 = vpop.permute.xlu0 %838
      %840 = vrot.lane.b32.xlu0 %v822, 127
      %v841 = vpop.permute.xlu0 %840
      %842 = vrot.lane.b32.xlu0 %v823, 127
      %v843 = vpop.permute.xlu0 %842
      %844 = vrot.lane.b32.xlu0 %v824, 127
      %v845 = vpop.permute.xlu0 %844
      %846 = vrot.lane.b32.xlu0 %v825, 127
      %v847 = vpop.permute.xlu0 %846
      %848 = vrot.lane.b32.xlu0 %v826, 127
      %v849 = vpop.permute.xlu0 %848
      %850 = vrot.lane.b32.xlu0 %v827, 127
      %v851 = vpop.permute.xlu0 %850
      %v876 = vunpack.c.l.b16 %v772
      %v877 = vunpack.c.l.b16 %v773
      %v878 = vunpack.c.l.b16 %v774
      %v879 = vunpack.c.l.b16 %v775
      %v880 = vunpack.c.l.b16 %v776
      %v881 = vunpack.c.l.b16 %v777
      %v882 = vunpack.c.l.b16 %v778
      %v883 = vunpack.c.l.b16 %v779
      %v884 = vunpack.c.l.b16 %v780
      %v885 = vunpack.c.l.b16 %v781
      %v886 = vunpack.c.l.b16 %v782
      %v887 = vunpack.c.l.b16 %v783
      %v888 = vunpack.c.l.b16 %v784
      %v889 = vunpack.c.l.b16 %v785
      %v890 = vunpack.c.l.b16 %v786
      %v891 = vunpack.c.l.b16 %v787
      %v892 = vpack.c.b16 %v877, %v876
      %v893 = vpack.c.b16 %v879, %v878
      %v894 = vpack.c.b16 %v881, %v880
      %v895 = vpack.c.b16 %v883, %v882
      %v896 = vpack.c.b16 %v885, %v884
      %v897 = vpack.c.b16 %v887, %v886
      %v898 = vpack.c.b16 %v889, %v888
      %v899 = vpack.c.b16 %v891, %v890
      %908 = vrot.lane.b32.xlu0 %v892, 127
      %v909 = vpop.permute.xlu0 %908
      %910 = vrot.lane.b32.xlu0 %v893, 127
      %v911 = vpop.permute.xlu0 %910
      %912 = vrot.lane.b32.xlu0 %v894, 127
      %v913 = vpop.permute.xlu0 %912
      %914 = vrot.lane.b32.xlu0 %v895, 127
      %v915 = vpop.permute.xlu0 %914
      %916 = vrot.lane.b32.xlu0 %v896, 127
      %v917 = vpop.permute.xlu0 %916
      %918 = vrot.lane.b32.xlu0 %v897, 127
      %v919 = vpop.permute.xlu0 %918
      %920 = vrot.lane.b32.xlu0 %v898, 127
      %v921 = vpop.permute.xlu0 %920
      %922 = vrot.lane.b32.xlu0 %v899, 127
      %v923 = vpop.permute.xlu0 %922
      %v932 = vld [vmem:[%s2] sm:$0xff]
      %v933 = vld [vmem:[%s2 + $0x8] sm:$0xff]
      %v934 = vld [vmem:[%s2 + $0x10] sm:$0xff]
      %v935 = vld [vmem:[%s2 + $0x18] sm:$0xff]
      %v936 = vld [vmem:[%s2 + $0x20] sm:$0xff]
      %v937 = vld [vmem:[%s2 + $0x28] sm:$0xff]
      %v938 = vld [vmem:[%s2 + $0x30] sm:$0xff]
      %v939 = vld [vmem:[%s2 + $0x38] sm:$0xff]
      %v940 = vld [vmem:[%s2 + $0x40] sm:$0xff]
      %v941 = vld [vmem:[%s2 + $0x48] sm:$0xff]
      %v942 = vld [vmem:[%s2 + $0x50] sm:$0xff]
      %v943 = vld [vmem:[%s2 + $0x58] sm:$0xff]
      %v944 = vld [vmem:[%s2 + $0x60] sm:$0xff]
      %v945 = vld [vmem:[%s2 + $0x68] sm:$0xff]
      %v946 = vld [vmem:[%s2 + $0x70] sm:$0xff]
      %v947 = vld [vmem:[%s2 + $0x78] sm:$0xff]
      %v948 = vld [vmem:[%s3] sm:$0xff]
      %v949 = vld [vmem:[%s3 + $0x8] sm:$0xff]
      %v950 = vld [vmem:[%s3 + $0x10] sm:$0xff]
      %v951 = vld [vmem:[%s3 + $0x18] sm:$0xff]
      %v952 = vld [vmem:[%s3 + $0x20] sm:$0xff]
      %v953 = vld [vmem:[%s3 + $0x28] sm:$0xff]
      %v954 = vld [vmem:[%s3 + $0x30] sm:$0xff]
      %v955 = vld [vmem:[%s3 + $0x38] sm:$0xff]
      %957 = vset.pattern.permute.xlu0 0
      %958 = vperm.xlu0 %957, %v948
      %v959 = vpop.permute.xlu0 %958
      %962 = vset.pattern.permute.xlu0 0
      %963 = vperm.xlu0 %962, %v949
      %v964 = vpop.permute.xlu0 %963
      %967 = vset.pattern.permute.xlu0 0
      %968 = vperm.xlu0 %967, %v950
      %v969 = vpop.permute.xlu0 %968
      %972 = vset.pattern.permute.xlu0 0
      %973 = vperm.xlu0 %972, %v951
      %v974 = vpop.permute.xlu0 %973
      %977 = vset.pattern.permute.xlu0 0
      %978 = vperm.xlu0 %977, %v952
      %v979 = vpop.permute.xlu0 %978
      %982 = vset.pattern.permute.xlu0 0
      %983 = vperm.xlu0 %982, %v953
      %v984 = vpop.permute.xlu0 %983
      %987 = vset.pattern.permute.xlu0 0
      %988 = vperm.xlu0 %987, %v954
      %v989 = vpop.permute.xlu0 %988
      %992 = vset.pattern.permute.xlu0 0
      %993 = vperm.xlu0 %992, %v955
      %v994 = vpop.permute.xlu0 %993
      %v1012 = vunpack.c.l.b16 %v932
      %v1013 = vunpack.c.h.b16 %v932
      %v1014 = vunpack.c.l.b16 %v933
      %v1015 = vunpack.c.h.b16 %v933
      %v1016 = vunpack.c.l.b16 %v934
      %v1017 = vunpack.c.h.b16 %v934
      %v1018 = vunpack.c.l.b16 %v935
      %v1019 = vunpack.c.h.b16 %v935
      %v1020 = vunpack.c.l.b16 %v936
      %v1021 = vunpack.c.h.b16 %v936
      %v1022 = vunpack.c.l.b16 %v937
      %v1023 = vunpack.c.h.b16 %v937
      %v1024 = vunpack.c.l.b16 %v938
      %v1025 = vunpack.c.h.b16 %v938
      %v1026 = vunpack.c.l.b16 %v939
      %v1027 = vunpack.c.h.b16 %v939
      %v1028 = vunpack.c.l.b16 %v940
      %v1029 = vunpack.c.h.b16 %v940
      %v1030 = vunpack.c.l.b16 %v941
      %v1031 = vunpack.c.h.b16 %v941
      %v1032 = vunpack.c.l.b16 %v942
      %v1033 = vunpack.c.h.b16 %v942
      %v1034 = vunpack.c.l.b16 %v943
      %v1035 = vunpack.c.h.b16 %v943
      %v1036 = vunpack.c.l.b16 %v944
      %v1037 = vunpack.c.h.b16 %v944
      %v1038 = vunpack.c.l.b16 %v945
      %v1039 = vunpack.c.h.b16 %v945
      %v1040 = vunpack.c.l.b16 %v946
      %v1041 = vunpack.c.h.b16 %v946
      %v1042 = vunpack.c.l.b16 %v947
      %v1043 = vunpack.c.h.b16 %v947
      %v1044 = vpack.c.b16 %v1016, %v1012
      %v1045 = vpack.c.b16 %v1017, %v1013
      %v1046 = vpack.c.b16 %v1018, %v1014
      %v1047 = vpack.c.b16 %v1019, %v1015
      %v1048 = vpack.c.b16 %v1024, %v1020
      %v1049 = vpack.c.b16 %v1025, %v1021
      %v1050 = vpack.c.b16 %v1026, %v1022
      %v1051 = vpack.c.b16 %v1027, %v1023
      %v1052 = vpack.c.b16 %v1032, %v1028
      %v1053 = vpack.c.b16 %v1033, %v1029
      %v1054 = vpack.c.b16 %v1034, %v1030
      %v1055 = vpack.c.b16 %v1035, %v1031
      %v1056 = vpack.c.b16 %v1040, %v1036
      %v1057 = vpack.c.b16 %v1041, %v1037
      %v1058 = vpack.c.b16 %v1042, %v1038
      %v1059 = vpack.c.b16 %v1043, %v1039
      %1076 = vmatprep.subr.bf16.mxu0 0
      %1077 = vmatpush1.bf16.msra.mxu0 %v820
      %1078 = vmatprep.subr.bf16.mxu0 0
      %1079 = vmatpush1.bf16.msra.mxu0 %v821
      %1080 = vmatprep.subr.bf16.mxu0 0
      %1081 = vmatpush1.bf16.msra.mxu0 %v822
      %1082 = vmatprep.subr.bf16.mxu0 0
      %1083 = vmatpush1.bf16.msra.mxu0 %v823
      %1084 = vmatprep.subr.bf16.mxu0 0
      %1085 = vmatpush1.bf16.msra.mxu0 %v824
      %1086 = vmatprep.subr.bf16.mxu0 0
      %1087 = vmatpush1.bf16.msra.mxu0 %v825
      %1088 = vmatprep.subr.bf16.mxu0 0
      %1089 = vmatpush1.bf16.msra.mxu0 %v826
      %1090 = vmatprep.subr.bf16.mxu0 0
      %1091 = vmatpush1.bf16.msra.mxu0 %v827
      %1092 = vmatprep.subr.bf16.mxu0 0
      %1093 = vmatpush1.bf16.msra.mxu0 %v837
      %1094 = vmatprep.subr.bf16.mxu0 0
      %1095 = vmatpush1.bf16.msra.mxu0 %v839
      %1096 = vmatprep.subr.bf16.mxu0 0
      %1097 = vmatpush1.bf16.msra.mxu0 %v841
      %1098 = vmatprep.subr.bf16.mxu0 0
      %1099 = vmatpush1.bf16.msra.mxu0 %v843
      %1100 = vmatprep.subr.bf16.mxu0 0
      %1101 = vmatpush1.bf16.msra.mxu0 %v845
      %1102 = vmatprep.subr.bf16.mxu0 0
      %1103 = vmatpush1.bf16.msra.mxu0 %v847
      %1104 = vmatprep.subr.bf16.mxu0 0
      %1105 = vmatpush1.bf16.msra.mxu0 %v849
      %1106 = vmatprep.subr.bf16.mxu0 0
      %1107 = vmatpush1.bf16.msra.mxu0 %v851
      %1108 = vmatprep.mubr.bf16.mxu0 %v1045
      %1109 = vmatmul.mubr.bf16.gmra.mrb[0].mxu0 %v1044
      %v1110 = vpop.f32.mrb[0].mxu0
      %v1111 = vadd.f32 %v959, %v1110
      %v1112 = vpop.f32.mrb[0].mxu0
      %v1113 = vpop.f32.mrb[0].mxu0
      %v1114 = vadd.f32 %v964, %v1113
      %v1115 = vpop.f32.mrb[0].mxu0
      %1116 = vmatprep.mubr.bf16.mxu0 %v1049
      %1117 = vmatmul.mubr.bf16.gmra.mrb[0].mxu0 %v1048
      %v1118 = vpop.f32.mrb[0].mxu0
      %v1119 = vadd.f32 %v969, %v1118
      %v1120 = vpop.f32.mrb[0].mxu0
      %v1121 = vpop.f32.mrb[0].mxu0
      %v1122 = vadd.f32 %v974, %v1121
      %v1123 = vpop.f32.mrb[0].mxu0
      %1124 = vmatprep.mubr.bf16.mxu0 %v1053
      %1125 = vmatmul.mubr.bf16.gmra.mrb[0].mxu0 %v1052
      %v1126 = vpop.f32.mrb[0].mxu0
      %v1127 = vadd.f32 %v979, %v1126
      %v1128 = vpop.f32.mrb[0].mxu0
      %v1129 = vpop.f32.mrb[0].mxu0
      %v1130 = vadd.f32 %v984, %v1129
      %v1131 = vpop.f32.mrb[0].mxu0
      %1132 = vmatprep.mubr.bf16.mxu0 %v1057
      %1133 = vmatmul.mubr.bf16.gmra.mrb[0].mxu0 %v1056
      %v1134 = vpop.f32.mrb[0].mxu0
      %v1135 = vadd.f32 %v989, %v1134
      %v1136 = vpop.f32.mrb[0].mxu0
      %v1137 = vpop.f32.mrb[0].mxu0
      %v1138 = vadd.f32 %v994, %v1137
      %v1139 = vpop.f32.mrb[0].mxu0
      %1140 = vdwg.mxu0
      %1141 = vmatprep.subr.bf16.mxu0 0
      %1142 = vmatpush1.bf16.msra.mxu0 %v892
      %1143 = vmatprep.subr.bf16.mxu0 0
      %1144 = vmatpush1.bf16.msra.mxu0 %v893
      %1145 = vmatprep.subr.bf16.mxu0 0
      %1146 = vmatpush1.bf16.msra.mxu0 %v894
      %1147 = vmatprep.subr.bf16.mxu0 0
      %1148 = vmatpush1.bf16.msra.mxu0 %v895
      %1149 = vmatprep.subr.bf16.mxu0 0
      %1150 = vmatpush1.bf16.msra.mxu0 %v896
      %1151 = vmatprep.subr.bf16.mxu0 0
      %1152 = vmatpush1.bf16.msra.mxu0 %v897
      %1153 = vmatprep.subr.bf16.mxu0 0
      %1154 = vmatpush1.bf16.msra.mxu0 %v898
      %1155 = vmatprep.subr.bf16.mxu0 0
      %1156 = vmatpush1.bf16.msra.mxu0 %v899
      %1157 = vmatprep.subr.bf16.mxu0 0
      %1158 = vmatpush1.bf16.msra.mxu0 %v909
      %1159 = vmatprep.subr.bf16.mxu0 0
      %1160 = vmatpush1.bf16.msra.mxu0 %v911
      %1161 = vmatprep.subr.bf16.mxu0 0
      %1162 = vmatpush1.bf16.msra.mxu0 %v913
      %1163 = vmatprep.subr.bf16.mxu0 0
      %1164 = vmatpush1.bf16.msra.mxu0 %v915
      %1165 = vmatprep.subr.bf16.mxu0 0
      %1166 = vmatpush1.bf16.msra.mxu0 %v917
      %1167 = vmatprep.subr.bf16.mxu0 0
      %1168 = vmatpush1.bf16.msra.mxu0 %v919
      %1169 = vmatprep.subr.bf16.mxu0 0
      %1170 = vmatpush1.bf16.msra.mxu0 %v921
      %1171 = vmatprep.subr.bf16.mxu0 0
      %1172 = vmatpush1.bf16.msra.mxu0 %v923
      %1173 = vmatprep.mubr.bf16.mxu0 %v1047
      %1174 = vmatmul.mubr.bf16.gmra.mrb[0].mxu0 %v1046
      %v1175 = vpop.f32.mrb[0].mxu0
      %v1176 = vadd.f32 %v1111, %v1175
      %v1177 = vpop.f32.mrb[0].mxu0
      %v1178 = vpop.f32.mrb[0].mxu0
      %v1179 = vadd.f32 %v1114, %v1178
      %v1180 = vpop.f32.mrb[0].mxu0
      %1181 = vmatprep.mubr.bf16.mxu0 %v1051
      %1182 = vmatmul.mubr.bf16.gmra.mrb[0].mxu0 %v1050
      %v1183 = vpop.f32.mrb[0].mxu0
      %v1184 = vadd.f32 %v1119, %v1183
      %v1185 = vpop.f32.mrb[0].mxu0
      %v1186 = vpop.f32.mrb[0].mxu0
      %v1187 = vadd.f32 %v1122, %v1186
      %v1188 = vpop.f32.mrb[0].mxu0
      %1189 = vmatprep.mubr.bf16.mxu0 %v1055
      %1190 = vmatmul.mubr.bf16.gmra.mrb[0].mxu0 %v1054
      %v1191 = vpop.f32.mrb[0].mxu0
      %v1192 = vadd.f32 %v1127, %v1191
      %v1193 = vpop.f32.mrb[0].mxu0
      %v1194 = vpop.f32.mrb[0].mxu0
      %v1195 = vadd.f32 %v1130, %v1194
      %v1196 = vpop.f32.mrb[0].mxu0
      %1197 = vmatprep.mubr.bf16.mxu0 %v1059
      %1198 = vmatmul.mubr.bf16.gmra.mrb[0].mxu0 %v1058
      %v1199 = vpop.f32.mrb[0].mxu0
      %v1200 = vadd.f32 %v1135, %v1199
      %v1201 = vpop.f32.mrb[0].mxu0
      %v1202 = vpop.f32.mrb[0].mxu0
      %v1203 = vadd.f32 %v1138, %v1202
      %v1204 = vpop.f32.mrb[0].mxu0
      %1205 = vdwg.mxu0
      %v1206 = vmax.f32 %v1176, 0.0
      %v1207 = vmax.f32 %v1179, 0.0
      %v1208 = vmax.f32 %v1184, 0.0
      %v1209 = vmax.f32 %v1187, 0.0
      %v1210 = vmax.f32 %v1192, 0.0
      %v1211 = vmax.f32 %v1195, 0.0
      %v1212 = vmax.f32 %v1200, 0.0
      %v1213 = vmax.f32 %v1203, 0.0
      %v1214 = vsel %vm731, %v1206, -inf
      %v1215 = vsel %vm731, %v1207, -inf
      %v1216 = vsel %vm731, %v1208, -inf
      %v1217 = vsel %vm731, %v1209, -inf
      %v1218 = vsel %vm731, %v1210, -inf
      %v1219 = vmax.f32 %v1214, %v1218
      %v1220 = vsel %vm731, %v1211, -inf
      %v1221 = vmax.f32 %v1215, %v1220
      %v1222 = vsel %vm731, %v1212, -inf
      %v1223 = vmax.f32 %v1216, %v1222
      %v1224 = vsel %vm731, %v1213, -inf
      %v1225 = vmax.f32 %v1217, %v1224
      %v1226 = vmax.f32 %v1219, %v1221
      %v1227 = vmax.f32 %v1223, %v1225
      %v1228 = vmax.f32 %v1226, %v1227
      %v1229 = vrot.slane %v1228, 4
      %v1230 = vmax.f32 %v1228, %v1229
      %v1231 = vrot.slane %v1230, 2
      %v1232 = vmax.f32 %v1230, %v1231
      %v1233 = vrot.slane %v1232, 1
      %v1234 = vmax.f32 %v1232, %v1233
      %1235 = vst.msk [vmem:[%s270 + $0x1] sm:$0x1] %vm753, %v1234
      %v1236 = vld [vmem:[%s771] sm:$0xf]
      %v1237 = vld [vmem:[%s771 + $0x4] sm:$0xf]
      %v1238 = vld [vmem:[%s771 + $0x8] sm:$0xf]
      %v1239 = vld [vmem:[%s771 + $0xc] sm:$0xf]
      %v1240 = vld [vmem:[%s771 + $0x10] sm:$0xf]
      %v1241 = vld [vmem:[%s771 + $0x14] sm:$0xf]
      %v1242 = vld [vmem:[%s771 + $0x18] sm:$0xf]
      %v1243 = vld [vmem:[%s771 + $0x1c] sm:$0xf]
      %v1244 = vld [vmem:[%s771 + $0x20] sm:$0xf]
      %v1245 = vld [vmem:[%s771 + $0x24] sm:$0xf]
      %v1246 = vld [vmem:[%s771 + $0x28] sm:$0xf]
      %v1247 = vld [vmem:[%s771 + $0x2c] sm:$0xf]
      %v1248 = vld [vmem:[%s771 + $0x30] sm:$0xf]
      %v1249 = vld [vmem:[%s771 + $0x34] sm:$0xf]
      %v1250 = vld [vmem:[%s771 + $0x38] sm:$0xf]
      %v1251 = vld [vmem:[%s771 + $0x3c] sm:$0xf]
      %s1252 = scalar_lea.vmem %s252, 192
      %v1253 = vld [vmem:[%s1252] sm:$0xf]
      %v1254 = vld [vmem:[%s1252 + $0x4] sm:$0xf]
      %v1255 = vld [vmem:[%s1252 + $0x8] sm:$0xf]
      %v1256 = vld [vmem:[%s1252 + $0xc] sm:$0xf]
      %v1257 = vld [vmem:[%s1252 + $0x10] sm:$0xf]
      %v1258 = vld [vmem:[%s1252 + $0x14] sm:$0xf]
      %v1259 = vld [vmem:[%s1252 + $0x18] sm:$0xf]
      %v1260 = vld [vmem:[%s1252 + $0x1c] sm:$0xf]
      %v1261 = vld [vmem:[%s1252 + $0x20] sm:$0xf]
      %v1262 = vld [vmem:[%s1252 + $0x24] sm:$0xf]
      %v1263 = vld [vmem:[%s1252 + $0x28] sm:$0xf]
      %v1264 = vld [vmem:[%s1252 + $0x2c] sm:$0xf]
      %v1265 = vld [vmem:[%s1252 + $0x30] sm:$0xf]
      %v1266 = vld [vmem:[%s1252 + $0x34] sm:$0xf]
      %v1267 = vld [vmem:[%s1252 + $0x38] sm:$0xf]
      %v1268 = vld [vmem:[%s1252 + $0x3c] sm:$0xf]
      %v1285 = vunpack.c.l.b16 %v1236
      %v1286 = vunpack.c.l.b16 %v1237
      %v1287 = vunpack.c.l.b16 %v1238
      %v1288 = vunpack.c.l.b16 %v1239
      %v1289 = vunpack.c.l.b16 %v1240
      %v1290 = vunpack.c.l.b16 %v1241
      %v1291 = vunpack.c.l.b16 %v1242
      %v1292 = vunpack.c.l.b16 %v1243
      %v1293 = vunpack.c.l.b16 %v1244
      %v1294 = vunpack.c.l.b16 %v1245
      %v1295 = vunpack.c.l.b16 %v1246
      %v1296 = vunpack.c.l.b16 %v1247
      %v1297 = vunpack.c.l.b16 %v1248
      %v1298 = vunpack.c.l.b16 %v1249
      %v1299 = vunpack.c.l.b16 %v1250
      %v1300 = vunpack.c.l.b16 %v1251
      %v1301 = vpack.c.b16 %v1286, %v1285
      %v1302 = vpack.c.b16 %v1288, %v1287
      %v1303 = vpack.c.b16 %v1290, %v1289
      %v1304 = vpack.c.b16 %v1292, %v1291
      %v1305 = vpack.c.b16 %v1294, %v1293
      %v1306 = vpack.c.b16 %v1296, %v1295
      %v1307 = vpack.c.b16 %v1298, %v1297
      %v1308 = vpack.c.b16 %v1300, %v1299
      %1317 = vrot.lane.b32.xlu0 %v1301, 127
      %v1318 = vpop.permute.xlu0 %1317
      %1319 = vrot.lane.b32.xlu0 %v1302, 127
      %v1320 = vpop.permute.xlu0 %1319
      %1321 = vrot.lane.b32.xlu0 %v1303, 127
      %v1322 = vpop.permute.xlu0 %1321
      %1323 = vrot.lane.b32.xlu0 %v1304, 127
      %v1324 = vpop.permute.xlu0 %1323
      %1325 = vrot.lane.b32.xlu0 %v1305, 127
      %v1326 = vpop.permute.xlu0 %1325
      %1327 = vrot.lane.b32.xlu0 %v1306, 127
      %v1328 = vpop.permute.xlu0 %1327
      %1329 = vrot.lane.b32.xlu0 %v1307, 127
      %v1330 = vpop.permute.xlu0 %1329
      %1331 = vrot.lane.b32.xlu0 %v1308, 127
      %v1332 = vpop.permute.xlu0 %1331
      %v1357 = vunpack.c.l.b16 %v1253
      %v1358 = vunpack.c.l.b16 %v1254
      %v1359 = vunpack.c.l.b16 %v1255
      %v1360 = vunpack.c.l.b16 %v1256
      %v1361 = vunpack.c.l.b16 %v1257
      %v1362 = vunpack.c.l.b16 %v1258
      %v1363 = vunpack.c.l.b16 %v1259
      %v1364 = vunpack.c.l.b16 %v1260
      %v1365 = vunpack.c.l.b16 %v1261
      %v1366 = vunpack.c.l.b16 %v1262
      %v1367 = vunpack.c.l.b16 %v1263
      %v1368 = vunpack.c.l.b16 %v1264
      %v1369 = vunpack.c.l.b16 %v1265
      %v1370 = vunpack.c.l.b16 %v1266
      %v1371 = vunpack.c.l.b16 %v1267
      %v1372 = vunpack.c.l.b16 %v1268
      %v1373 = vpack.c.b16 %v1358, %v1357
      %v1374 = vpack.c.b16 %v1360, %v1359
      %v1375 = vpack.c.b16 %v1362, %v1361
      %v1376 = vpack.c.b16 %v1364, %v1363
      %v1377 = vpack.c.b16 %v1366, %v1365
      %v1378 = vpack.c.b16 %v1368, %v1367
      %v1379 = vpack.c.b16 %v1370, %v1369
      %v1380 = vpack.c.b16 %v1372, %v1371
      %1389 = vrot.lane.b32.xlu0 %v1373, 127
      %v1390 = vpop.permute.xlu0 %1389
      %1391 = vrot.lane.b32.xlu0 %v1374, 127
      %v1392 = vpop.permute.xlu0 %1391
      %1393 = vrot.lane.b32.xlu0 %v1375, 127
      %v1394 = vpop.permute.xlu0 %1393
      %1395 = vrot.lane.b32.xlu0 %v1376, 127
      %v1396 = vpop.permute.xlu0 %1395
      %1397 = vrot.lane.b32.xlu0 %v1377, 127
      %v1398 = vpop.permute.xlu0 %1397
      %1399 = vrot.lane.b32.xlu0 %v1378, 127
      %v1400 = vpop.permute.xlu0 %1399
      %1401 = vrot.lane.b32.xlu0 %v1379, 127
      %v1402 = vpop.permute.xlu0 %1401
      %1403 = vrot.lane.b32.xlu0 %v1380, 127
      %v1404 = vpop.permute.xlu0 %1403
      %v1413 = vld [vmem:[%s2] sm:$0xff]
      %v1414 = vld [vmem:[%s2 + $0x8] sm:$0xff]
      %v1415 = vld [vmem:[%s2 + $0x10] sm:$0xff]
      %v1416 = vld [vmem:[%s2 + $0x18] sm:$0xff]
      %v1417 = vld [vmem:[%s2 + $0x20] sm:$0xff]
      %v1418 = vld [vmem:[%s2 + $0x28] sm:$0xff]
      %v1419 = vld [vmem:[%s2 + $0x30] sm:$0xff]
      %v1420 = vld [vmem:[%s2 + $0x38] sm:$0xff]
      %v1421 = vld [vmem:[%s2 + $0x40] sm:$0xff]
      %v1422 = vld [vmem:[%s2 + $0x48] sm:$0xff]
      %v1423 = vld [vmem:[%s2 + $0x50] sm:$0xff]
      %v1424 = vld [vmem:[%s2 + $0x58] sm:$0xff]
      %v1425 = vld [vmem:[%s2 + $0x60] sm:$0xff]
      %v1426 = vld [vmem:[%s2 + $0x68] sm:$0xff]
      %v1427 = vld [vmem:[%s2 + $0x70] sm:$0xff]
      %v1428 = vld [vmem:[%s2 + $0x78] sm:$0xff]
      %v1429 = vld [vmem:[%s3] sm:$0xff]
      %v1430 = vld [vmem:[%s3 + $0x8] sm:$0xff]
      %v1431 = vld [vmem:[%s3 + $0x10] sm:$0xff]
      %v1432 = vld [vmem:[%s3 + $0x18] sm:$0xff]
      %v1433 = vld [vmem:[%s3 + $0x20] sm:$0xff]
      %v1434 = vld [vmem:[%s3 + $0x28] sm:$0xff]
      %v1435 = vld [vmem:[%s3 + $0x30] sm:$0xff]
      %v1436 = vld [vmem:[%s3 + $0x38] sm:$0xff]
      %1438 = vset.pattern.permute.xlu0 0
      %1439 = vperm.xlu0 %1438, %v1429
      %v1440 = vpop.permute.xlu0 %1439
      %1443 = vset.pattern.permute.xlu0 0
      %1444 = vperm.xlu0 %1443, %v1430
      %v1445 = vpop.permute.xlu0 %1444
      %1448 = vset.pattern.permute.xlu0 0
      %1449 = vperm.xlu0 %1448, %v1431
      %v1450 = vpop.permute.xlu0 %1449
      %1453 = vset.pattern.permute.xlu0 0
      %1454 = vperm.xlu0 %1453, %v1432
      %v1455 = vpop.permute.xlu0 %1454
      %1458 = vset.pattern.permute.xlu0 0
      %1459 = vperm.xlu0 %1458, %v1433
      %v1460 = vpop.permute.xlu0 %1459
      %1463 = vset.pattern.permute.xlu0 0
      %1464 = vperm.xlu0 %1463, %v1434
      %v1465 = vpop.permute.xlu0 %1464
      %1468 = vset.pattern.permute.xlu0 0
      %1469 = vperm.xlu0 %1468, %v1435
      %v1470 = vpop.permute.xlu0 %1469
      %1473 = vset.pattern.permute.xlu0 0
      %1474 = vperm.xlu0 %1473, %v1436
      %v1475 = vpop.permute.xlu0 %1474
      %v1493 = vunpack.c.l.b16 %v1413
      %v1494 = vunpack.c.h.b16 %v1413
      %v1495 = vunpack.c.l.b16 %v1414
      %v1496 = vunpack.c.h.b16 %v1414
      %v1497 = vunpack.c.l.b16 %v1415
      %v1498 = vunpack.c.h.b16 %v1415
      %v1499 = vunpack.c.l.b16 %v1416
      %v1500 = vunpack.c.h.b16 %v1416
      %v1501 = vunpack.c.l.b16 %v1417
      %v1502 = vunpack.c.h.b16 %v1417
      %v1503 = vunpack.c.l.b16 %v1418
      %v1504 = vunpack.c.h.b16 %v1418
      %v1505 = vunpack.c.l.b16 %v1419
      %v1506 = vunpack.c.h.b16 %v1419
      %v1507 = vunpack.c.l.b16 %v1420
      %v1508 = vunpack.c.h.b16 %v1420
      %v1509 = vunpack.c.l.b16 %v1421
      %v1510 = vunpack.c.h.b16 %v1421
      %v1511 = vunpack.c.l.b16 %v1422
      %v1512 = vunpack.c.h.b16 %v1422
      %v1513 = vunpack.c.l.b16 %v1423
      %v1514 = vunpack.c.h.b16 %v1423
      %v1515 = vunpack.c.l.b16 %v1424
      %v1516 = vunpack.c.h.b16 %v1424
      %v1517 = vunpack.c.l.b16 %v1425
      %v1518 = vunpack.c.h.b16 %v1425
      %v1519 = vunpack.c.l.b16 %v1426
      %v1520 = vunpack.c.h.b16 %v1426
      %v1521 = vunpack.c.l.b16 %v1427
      %v1522 = vunpack.c.h.b16 %v1427
      %v1523 = vunpack.c.l.b16 %v1428
      %v1524 = vunpack.c.h.b16 %v1428
      %v1525 = vpack.c.b16 %v1497, %v1493
      %v1526 = vpack.c.b16 %v1498, %v1494
      %v1527 = vpack.c.b16 %v1499, %v1495
      %v1528 = vpack.c.b16 %v1500, %v1496
      %v1529 = vpack.c.b16 %v1505, %v1501
      %v1530 = vpack.c.b16 %v1506, %v1502
      %v1531 = vpack.c.b16 %v1507, %v1503
      %v1532 = vpack.c.b16 %v1508, %v1504
      %v1533 = vpack.c.b16 %v1513, %v1509
      %v1534 = vpack.c.b16 %v1514, %v1510
      %v1535 = vpack.c.b16 %v1515, %v1511
      %v1536 = vpack.c.b16 %v1516, %v1512
      %v1537 = vpack.c.b16 %v1521, %v1517
      %v1538 = vpack.c.b16 %v1522, %v1518
      %v1539 = vpack.c.b16 %v1523, %v1519
      %v1540 = vpack.c.b16 %v1524, %v1520
      %1557 = vmatprep.subr.bf16.mxu0 0
      %1558 = vmatpush1.bf16.msra.mxu0 %v1301
      %1559 = vmatprep.subr.bf16.mxu0 0
      %1560 = vmatpush1.bf16.msra.mxu0 %v1302
      %1561 = vmatprep.subr.bf16.mxu0 0
      %1562 = vmatpush1.bf16.msra.mxu0 %v1303
      %1563 = vmatprep.subr.bf16.mxu0 0
      %1564 = vmatpush1.bf16.msra.mxu0 %v1304
      %1565 = vmatprep.subr.bf16.mxu0 0
      %1566 = vmatpush1.bf16.msra.mxu0 %v1305
      %1567 = vmatprep.subr.bf16.mxu0 0
      %1568 = vmatpush1.bf16.msra.mxu0 %v1306
      %1569 = vmatprep.subr.bf16.mxu0 0
      %1570 = vmatpush1.bf16.msra.mxu0 %v1307
      %1571 = vmatprep.subr.bf16.mxu0 0
      %1572 = vmatpush1.bf16.msra.mxu0 %v1308
      %1573 = vmatprep.subr.bf16.mxu0 0
      %1574 = vmatpush1.bf16.msra.mxu0 %v1318
      %1575 = vmatprep.subr.bf16.mxu0 0
      %1576 = vmatpush1.bf16.msra.mxu0 %v1320
      %1577 = vmatprep.subr.bf16.mxu0 0
      %1578 = vmatpush1.bf16.msra.mxu0 %v1322
      %1579 = vmatprep.subr.bf16.mxu0 0
      %1580 = vmatpush1.bf16.msra.mxu0 %v1324
      %1581 = vmatprep.subr.bf16.mxu0 0
      %1582 = vmatpush1.bf16.msra.mxu0 %v1326
      %1583 = vmatprep.subr.bf16.mxu0 0
      %1584 = vmatpush1.bf16.msra.mxu0 %v1328
      %1585 = vmatprep.subr.bf16.mxu0 0
      %1586 = vmatpush1.bf16.msra.mxu0 %v1330
      %1587 = vmatprep.subr.bf16.mxu0 0
      %1588 = vmatpush1.bf16.msra.mxu0 %v1332
      %1589 = vmatprep.mubr.bf16.mxu0 %v1526
      %1590 = vmatmul.mubr.bf16.gmra.mrb[0].mxu0 %v1525
      %v1591 = vpop.f32.mrb[0].mxu0
      %v1592 = vadd.f32 %v1440, %v1591
      %v1593 = vpop.f32.mrb[0].mxu0
      %v1594 = vpop.f32.mrb[0].mxu0
      %v1595 = vadd.f32 %v1445, %v1594
      %v1596 = vpop.f32.mrb[0].mxu0
      %1597 = vmatprep.mubr.bf16.mxu0 %v1530
      %1598 = vmatmul.mubr.bf16.gmra.mrb[0].mxu0 %v1529
      %v1599 = vpop.f32.mrb[0].mxu0
      %v1600 = vadd.f32 %v1450, %v1599
      %v1601 = vpop.f32.mrb[0].mxu0
      %v1602 = vpop.f32.mrb[0].mxu0
      %v1603 = vadd.f32 %v1455, %v1602
      %v1604 = vpop.f32.mrb[0].mxu0
      %1605 = vmatprep.mubr.bf16.mxu0 %v1534
      %1606 = vmatmul.mubr.bf16.gmra.mrb[0].mxu0 %v1533
      %v1607 = vpop.f32.mrb[0].mxu0
      %v1608 = vadd.f32 %v1460, %v1607
      %v1609 = vpop.f32.mrb[0].mxu0
      %v1610 = vpop.f32.mrb[0].mxu0
      %v1611 = vadd.f32 %v1465, %v1610
      %v1612 = vpop.f32.mrb[0].mxu0
      %1613 = vmatprep.mubr.bf16.mxu0 %v1538
      %1614 = vmatmul.mubr.bf16.gmra.mrb[0].mxu0 %v1537
      %v1615 = vpop.f32.mrb[0].mxu0
      %v1616 = vadd.f32 %v1470, %v1615
      %v1617 = vpop.f32.mrb[0].mxu0
      %v1618 = vpop.f32.mrb[0].mxu0
      %v1619 = vadd.f32 %v1475, %v1618
      %v1620 = vpop.f32.mrb[0].mxu0
      %1621 = vdwg.mxu0
      %1622 = vmatprep.subr.bf16.mxu0 0
      %1623 = vmatpush1.bf16.msra.mxu0 %v1373
      %1624 = vmatprep.subr.bf16.mxu0 0
      %1625 = vmatpush1.bf16.msra.mxu0 %v1374
      %1626 = vmatprep.subr.bf16.mxu0 0
      %1627 = vmatpush1.bf16.msra.mxu0 %v1375
      %1628 = vmatprep.subr.bf16.mxu0 0
      %1629 = vmatpush1.bf16.msra.mxu0 %v1376
      %1630 = vmatprep.subr.bf16.mxu0 0
      %1631 = vmatpush1.bf16.msra.mxu0 %v1377
      %1632 = vmatprep.subr.bf16.mxu0 0
      %1633 = vmatpush1.bf16.msra.mxu0 %v1378
      %1634 = vmatprep.subr.bf16.mxu0 0
      %1635 = vmatpush1.bf16.msra.mxu0 %v1379
      %1636 = vmatprep.subr.bf16.mxu0 0
      %1637 = vmatpush1.bf16.msra.mxu0 %v1380
      %1638 = vmatprep.subr.bf16.mxu0 0
      %1639 = vmatpush1.bf16.msra.mxu0 %v1390
      %1640 = vmatprep.subr.bf16.mxu0 0
      %1641 = vmatpush1.bf16.msra.mxu0 %v1392
      %1642 = vmatprep.subr.bf16.mxu0 0
      %1643 = vmatpush1.bf16.msra.mxu0 %v1394
      %1644 = vmatprep.subr.bf16.mxu0 0
      %1645 = vmatpush1.bf16.msra.mxu0 %v1396
      %1646 = vmatprep.subr.bf16.mxu0 0
      %1647 = vmatpush1.bf16.msra.mxu0 %v1398
      %1648 = vmatprep.subr.bf16.mxu0 0
      %1649 = vmatpush1.bf16.msra.mxu0 %v1400
      %1650 = vmatprep.subr.bf16.mxu0 0
      %1651 = vmatpush1.bf16.msra.mxu0 %v1402
      %1652 = vmatprep.subr.bf16.mxu0 0
      %1653 = vmatpush1.bf16.msra.mxu0 %v1404
      %1654 = vmatprep.mubr.bf16.mxu0 %v1528
      %1655 = vmatmul.mubr.bf16.gmra.mrb[0].mxu0 %v1527
      %v1656 = vpop.f32.mrb[0].mxu0
      %v1657 = vadd.f32 %v1592, %v1656
      %v1658 = vpop.f32.mrb[0].mxu0
      %v1659 = vpop.f32.mrb[0].mxu0
      %v1660 = vadd.f32 %v1595, %v1659
      %v1661 = vpop.f32.mrb[0].mxu0
      %1662 = vmatprep.mubr.bf16.mxu0 %v1532
      %1663 = vmatmul.mubr.bf16.gmra.mrb[0].mxu0 %v1531
      %v1664 = vpop.f32.mrb[0].mxu0
      %v1665 = vadd.f32 %v1600, %v1664
      %v1666 = vpop.f32.mrb[0].mxu0
      %v1667 = vpop.f32.mrb[0].mxu0
      %v1668 = vadd.f32 %v1603, %v1667
      %v1669 = vpop.f32.mrb[0].mxu0
      %1670 = vmatprep.mubr.bf16.mxu0 %v1536
      %1671 = vmatmul.mubr.bf16.gmra.mrb[0].mxu0 %v1535
      %v1672 = vpop.f32.mrb[0].mxu0
      %v1673 = vadd.f32 %v1608, %v1672
      %v1674 = vpop.f32.mrb[0].mxu0
      %v1675 = vpop.f32.mrb[0].mxu0
      %v1676 = vadd.f32 %v1611, %v1675
      %v1677 = vpop.f32.mrb[0].mxu0
      %1678 = vmatprep.mubr.bf16.mxu0 %v1540
      %1679 = vmatmul.mubr.bf16.gmra.mrb[0].mxu0 %v1539
      %v1680 = vpop.f32.mrb[0].mxu0
      %v1681 = vadd.f32 %v1616, %v1680
      %v1682 = vpop.f32.mrb[0].mxu0
      %v1683 = vpop.f32.mrb[0].mxu0
      %v1684 = vadd.f32 %v1619, %v1683
      %v1685 = vpop.f32.mrb[0].mxu0
      %1686 = vdwg.mxu0
      %v1687 = vmax.f32 %v1657, 0.0
      %v1688 = vmax.f32 %v1660, 0.0
      %v1689 = vmax.f32 %v1665, 0.0
      %v1690 = vmax.f32 %v1668, 0.0
      %v1691 = vmax.f32 %v1673, 0.0
      %v1692 = vmax.f32 %v1676, 0.0
      %v1693 = vmax.f32 %v1681, 0.0
      %v1694 = vmax.f32 %v1684, 0.0
      %v1695 = vsel %vm731, %v1687, -inf
      %v1696 = vsel %vm731, %v1688, -inf
      %v1697 = vsel %vm731, %v1689, -inf
      %v1698 = vsel %vm731, %v1690, -inf
      %v1699 = vsel %vm731, %v1691, -inf
      %v1700 = vmax.f32 %v1695, %v1699
      %v1701 = vsel %vm731, %v1692, -inf
      %v1702 = vmax.f32 %v1696, %v1701
      %v1703 = vsel %vm731, %v1693, -inf
      %v1704 = vmax.f32 %v1697, %v1703
      %v1705 = vsel %vm731, %v1694, -inf
      %v1706 = vmax.f32 %v1698, %v1705
      %v1707 = vmax.f32 %v1700, %v1702
      %v1708 = vmax.f32 %v1704, %v1706
      %v1709 = vmax.f32 %v1707, %v1708
      %v1710 = vrot.slane %v1709, 4
      %v1711 = vmax.f32 %v1709, %v1710
      %v1712 = vrot.slane %v1711, 2
      %v1713 = vmax.f32 %v1711, %v1712
      %v1714 = vrot.slane %v1713, 1
      %v1715 = vmax.f32 %v1713, %v1714
      %1716 = vst.msk [vmem:[%s270 + $0x2] sm:$0x1] %vm753, %v1715
      %v1717 = vld [vmem:[%s1252] sm:$0xf]
      %v1718 = vld [vmem:[%s1252 + $0x4] sm:$0xf]
      %v1719 = vld [vmem:[%s1252 + $0x8] sm:$0xf]
      %v1720 = vld [vmem:[%s1252 + $0xc] sm:$0xf]
      %v1721 = vld [vmem:[%s1252 + $0x10] sm:$0xf]
      %v1722 = vld [vmem:[%s1252 + $0x14] sm:$0xf]
      %v1723 = vld [vmem:[%s1252 + $0x18] sm:$0xf]
      %v1724 = vld [vmem:[%s1252 + $0x1c] sm:$0xf]
      %v1725 = vld [vmem:[%s1252 + $0x20] sm:$0xf]
      %v1726 = vld [vmem:[%s1252 + $0x24] sm:$0xf]
      %v1727 = vld [vmem:[%s1252 + $0x28] sm:$0xf]
      %v1728 = vld [vmem:[%s1252 + $0x2c] sm:$0xf]
      %v1729 = vld [vmem:[%s1252 + $0x30] sm:$0xf]
      %v1730 = vld [vmem:[%s1252 + $0x34] sm:$0xf]
      %v1731 = vld [vmem:[%s1252 + $0x38] sm:$0xf]
      %v1732 = vld [vmem:[%s1252 + $0x3c] sm:$0xf]
      %s1733 = scalar_lea.vmem %s252, 256
      %v1734 = vld [vmem:[%s1733] sm:$0xf]
      %v1735 = vld [vmem:[%s1733 + $0x4] sm:$0xf]
      %v1736 = vld [vmem:[%s1733 + $0x8] sm:$0xf]
      %v1737 = vld [vmem:[%s1733 + $0xc] sm:$0xf]
      %v1738 = vld [vmem:[%s1733 + $0x10] sm:$0xf]
      %v1739 = vld [vmem:[%s1733 + $0x14] sm:$0xf]
      %v1740 = vld [vmem:[%s1733 + $0x18] sm:$0xf]
      %v1741 = vld [vmem:[%s1733 + $0x1c] sm:$0xf]
      %v1742 = vld [vmem:[%s1733 + $0x20] sm:$0xf]
      %v1743 = vld [vmem:[%s1733 + $0x24] sm:$0xf]
      %v1744 = vld [vmem:[%s1733 + $0x28] sm:$0xf]
      %v1745 = vld [vmem:[%s1733 + $0x2c] sm:$0xf]
      %v1746 = vld [vmem:[%s1733 + $0x30] sm:$0xf]
      %v1747 = vld [vmem:[%s1733 + $0x34] sm:$0xf]
      %v1748 = vld [vmem:[%s1733 + $0x38] sm:$0xf]
      %v1749 = vld [vmem:[%s1733 + $0x3c] sm:$0xf]
      %v1766 = vunpack.c.l.b16 %v1717
      %v1767 = vunpack.c.l.b16 %v1718
      %v1768 = vunpack.c.l.b16 %v1719
      %v1769 = vunpack.c.l.b16 %v1720
      %v1770 = vunpack.c.l.b16 %v1721
      %v1771 = vunpack.c.l.b16 %v1722
      %v1772 = vunpack.c.l.b16 %v1723
      %v1773 = vunpack.c.l.b16 %v1724
      %v1774 = vunpack.c.l.b16 %v1725
      %v1775 = vunpack.c.l.b16 %v1726
      %v1776 = vunpack.c.l.b16 %v1727
      %v1777 = vunpack.c.l.b16 %v1728
      %v1778 = vunpack.c.l.b16 %v1729
      %v1779 = vunpack.c.l.b16 %v1730
      %v1780 = vunpack.c.l.b16 %v1731
      %v1781 = vunpack.c.l.b16 %v1732
      %v1782 = vpack.c.b16 %v1767, %v1766
      %v1783 = vpack.c.b16 %v1769, %v1768
      %v1784 = vpack.c.b16 %v1771, %v1770
      %v1785 = vpack.c.b16 %v1773, %v1772
      %v1786 = vpack.c.b16 %v1775, %v1774
      %v1787 = vpack.c.b16 %v1777, %v1776
      %v1788 = vpack.c.b16 %v1779, %v1778
      %v1789 = vpack.c.b16 %v1781, %v1780
      %1798 = vrot.lane.b32.xlu0 %v1782, 127
      %v1799 = vpop.permute.xlu0 %1798
      %1800 = vrot.lane.b32.xlu0 %v1783, 127
      %v1801 = vpop.permute.xlu0 %1800
      %1802 = vrot.lane.b32.xlu0 %v1784, 127
      %v1803 = vpop.permute.xlu0 %1802
      %1804 = vrot.lane.b32.xlu0 %v1785, 127
      %v1805 = vpop.permute.xlu0 %1804
      %1806 = vrot.lane.b32.xlu0 %v1786, 127
      %v1807 = vpop.permute.xlu0 %1806
      %1808 = vrot.lane.b32.xlu0 %v1787, 127
      %v1809 = vpop.permute.xlu0 %1808
      %1810 = vrot.lane.b32.xlu0 %v1788, 127
      %v1811 = vpop.permute.xlu0 %1810
      %1812 = vrot.lane.b32.xlu0 %v1789, 127
      %v1813 = vpop.permute.xlu0 %1812
      %v1838 = vunpack.c.l.b16 %v1734
      %v1839 = vunpack.c.l.b16 %v1735
      %v1840 = vunpack.c.l.b16 %v1736
      %v1841 = vunpack.c.l.b16 %v1737
      %v1842 = vunpack.c.l.b16 %v1738
      %v1843 = vunpack.c.l.b16 %v1739
      %v1844 = vunpack.c.l.b16 %v1740
      %v1845 = vunpack.c.l.b16 %v1741
      %v1846 = vunpack.c.l.b16 %v1742
      %v1847 = vunpack.c.l.b16 %v1743
      %v1848 = vunpack.c.l.b16 %v1744
      %v1849 = vunpack.c.l.b16 %v1745
      %v1850 = vunpack.c.l.b16 %v1746
      %v1851 = vunpack.c.l.b16 %v1747
      %v1852 = vunpack.c.l.b16 %v1748
      %v1853 = vunpack.c.l.b16 %v1749
      %v1854 = vpack.c.b16 %v1839, %v1838
      %v1855 = vpack.c.b16 %v1841, %v1840
      %v1856 = vpack.c.b16 %v1843, %v1842
      %v1857 = vpack.c.b16 %v1845, %v1844
      %v1858 = vpack.c.b16 %v1847, %v1846
      %v1859 = vpack.c.b16 %v1849, %v1848
      %v1860 = vpack.c.b16 %v1851, %v1850
      %v1861 = vpack.c.b16 %v1853, %v1852
      %1870 = vrot.lane.b32.xlu0 %v1854, 127
      %v1871 = vpop.permute.xlu0 %1870
      %1872 = vrot.lane.b32.xlu0 %v1855, 127
      %v1873 = vpop.permute.xlu0 %1872
      %1874 = vrot.lane.b32.xlu0 %v1856, 127
      %v1875 = vpop.permute.xlu0 %1874
      %1876 = vrot.lane.b32.xlu0 %v1857, 127
      %v1877 = vpop.permute.xlu0 %1876
      %1878 = vrot.lane.b32.xlu0 %v1858, 127
      %v1879 = vpop.permute.xlu0 %1878
      %1880 = vrot.lane.b32.xlu0 %v1859, 127
      %v1881 = vpop.permute.xlu0 %1880
      %1882 = vrot.lane.b32.xlu0 %v1860, 127
      %v1883 = vpop.permute.xlu0 %1882
      %1884 = vrot.lane.b32.xlu0 %v1861, 127
      %v1885 = vpop.permute.xlu0 %1884
      %v1894 = vld [vmem:[%s2] sm:$0xff]
      %v1895 = vld [vmem:[%s2 + $0x8] sm:$0xff]
      %v1896 = vld [vmem:[%s2 + $0x10] sm:$0xff]
      %v1897 = vld [vmem:[%s2 + $0x18] sm:$0xff]
      %v1898 = vld [vmem:[%s2 + $0x20] sm:$0xff]
      %v1899 = vld [vmem:[%s2 + $0x28] sm:$0xff]
      %v1900 = vld [vmem:[%s2 + $0x30] sm:$0xff]
      %v1901 = vld [vmem:[%s2 + $0x38] sm:$0xff]
      %v1902 = vld [vmem:[%s2 + $0x40] sm:$0xff]
      %v1903 = vld [vmem:[%s2 + $0x48] sm:$0xff]
      %v1904 = vld [vmem:[%s2 + $0x50] sm:$0xff]
      %v1905 = vld [vmem:[%s2 + $0x58] sm:$0xff]
      %v1906 = vld [vmem:[%s2 + $0x60] sm:$0xff]
      %v1907 = vld [vmem:[%s2 + $0x68] sm:$0xff]
      %v1908 = vld [vmem:[%s2 + $0x70] sm:$0xff]
      %v1909 = vld [vmem:[%s2 + $0x78] sm:$0xff]
      %v1910 = vld [vmem:[%s3] sm:$0xff]
      %v1911 = vld [vmem:[%s3 + $0x8] sm:$0xff]
      %v1912 = vld [vmem:[%s3 + $0x10] sm:$0xff]
      %v1913 = vld [vmem:[%s3 + $0x18] sm:$0xff]
      %v1914 = vld [vmem:[%s3 + $0x20] sm:$0xff]
      %v1915 = vld [vmem:[%s3 + $0x28] sm:$0xff]
      %v1916 = vld [vmem:[%s3 + $0x30] sm:$0xff]
      %v1917 = vld [vmem:[%s3 + $0x38] sm:$0xff]
      %1919 = vset.pattern.permute.xlu0 0
      %1920 = vperm.xlu0 %1919, %v1910
      %v1921 = vpop.permute.xlu0 %1920
      %1924 = vset.pattern.permute.xlu0 0
      %1925 = vperm.xlu0 %1924, %v1911
      %v1926 = vpop.permute.xlu0 %1925
      %1929 = vset.pattern.permute.xlu0 0
      %1930 = vperm.xlu0 %1929, %v1912
      %v1931 = vpop.permute.xlu0 %1930
      %1934 = vset.pattern.permute.xlu0 0
      %1935 = vperm.xlu0 %1934, %v1913
      %v1936 = vpop.permute.xlu0 %1935
      %1939 = vset.pattern.permute.xlu0 0
      %1940 = vperm.xlu0 %1939, %v1914
      %v1941 = vpop.permute.xlu0 %1940
      %1944 = vset.pattern.permute.xlu0 0
      %1945 = vperm.xlu0 %1944, %v1915
      %v1946 = vpop.permute.xlu0 %1945
      %1949 = vset.pattern.permute.xlu0 0
      %1950 = vperm.xlu0 %1949, %v1916
      %v1951 = vpop.permute.xlu0 %1950
      %1954 = vset.pattern.permute.xlu0 0
      %1955 = vperm.xlu0 %1954, %v1917
      %v1956 = vpop.permute.xlu0 %1955
      %v1974 = vunpack.c.l.b16 %v1894
      %v1975 = vunpack.c.h.b16 %v1894
      %v1976 = vunpack.c.l.b16 %v1895
      %v1977 = vunpack.c.h.b16 %v1895
      %v1978 = vunpack.c.l.b16 %v1896
      %v1979 = vunpack.c.h.b16 %v1896
      %v1980 = vunpack.c.l.b16 %v1897
      %v1981 = vunpack.c.h.b16 %v1897
      %v1982 = vunpack.c.l.b16 %v1898
      %v1983 = vunpack.c.h.b16 %v1898
      %v1984 = vunpack.c.l.b16 %v1899
      %v1985 = vunpack.c.h.b16 %v1899
      %v1986 = vunpack.c.l.b16 %v1900
      %v1987 = vunpack.c.h.b16 %v1900
      %v1988 = vunpack.c.l.b16 %v1901
      %v1989 = vunpack.c.h.b16 %v1901
      %v1990 = vunpack.c.l.b16 %v1902
      %v1991 = vunpack.c.h.b16 %v1902
      %v1992 = vunpack.c.l.b16 %v1903
      %v1993 = vunpack.c.h.b16 %v1903
      %v1994 = vunpack.c.l.b16 %v1904
      %v1995 = vunpack.c.h.b16 %v1904
      %v1996 = vunpack.c.l.b16 %v1905
      %v1997 = vunpack.c.h.b16 %v1905
      %v1998 = vunpack.c.l.b16 %v1906
      %v1999 = vunpack.c.h.b16 %v1906
      %v2000 = vunpack.c.l.b16 %v1907
      %v2001 = vunpack.c.h.b16 %v1907
      %v2002 = vunpack.c.l.b16 %v1908
      %v2003 = vunpack.c.h.b16 %v1908
      %v2004 = vunpack.c.l.b16 %v1909
      %v2005 = vunpack.c.h.b16 %v1909
      %v2006 = vpack.c.b16 %v1978, %v1974
      %v2007 = vpack.c.b16 %v1979, %v1975
      %v2008 = vpack.c.b16 %v1980, %v1976
      %v2009 = vpack.c.b16 %v1981, %v1977
      %v2010 = vpack.c.b16 %v1986, %v1982
      %v2011 = vpack.c.b16 %v1987, %v1983
      %v2012 = vpack.c.b16 %v1988, %v1984
      %v2013 = vpack.c.b16 %v1989, %v1985
      %v2014 = vpack.c.b16 %v1994, %v1990
      %v2015 = vpack.c.b16 %v1995, %v1991
      %v2016 = vpack.c.b16 %v1996, %v1992
      %v2017 = vpack.c.b16 %v1997, %v1993
      %v2018 = vpack.c.b16 %v2002, %v1998
      %v2019 = vpack.c.b16 %v2003, %v1999
      %v2020 = vpack.c.b16 %v2004, %v2000
      %v2021 = vpack.c.b16 %v2005, %v2001
      %2038 = vmatprep.subr.bf16.mxu0 0
      %2039 = vmatpush1.bf16.msra.mxu0 %v1782
      %2040 = vmatprep.subr.bf16.mxu0 0
      %2041 = vmatpush1.bf16.msra.mxu0 %v1783
      %2042 = vmatprep.subr.bf16.mxu0 0
      %2043 = vmatpush1.bf16.msra.mxu0 %v1784
      %2044 = vmatprep.subr.bf16.mxu0 0
      %2045 = vmatpush1.bf16.msra.mxu0 %v1785
      %2046 = vmatprep.subr.bf16.mxu0 0
      %2047 = vmatpush1.bf16.msra.mxu0 %v1786
      %2048 = vmatprep.subr.bf16.mxu0 0
      %2049 = vmatpush1.bf16.msra.mxu0 %v1787
      %2050 = vmatprep.subr.bf16.mxu0 0
      %2051 = vmatpush1.bf16.msra.mxu0 %v1788
      %2052 = vmatprep.subr.bf16.mxu0 0
      %2053 = vmatpush1.bf16.msra.mxu0 %v1789
      %2054 = vmatprep.subr.bf16.mxu0 0
      %2055 = vmatpush1.bf16.msra.mxu0 %v1799
      %2056 = vmatprep.subr.bf16.mxu0 0
      %2057 = vmatpush1.bf16.msra.mxu0 %v1801
      %2058 = vmatprep.subr.bf16.mxu0 0
      %2059 = vmatpush1.bf16.msra.mxu0 %v1803
      %2060 = vmatprep.subr.bf16.mxu0 0
      %2061 = vmatpush1.bf16.msra.mxu0 %v1805
      %2062 = vmatprep.subr.bf16.mxu0 0
      %2063 = vmatpush1.bf16.msra.mxu0 %v1807
      %2064 = vmatprep.subr.bf16.mxu0 0
      %2065 = vmatpush1.bf16.msra.mxu0 %v1809
      %2066 = vmatprep.subr.bf16.mxu0 0
      %2067 = vmatpush1.bf16.msra.mxu0 %v1811
      %2068 = vmatprep.subr.bf16.mxu0 0
      %2069 = vmatpush1.bf16.msra.mxu0 %v1813
      %2070 = vmatprep.mubr.bf16.mxu0 %v2007
      %2071 = vmatmul.mubr.bf16.gmra.mrb[0].mxu0 %v2006
      %v2072 = vpop.f32.mrb[0].mxu0
      %v2073 = vadd.f32 %v1921, %v2072
      %v2074 = vpop.f32.mrb[0].mxu0
      %v2075 = vpop.f32.mrb[0].mxu0
      %v2076 = vadd.f32 %v1926, %v2075
      %v2077 = vpop.f32.mrb[0].mxu0
      %2078 = vmatprep.mubr.bf16.mxu0 %v2011
      %2079 = vmatmul.mubr.bf16.gmra.mrb[0].mxu0 %v2010
      %v2080 = vpop.f32.mrb[0].mxu0
      %v2081 = vadd.f32 %v1931, %v2080
      %v2082 = vpop.f32.mrb[0].mxu0
      %v2083 = vpop.f32.mrb[0].mxu0
      %v2084 = vadd.f32 %v1936, %v2083
      %v2085 = vpop.f32.mrb[0].mxu0
      %2086 = vmatprep.mubr.bf16.mxu0 %v2015
      %2087 = vmatmul.mubr.bf16.gmra.mrb[0].mxu0 %v2014
      %v2088 = vpop.f32.mrb[0].mxu0
      %v2089 = vadd.f32 %v1941, %v2088
      %v2090 = vpop.f32.mrb[0].mxu0
      %v2091 = vpop.f32.mrb[0].mxu0
      %v2092 = vadd.f32 %v1946, %v2091
      %v2093 = vpop.f32.mrb[0].mxu0
      %2094 = vmatprep.mubr.bf16.mxu0 %v2019
      %2095 = vmatmul.mubr.bf16.gmra.mrb[0].mxu0 %v2018
      %v2096 = vpop.f32.mrb[0].mxu0
      %v2097 = vadd.f32 %v1951, %v2096
      %v2098 = vpop.f32.mrb[0].mxu0
      %v2099 = vpop.f32.mrb[0].mxu0
      %v2100 = vadd.f32 %v1956, %v2099
      %v2101 = vpop.f32.mrb[0].mxu0
      %2102 = vdwg.mxu0
      %2103 = vmatprep.subr.bf16.mxu0 0
      %2104 = vmatpush1.bf16.msra.mxu0 %v1854
      %2105 = vmatprep.subr.bf16.mxu0 0
      %2106 = vmatpush1.bf16.msra.mxu0 %v1855
      %2107 = vmatprep.subr.bf16.mxu0 0
      %2108 = vmatpush1.bf16.msra.mxu0 %v1856
      %2109 = vmatprep.subr.bf16.mxu0 0
      %2110 = vmatpush1.bf16.msra.mxu0 %v1857
      %2111 = vmatprep.subr.bf16.mxu0 0
      %2112 = vmatpush1.bf16.msra.mxu0 %v1858
      %2113 = vmatprep.subr.bf16.mxu0 0
      %2114 = vmatpush1.bf16.msra.mxu0 %v1859
      %2115 = vmatprep.subr.bf16.mxu0 0
      %2116 = vmatpush1.bf16.msra.mxu0 %v1860
      %2117 = vmatprep.subr.bf16.mxu0 0
      %2118 = vmatpush1.bf16.msra.mxu0 %v1861
      %2119 = vmatprep.subr.bf16.mxu0 0
      %2120 = vmatpush1.bf16.msra.mxu0 %v1871
      %2121 = vmatprep.subr.bf16.mxu0 0
      %2122 = vmatpush1.bf16.msra.mxu0 %v1873
      %2123 = vmatprep.subr.bf16.mxu0 0
      %2124 = vmatpush1.bf16.msra.mxu0 %v1875
      %2125 = vmatprep.subr.bf16.mxu0 0
      %2126 = vmatpush1.bf16.msra.mxu0 %v1877
      %2127 = vmatprep.subr.bf16.mxu0 0
      %2128 = vmatpush1.bf16.msra.mxu0 %v1879
      %2129 = vmatprep.subr.bf16.mxu0 0
      %2130 = vmatpush1.bf16.msra.mxu0 %v1881
      %2131 = vmatprep.subr.bf16.mxu0 0
      %2132 = vmatpush1.bf16.msra.mxu0 %v1883
      %2133 = vmatprep.subr.bf16.mxu0 0
      %2134 = vmatpush1.bf16.msra.mxu0 %v1885
      %2135 = vmatprep.mubr.bf16.mxu0 %v2009
      %2136 = vmatmul.mubr.bf16.gmra.mrb[0].mxu0 %v2008
      %v2137 = vpop.f32.mrb[0].mxu0
      %v2138 = vadd.f32 %v2073, %v2137
      %v2139 = vpop.f32.mrb[0].mxu0
      %v2140 = vpop.f32.mrb[0].mxu0
      %v2141 = vadd.f32 %v2076, %v2140
      %v2142 = vpop.f32.mrb[0].mxu0
      %2143 = vmatprep.mubr.bf16.mxu0 %v2013
      %2144 = vmatmul.mubr.bf16.gmra.mrb[0].mxu0 %v2012
      %v2145 = vpop.f32.mrb[0].mxu0
      %v2146 = vadd.f32 %v2081, %v2145
      %v2147 = vpop.f32.mrb[0].mxu0
      %v2148 = vpop.f32.mrb[0].mxu0
      %v2149 = vadd.f32 %v2084, %v2148
      %v2150 = vpop.f32.mrb[0].mxu0
      %2151 = vmatprep.mubr.bf16.mxu0 %v2017
      %2152 = vmatmul.mubr.bf16.gmra.mrb[0].mxu0 %v2016
      %v2153 = vpop.f32.mrb[0].mxu0
      %v2154 = vadd.f32 %v2089, %v2153
      %v2155 = vpop.f32.mrb[0].mxu0
      %v2156 = vpop.f32.mrb[0].mxu0
      %v2157 = vadd.f32 %v2092, %v2156
      %v2158 = vpop.f32.mrb[0].mxu0
      %2159 = vmatprep.mubr.bf16.mxu0 %v2021
      %2160 = vmatmul.mubr.bf16.gmra.mrb[0].mxu0 %v2020
      %v2161 = vpop.f32.mrb[0].mxu0
      %v2162 = vadd.f32 %v2097, %v2161
      %v2163 = vpop.f32.mrb[0].mxu0
      %v2164 = vpop.f32.mrb[0].mxu0
      %v2165 = vadd.f32 %v2100, %v2164
      %v2166 = vpop.f32.mrb[0].mxu0
      %2167 = vdwg.mxu0
      %v2168 = vmax.f32 %v2138, 0.0
      %v2169 = vmax.f32 %v2141, 0.0
      %v2170 = vmax.f32 %v2146, 0.0
      %v2171 = vmax.f32 %v2149, 0.0
      %v2172 = vmax.f32 %v2154, 0.0
      %v2173 = vmax.f32 %v2157, 0.0
      %v2174 = vmax.f32 %v2162, 0.0
      %v2175 = vmax.f32 %v2165, 0.0
      %v2176 = vsel %vm731, %v2168, -inf
      %v2177 = vsel %vm731, %v2169, -inf
      %v2178 = vsel %vm731, %v2170, -inf
      %v2179 = vsel %vm731, %v2171, -inf
      %v2180 = vsel %vm731, %v2172, -inf
      %v2181 = vmax.f32 %v2176, %v2180
      %v2182 = vsel %vm731, %v2173, -inf
      %v2183 = vmax.f32 %v2177, %v2182
      %v2184 = vsel %vm731, %v2174, -inf
      %v2185 = vmax.f32 %v2178, %v2184
      %v2186 = vsel %vm731, %v2175, -inf
      %v2187 = vmax.f32 %v2179, %v2186
      %v2188 = vmax.f32 %v2181, %v2183
      %v2189 = vmax.f32 %v2185, %v2187
      %v2190 = vmax.f32 %v2188, %v2189
      %v2191 = vrot.slane %v2190, 4
      %v2192 = vmax.f32 %v2190, %v2191
      %v2193 = vrot.slane %v2192, 2
      %v2194 = vmax.f32 %v2192, %v2193
      %v2195 = vrot.slane %v2194, 1
      %v2196 = vmax.f32 %v2194, %v2195
      %2197 = vst.msk [vmem:[%s270 + $0x3] sm:$0x1] %vm753, %v2196
      %v2198 = vld [vmem:[%s1733] sm:$0xf]
      %v2199 = vld [vmem:[%s1733 + $0x4] sm:$0xf]
      %v2200 = vld [vmem:[%s1733 + $0x8] sm:$0xf]
      %v2201 = vld [vmem:[%s1733 + $0xc] sm:$0xf]
      %v2202 = vld [vmem:[%s1733 + $0x10] sm:$0xf]
      %v2203 = vld [vmem:[%s1733 + $0x14] sm:$0xf]
      %v2204 = vld [vmem:[%s1733 + $0x18] sm:$0xf]
      %v2205 = vld [vmem:[%s1733 + $0x1c] sm:$0xf]
      %v2206 = vld [vmem:[%s1733 + $0x20] sm:$0xf]
      %v2207 = vld [vmem:[%s1733 + $0x24] sm:$0xf]
      %v2208 = vld [vmem:[%s1733 + $0x28] sm:$0xf]
      %v2209 = vld [vmem:[%s1733 + $0x2c] sm:$0xf]
      %v2210 = vld [vmem:[%s1733 + $0x30] sm:$0xf]
      %v2211 = vld [vmem:[%s1733 + $0x34] sm:$0xf]
      %v2212 = vld [vmem:[%s1733 + $0x38] sm:$0xf]
      %v2213 = vld [vmem:[%s1733 + $0x3c] sm:$0xf]
      %s2214 = scalar_lea.vmem %s252, 320
      %v2215 = vld [vmem:[%s2214] sm:$0xf]
      %v2216 = vld [vmem:[%s2214 + $0x4] sm:$0xf]
      %v2217 = vld [vmem:[%s2214 + $0x8] sm:$0xf]
      %v2218 = vld [vmem:[%s2214 + $0xc] sm:$0xf]
      %v2219 = vld [vmem:[%s2214 + $0x10] sm:$0xf]
      %v2220 = vld [vmem:[%s2214 + $0x14] sm:$0xf]
      %v2221 = vld [vmem:[%s2214 + $0x18] sm:$0xf]
      %v2222 = vld [vmem:[%s2214 + $0x1c] sm:$0xf]
      %v2223 = vld [vmem:[%s2214 + $0x20] sm:$0xf]
      %v2224 = vld [vmem:[%s2214 + $0x24] sm:$0xf]
      %v2225 = vld [vmem:[%s2214 + $0x28] sm:$0xf]
      %v2226 = vld [vmem:[%s2214 + $0x2c] sm:$0xf]
      %v2227 = vld [vmem:[%s2214 + $0x30] sm:$0xf]
      %v2228 = vld [vmem:[%s2214 + $0x34] sm:$0xf]
      %v2229 = vld [vmem:[%s2214 + $0x38] sm:$0xf]
      %v2230 = vld [vmem:[%s2214 + $0x3c] sm:$0xf]
      %v2247 = vunpack.c.l.b16 %v2198
      %v2248 = vunpack.c.l.b16 %v2199
      %v2249 = vunpack.c.l.b16 %v2200
      %v2250 = vunpack.c.l.b16 %v2201
      %v2251 = vunpack.c.l.b16 %v2202
      %v2252 = vunpack.c.l.b16 %v2203
      %v2253 = vunpack.c.l.b16 %v2204
      %v2254 = vunpack.c.l.b16 %v2205
      %v2255 = vunpack.c.l.b16 %v2206
      %v2256 = vunpack.c.l.b16 %v2207
      %v2257 = vunpack.c.l.b16 %v2208
      %v2258 = vunpack.c.l.b16 %v2209
      %v2259 = vunpack.c.l.b16 %v2210
      %v2260 = vunpack.c.l.b16 %v2211
      %v2261 = vunpack.c.l.b16 %v2212
      %v2262 = vunpack.c.l.b16 %v2213
      %v2263 = vpack.c.b16 %v2248, %v2247
      %v2264 = vpack.c.b16 %v2250, %v2249
      %v2265 = vpack.c.b16 %v2252, %v2251
      %v2266 = vpack.c.b16 %v2254, %v2253
      %v2267 = vpack.c.b16 %v2256, %v2255
      %v2268 = vpack.c.b16 %v2258, %v2257
      %v2269 = vpack.c.b16 %v2260, %v2259
      %v2270 = vpack.c.b16 %v2262, %v2261
      %2279 = vrot.lane.b32.xlu0 %v2263, 127
      %v2280 = vpop.permute.xlu0 %2279
      %2281 = vrot.lane.b32.xlu0 %v2264, 127
      %v2282 = vpop.permute.xlu0 %2281
      %2283 = vrot.lane.b32.xlu0 %v2265, 127
      %v2284 = vpop.permute.xlu0 %2283
      %2285 = vrot.lane.b32.xlu0 %v2266, 127
      %v2286 = vpop.permute.xlu0 %2285
      %2287 = vrot.lane.b32.xlu0 %v2267, 127
      %v2288 = vpop.permute.xlu0 %2287
      %2289 = vrot.lane.b32.xlu0 %v2268, 127
      %v2290 = vpop.permute.xlu0 %2289
      %2291 = vrot.lane.b32.xlu0 %v2269, 127
      %v2292 = vpop.permute.xlu0 %2291
      %2293 = vrot.lane.b32.xlu0 %v2270, 127
      %v2294 = vpop.permute.xlu0 %2293
      %v2319 = vunpack.c.l.b16 %v2215
      %v2320 = vunpack.c.l.b16 %v2216
      %v2321 = vunpack.c.l.b16 %v2217
      %v2322 = vunpack.c.l.b16 %v2218
      %v2323 = vunpack.c.l.b16 %v2219
      %v2324 = vunpack.c.l.b16 %v2220
      %v2325 = vunpack.c.l.b16 %v2221
      %v2326 = vunpack.c.l.b16 %v2222
      %v2327 = vunpack.c.l.b16 %v2223
      %v2328 = vunpack.c.l.b16 %v2224
      %v2329 = vunpack.c.l.b16 %v2225
      %v2330 = vunpack.c.l.b16 %v2226
      %v2331 = vunpack.c.l.b16 %v2227
      %v2332 = vunpack.c.l.b16 %v2228
      %v2333 = vunpack.c.l.b16 %v2229
      %v2334 = vunpack.c.l.b16 %v2230
      %v2335 = vpack.c.b16 %v2320, %v2319
      %v2336 = vpack.c.b16 %v2322, %v2321
      %v2337 = vpack.c.b16 %v2324, %v2323
      %v2338 = vpack.c.b16 %v2326, %v2325
      %v2339 = vpack.c.b16 %v2328, %v2327
      %v2340 = vpack.c.b16 %v2330, %v2329
      %v2341 = vpack.c.b16 %v2332, %v2331
      %v2342 = vpack.c.b16 %v2334, %v2333
      %2351 = vrot.lane.b32.xlu0 %v2335, 127
      %v2352 = vpop.permute.xlu0 %2351
      %2353 = vrot.lane.b32.xlu0 %v2336, 127
      %v2354 = vpop.permute.xlu0 %2353
      %2355 = vrot.lane.b32.xlu0 %v2337, 127
      %v2356 = vpop.permute.xlu0 %2355
      %2357 = vrot.lane.b32.xlu0 %v2338, 127
      %v2358 = vpop.permute.xlu0 %2357
      %2359 = vrot.lane.b32.xlu0 %v2339, 127
      %v2360 = vpop.permute.xlu0 %2359
      %2361 = vrot.lane.b32.xlu0 %v2340, 127
      %v2362 = vpop.permute.xlu0 %2361
      %2363 = vrot.lane.b32.xlu0 %v2341, 127
      %v2364 = vpop.permute.xlu0 %2363
      %2365 = vrot.lane.b32.xlu0 %v2342, 127
      %v2366 = vpop.permute.xlu0 %2365
      %v2375 = vld [vmem:[%s2] sm:$0xff]
      %v2376 = vld [vmem:[%s2 + $0x8] sm:$0xff]
      %v2377 = vld [vmem:[%s2 + $0x10] sm:$0xff]
      %v2378 = vld [vmem:[%s2 + $0x18] sm:$0xff]
      %v2379 = vld [vmem:[%s2 + $0x20] sm:$0xff]
      %v2380 = vld [vmem:[%s2 + $0x28] sm:$0xff]
      %v2381 = vld [vmem:[%s2 + $0x30] sm:$0xff]
      %v2382 = vld [vmem:[%s2 + $0x38] sm:$0xff]
      %v2383 = vld [vmem:[%s2 + $0x40] sm:$0xff]
      %v2384 = vld [vmem:[%s2 + $0x48] sm:$0xff]
      %v2385 = vld [vmem:[%s2 + $0x50] sm:$0xff]
      %v2386 = vld [vmem:[%s2 + $0x58] sm:$0xff]
      %v2387 = vld [vmem:[%s2 + $0x60] sm:$0xff]
      %v2388 = vld [vmem:[%s2 + $0x68] sm:$0xff]
      %v2389 = vld [vmem:[%s2 + $0x70] sm:$0xff]
      %v2390 = vld [vmem:[%s2 + $0x78] sm:$0xff]
      %v2391 = vld [vmem:[%s3] sm:$0xff]
      %v2392 = vld [vmem:[%s3 + $0x8] sm:$0xff]
      %v2393 = vld [vmem:[%s3 + $0x10] sm:$0xff]
      %v2394 = vld [vmem:[%s3 + $0x18] sm:$0xff]
      %v2395 = vld [vmem:[%s3 + $0x20] sm:$0xff]
      %v2396 = vld [vmem:[%s3 + $0x28] sm:$0xff]
      %v2397 = vld [vmem:[%s3 + $0x30] sm:$0xff]
      %v2398 = vld [vmem:[%s3 + $0x38] sm:$0xff]
      %2400 = vset.pattern.permute.xlu0 0
      %2401 = vperm.xlu0 %2400, %v2391
      %v2402 = vpop.permute.xlu0 %2401
      %2405 = vset.pattern.permute.xlu0 0
      %2406 = vperm.xlu0 %2405, %v2392
      %v2407 = vpop.permute.xlu0 %2406
      %2410 = vset.pattern.permute.xlu0 0
      %2411 = vperm.xlu0 %2410, %v2393
      %v2412 = vpop.permute.xlu0 %2411
      %2415 = vset.pattern.permute.xlu0 0
      %2416 = vperm.xlu0 %2415, %v2394
      %v2417 = vpop.permute.xlu0 %2416
      %2420 = vset.pattern.permute.xlu0 0
      %2421 = vperm.xlu0 %2420, %v2395
      %v2422 = vpop.permute.xlu0 %2421
      %2425 = vset.pattern.permute.xlu0 0
      %2426 = vperm.xlu0 %2425, %v2396
      %v2427 = vpop.permute.xlu0 %2426
      %2430 = vset.pattern.permute.xlu0 0
      %2431 = vperm.xlu0 %2430, %v2397
      %v2432 = vpop.permute.xlu0 %2431
      %2435 = vset.pattern.permute.xlu0 0
      %2436 = vperm.xlu0 %2435, %v2398
      %v2437 = vpop.permute.xlu0 %2436
      %v2455 = vunpack.c.l.b16 %v2375
      %v2456 = vunpack.c.h.b16 %v2375
      %v2457 = vunpack.c.l.b16 %v2376
      %v2458 = vunpack.c.h.b16 %v2376
      %v2459 = vunpack.c.l.b16 %v2377
      %v2460 = vunpack.c.h.b16 %v2377
      %v2461 = vunpack.c.l.b16 %v2378
      %v2462 = vunpack.c.h.b16 %v2378
      %v2463 = vunpack.c.l.b16 %v2379
      %v2464 = vunpack.c.h.b16 %v2379
      %v2465 = vunpack.c.l.b16 %v2380
      %v2466 = vunpack.c.h.b16 %v2380
      %v2467 = vunpack.c.l.b16 %v2381
      %v2468 = vunpack.c.h.b16 %v2381
      %v2469 = vunpack.c.l.b16 %v2382
      %v2470 = vunpack.c.h.b16 %v2382
      %v2471 = vunpack.c.l.b16 %v2383
      %v2472 = vunpack.c.h.b16 %v2383
      %v2473 = vunpack.c.l.b16 %v2384
      %v2474 = vunpack.c.h.b16 %v2384
      %v2475 = vunpack.c.l.b16 %v2385
      %v2476 = vunpack.c.h.b16 %v2385
      %v2477 = vunpack.c.l.b16 %v2386
      %v2478 = vunpack.c.h.b16 %v2386
      %v2479 = vunpack.c.l.b16 %v2387
      %v2480 = vunpack.c.h.b16 %v2387
      %v2481 = vunpack.c.l.b16 %v2388
      %v2482 = vunpack.c.h.b16 %v2388
      %v2483 = vunpack.c.l.b16 %v2389
      %v2484 = vunpack.c.h.b16 %v2389
      %v2485 = vunpack.c.l.b16 %v2390
      %v2486 = vunpack.c.h.b16 %v2390
      %v2487 = vpack.c.b16 %v2459, %v2455
      %v2488 = vpack.c.b16 %v2460, %v2456
      %v2489 = vpack.c.b16 %v2461, %v2457
      %v2490 = vpack.c.b16 %v2462, %v2458
      %v2491 = vpack.c.b16 %v2467, %v2463
      %v2492 = vpack.c.b16 %v2468, %v2464
      %v2493 = vpack.c.b16 %v2469, %v2465
      %v2494 = vpack.c.b16 %v2470, %v2466
      %v2495 = vpack.c.b16 %v2475, %v2471
      %v2496 = vpack.c.b16 %v2476, %v2472
      %v2497 = vpack.c.b16 %v2477, %v2473
      %v2498 = vpack.c.b16 %v2478, %v2474
      %v2499 = vpack.c.b16 %v2483, %v2479
      %v2500 = vpack.c.b16 %v2484, %v2480
      %v2501 = vpack.c.b16 %v2485, %v2481
      %v2502 = vpack.c.b16 %v2486, %v2482
      %2519 = vmatprep.subr.bf16.mxu0 0
      %2520 = vmatpush1.bf16.msra.mxu0 %v2263
      %2521 = vmatprep.subr.bf16.mxu0 0
      %2522 = vmatpush1.bf16.msra.mxu0 %v2264
      %2523 = vmatprep.subr.bf16.mxu0 0
      %2524 = vmatpush1.bf16.msra.mxu0 %v2265
      %2525 = vmatprep.subr.bf16.mxu0 0
      %2526 = vmatpush1.bf16.msra.mxu0 %v2266
      %2527 = vmatprep.subr.bf16.mxu0 0
      %2528 = vmatpush1.bf16.msra.mxu0 %v2267
      %2529 = vmatprep.subr.bf16.mxu0 0
      %2530 = vmatpush1.bf16.msra.mxu0 %v2268
      %2531 = vmatprep.subr.bf16.mxu0 0
      %2532 = vmatpush1.bf16.msra.mxu0 %v2269
      %2533 = vmatprep.subr.bf16.mxu0 0
      %2534 = vmatpush1.bf16.msra.mxu0 %v2270
      %2535 = vmatprep.subr.bf16.mxu0 0
      %2536 = vmatpush1.bf16.msra.mxu0 %v2280
      %2537 = vmatprep.subr.bf16.mxu0 0
      %2538 = vmatpush1.bf16.msra.mxu0 %v2282
      %2539 = vmatprep.subr.bf16.mxu0 0
      %2540 = vmatpush1.bf16.msra.mxu0 %v2284
      %2541 = vmatprep.subr.bf16.mxu0 0
      %2542 = vmatpush1.bf16.msra.mxu0 %v2286
      %2543 = vmatprep.subr.bf16.mxu0 0
      %2544 = vmatpush1.bf16.msra.mxu0 %v2288
      %2545 = vmatprep.subr.bf16.mxu0 0
      %2546 = vmatpush1.bf16.msra.mxu0 %v2290
      %2547 = vmatprep.subr.bf16.mxu0 0
      %2548 = vmatpush1.bf16.msra.mxu0 %v2292
      %2549 = vmatprep.subr.bf16.mxu0 0
      %2550 = vmatpush1.bf16.msra.mxu0 %v2294
      %2551 = vmatprep.mubr.bf16.mxu0 %v2488
      %2552 = vmatmul.mubr.bf16.gmra.mrb[0].mxu0 %v2487
      %v2553 = vpop.f32.mrb[0].mxu0
      %v2554 = vadd.f32 %v2402, %v2553
      %v2555 = vpop.f32.mrb[0].mxu0
      %v2556 = vpop.f32.mrb[0].mxu0
      %v2557 = vadd.f32 %v2407, %v2556
      %v2558 = vpop.f32.mrb[0].mxu0
      %2559 = vmatprep.mubr.bf16.mxu0 %v2492
      %2560 = vmatmul.mubr.bf16.gmra.mrb[0].mxu0 %v2491
      %v2561 = vpop.f32.mrb[0].mxu0
      %v2562 = vadd.f32 %v2412, %v2561
      %v2563 = vpop.f32.mrb[0].mxu0
      %v2564 = vpop.f32.mrb[0].mxu0
      %v2565 = vadd.f32 %v2417, %v2564
      %v2566 = vpop.f32.mrb[0].mxu0
      %2567 = vmatprep.mubr.bf16.mxu0 %v2496
      %2568 = vmatmul.mubr.bf16.gmra.mrb[0].mxu0 %v2495
      %v2569 = vpop.f32.mrb[0].mxu0
      %v2570 = vadd.f32 %v2422, %v2569
      %v2571 = vpop.f32.mrb[0].mxu0
      %v2572 = vpop.f32.mrb[0].mxu0
      %v2573 = vadd.f32 %v2427, %v2572
      %v2574 = vpop.f32.mrb[0].mxu0
      %2575 = vmatprep.mubr.bf16.mxu0 %v2500
      %2576 = vmatmul.mubr.bf16.gmra.mrb[0].mxu0 %v2499
      %v2577 = vpop.f32.mrb[0].mxu0
      %v2578 = vadd.f32 %v2432, %v2577
      %v2579 = vpop.f32.mrb[0].mxu0
      %v2580 = vpop.f32.mrb[0].mxu0
      %v2581 = vadd.f32 %v2437, %v2580
      %v2582 = vpop.f32.mrb[0].mxu0
      %2583 = vdwg.mxu0
      %2584 = vmatprep.subr.bf16.mxu0 0
      %2585 = vmatpush1.bf16.msra.mxu0 %v2335
      %2586 = vmatprep.subr.bf16.mxu0 0
      %2587 = vmatpush1.bf16.msra.mxu0 %v2336
      %2588 = vmatprep.subr.bf16.mxu0 0
      %2589 = vmatpush1.bf16.msra.mxu0 %v2337
      %2590 = vmatprep.subr.bf16.mxu0 0
      %2591 = vmatpush1.bf16.msra.mxu0 %v2338
      %2592 = vmatprep.subr.bf16.mxu0 0
      %2593 = vmatpush1.bf16.msra.mxu0 %v2339
      %2594 = vmatprep.subr.bf16.mxu0 0
      %2595 = vmatpush1.bf16.msra.mxu0 %v2340
      %2596 = vmatprep.subr.bf16.mxu0 0
      %2597 = vmatpush1.bf16.msra.mxu0 %v2341
      %2598 = vmatprep.subr.bf16.mxu0 0
      %2599 = vmatpush1.bf16.msra.mxu0 %v2342
      %2600 = vmatprep.subr.bf16.mxu0 0
      %2601 = vmatpush1.bf16.msra.mxu0 %v2352
      %2602 = vmatprep.subr.bf16.mxu0 0
      %2603 = vmatpush1.bf16.msra.mxu0 %v2354
      %2604 = vmatprep.subr.bf16.mxu0 0
      %2605 = vmatpush1.bf16.msra.mxu0 %v2356
      %2606 = vmatprep.subr.bf16.mxu0 0
      %2607 = vmatpush1.bf16.msra.mxu0 %v2358
      %2608 = vmatprep.subr.bf16.mxu0 0
      %2609 = vmatpush1.bf16.msra.mxu0 %v2360
      %2610 = vmatprep.subr.bf16.mxu0 0
      %2611 = vmatpush1.bf16.msra.mxu0 %v2362
      %2612 = vmatprep.subr.bf16.mxu0 0
      %2613 = vmatpush1.bf16.msra.mxu0 %v2364
      %2614 = vmatprep.subr.bf16.mxu0 0
      %2615 = vmatpush1.bf16.msra.mxu0 %v2366
      %2616 = vmatprep.mubr.bf16.mxu0 %v2490
      %2617 = vmatmul.mubr.bf16.gmra.mrb[0].mxu0 %v2489
      %v2618 = vpop.f32.mrb[0].mxu0
      %v2619 = vadd.f32 %v2554, %v2618
      %v2620 = vpop.f32.mrb[0].mxu0
      %v2621 = vpop.f32.mrb[0].mxu0
      %v2622 = vadd.f32 %v2557, %v2621
      %v2623 = vpop.f32.mrb[0].mxu0
      %2624 = vmatprep.mubr.bf16.mxu0 %v2494
      %2625 = vmatmul.mubr.bf16.gmra.mrb[0].mxu0 %v2493
      %v2626 = vpop.f32.mrb[0].mxu0
      %v2627 = vadd.f32 %v2562, %v2626
      %v2628 = vpop.f32.mrb[0].mxu0
      %v2629 = vpop.f32.mrb[0].mxu0
      %v2630 = vadd.f32 %v2565, %v2629
      %v2631 = vpop.f32.mrb[0].mxu0
      %2632 = vmatprep.mubr.bf16.mxu0 %v2498
      %2633 = vmatmul.mubr.bf16.gmra.mrb[0].mxu0 %v2497
      %v2634 = vpop.f32.mrb[0].mxu0
      %v2635 = vadd.f32 %v2570, %v2634
      %v2636 = vpop.f32.mrb[0].mxu0
      %v2637 = vpop.f32.mrb[0].mxu0
      %v2638 = vadd.f32 %v2573, %v2637
      %v2639 = vpop.f32.mrb[0].mxu0
      %2640 = vmatprep.mubr.bf16.mxu0 %v2502
      %2641 = vmatmul.mubr.bf16.gmra.mrb[0].mxu0 %v2501
      %v2642 = vpop.f32.mrb[0].mxu0
      %v2643 = vadd.f32 %v2578, %v2642
      %v2644 = vpop.f32.mrb[0].mxu0
      %v2645 = vpop.f32.mrb[0].mxu0
      %v2646 = vadd.f32 %v2581, %v2645
      %v2647 = vpop.f32.mrb[0].mxu0
      %2648 = vdwg.mxu0
      %v2649 = vmax.f32 %v2619, 0.0
      %v2650 = vmax.f32 %v2622, 0.0
      %v2651 = vmax.f32 %v2627, 0.0
      %v2652 = vmax.f32 %v2630, 0.0
      %v2653 = vmax.f32 %v2635, 0.0
      %v2654 = vmax.f32 %v2638, 0.0
      %v2655 = vmax.f32 %v2643, 0.0
      %v2656 = vmax.f32 %v2646, 0.0
      %v2657 = vsel %vm731, %v2649, -inf
      %v2658 = vsel %vm731, %v2650, -inf
      %v2659 = vsel %vm731, %v2651, -inf
      %v2660 = vsel %vm731, %v2652, -inf
      %v2661 = vsel %vm731, %v2653, -inf
      %v2662 = vmax.f32 %v2657, %v2661
      %v2663 = vsel %vm731, %v2654, -inf
      %v2664 = vmax.f32 %v2658, %v2663
      %v2665 = vsel %vm731, %v2655, -inf
      %v2666 = vmax.f32 %v2659, %v2665
      %v2667 = vsel %vm731, %v2656, -inf
      %v2668 = vmax.f32 %v2660, %v2667
      %v2669 = vmax.f32 %v2662, %v2664
      %v2670 = vmax.f32 %v2666, %v2668
      %v2671 = vmax.f32 %v2669, %v2670
      %v2672 = vrot.slane %v2671, 4
      %v2673 = vmax.f32 %v2671, %v2672
      %v2674 = vrot.slane %v2673, 2
      %v2675 = vmax.f32 %v2673, %v2674
      %v2676 = vrot.slane %v2675, 1
      %v2677 = vmax.f32 %v2675, %v2676
      %2678 = vst.msk [vmem:[%s270 + $0x4] sm:$0x1] %vm753, %v2677
      %v2679 = vld [vmem:[%s2214] sm:$0xf]
      %v2680 = vld [vmem:[%s2214 + $0x4] sm:$0xf]
      %v2681 = vld [vmem:[%s2214 + $0x8] sm:$0xf]
      %v2682 = vld [vmem:[%s2214 + $0xc] sm:$0xf]
      %v2683 = vld [vmem:[%s2214 + $0x10] sm:$0xf]
      %v2684 = vld [vmem:[%s2214 + $0x14] sm:$0xf]
      %v2685 = vld [vmem:[%s2214 + $0x18] sm:$0xf]
      %v2686 = vld [vmem:[%s2214 + $0x1c] sm:$0xf]
      %v2687 = vld [vmem:[%s2214 + $0x20] sm:$0xf]
      %v2688 = vld [vmem:[%s2214 + $0x24] sm:$0xf]
      %v2689 = vld [vmem:[%s2214 + $0x28] sm:$0xf]
      %v2690 = vld [vmem:[%s2214 + $0x2c] sm:$0xf]
      %v2691 = vld [vmem:[%s2214 + $0x30] sm:$0xf]
      %v2692 = vld [vmem:[%s2214 + $0x34] sm:$0xf]
      %v2693 = vld [vmem:[%s2214 + $0x38] sm:$0xf]
      %v2694 = vld [vmem:[%s2214 + $0x3c] sm:$0xf]
      %s2695 = scalar_lea.vmem %s252, 384
      %v2696 = vld [vmem:[%s2695] sm:$0xf]
      %v2697 = vld [vmem:[%s2695 + $0x4] sm:$0xf]
      %v2698 = vld [vmem:[%s2695 + $0x8] sm:$0xf]
      %v2699 = vld [vmem:[%s2695 + $0xc] sm:$0xf]
      %v2700 = vld [vmem:[%s2695 + $0x10] sm:$0xf]
      %v2701 = vld [vmem:[%s2695 + $0x14] sm:$0xf]
      %v2702 = vld [vmem:[%s2695 + $0x18] sm:$0xf]
      %v2703 = vld [vmem:[%s2695 + $0x1c] sm:$0xf]
      %v2704 = vld [vmem:[%s2695 + $0x20] sm:$0xf]
      %v2705 = vld [vmem:[%s2695 + $0x24] sm:$0xf]
      %v2706 = vld [vmem:[%s2695 + $0x28] sm:$0xf]
      %v2707 = vld [vmem:[%s2695 + $0x2c] sm:$0xf]
      %v2708 = vld [vmem:[%s2695 + $0x30] sm:$0xf]
      %v2709 = vld [vmem:[%s2695 + $0x34] sm:$0xf]
      %v2710 = vld [vmem:[%s2695 + $0x38] sm:$0xf]
      %v2711 = vld [vmem:[%s2695 + $0x3c] sm:$0xf]
      %v2728 = vunpack.c.l.b16 %v2679
      %v2729 = vunpack.c.l.b16 %v2680
      %v2730 = vunpack.c.l.b16 %v2681
      %v2731 = vunpack.c.l.b16 %v2682
      %v2732 = vunpack.c.l.b16 %v2683
      %v2733 = vunpack.c.l.b16 %v2684
      %v2734 = vunpack.c.l.b16 %v2685
      %v2735 = vunpack.c.l.b16 %v2686
      %v2736 = vunpack.c.l.b16 %v2687
      %v2737 = vunpack.c.l.b16 %v2688
      %v2738 = vunpack.c.l.b16 %v2689
      %v2739 = vunpack.c.l.b16 %v2690
      %v2740 = vunpack.c.l.b16 %v2691
      %v2741 = vunpack.c.l.b16 %v2692
      %v2742 = vunpack.c.l.b16 %v2693
      %v2743 = vunpack.c.l.b16 %v2694
      %v2744 = vpack.c.b16 %v2729, %v2728
      %v2745 = vpack.c.b16 %v2731, %v2730
      %v2746 = vpack.c.b16 %v2733, %v2732
      %v2747 = vpack.c.b16 %v2735, %v2734
      %v2748 = vpack.c.b16 %v2737, %v2736
      %v2749 = vpack.c.b16 %v2739, %v2738
      %v2750 = vpack.c.b16 %v2741, %v2740
      %v2751 = vpack.c.b16 %v2743, %v2742
      %2760 = vrot.lane.b32.xlu0 %v2744, 127
      %v2761 = vpop.permute.xlu0 %2760
      %2762 = vrot.lane.b32.xlu0 %v2745, 127
      %v2763 = vpop.permute.xlu0 %2762
      %2764 = vrot.lane.b32.xlu0 %v2746, 127
      %v2765 = vpop.permute.xlu0 %2764
      %2766 = vrot.lane.b32.xlu0 %v2747, 127
      %v2767 = vpop.permute.xlu0 %2766
      %2768 = vrot.lane.b32.xlu0 %v2748, 127
      %v2769 = vpop.permute.xlu0 %2768
      %2770 = vrot.lane.b32.xlu0 %v2749, 127
      %v2771 = vpop.permute.xlu0 %2770
      %2772 = vrot.lane.b32.xlu0 %v2750, 127
      %v2773 = vpop.permute.xlu0 %2772
      %2774 = vrot.lane.b32.xlu0 %v2751, 127
      %v2775 = vpop.permute.xlu0 %2774
      %v2800 = vunpack.c.l.b16 %v2696
      %v2801 = vunpack.c.l.b16 %v2697
      %v2802 = vunpack.c.l.b16 %v2698
      %v2803 = vunpack.c.l.b16 %v2699
      %v2804 = vunpack.c.l.b16 %v2700
      %v2805 = vunpack.c.l.b16 %v2701
      %v2806 = vunpack.c.l.b16 %v2702
      %v2807 = vunpack.c.l.b16 %v2703
      %v2808 = vunpack.c.l.b16 %v2704
      %v2809 = vunpack.c.l.b16 %v2705
      %v2810 = vunpack.c.l.b16 %v2706
      %v2811 = vunpack.c.l.b16 %v2707
      %v2812 = vunpack.c.l.b16 %v2708
      %v2813 = vunpack.c.l.b16 %v2709
      %v2814 = vunpack.c.l.b16 %v2710
      %v2815 = vunpack.c.l.b16 %v2711
      %v2816 = vpack.c.b16 %v2801, %v2800
      %v2817 = vpack.c.b16 %v2803, %v2802
      %v2818 = vpack.c.b16 %v2805, %v2804
      %v2819 = vpack.c.b16 %v2807, %v2806
      %v2820 = vpack.c.b16 %v2809, %v2808
      %v2821 = vpack.c.b16 %v2811, %v2810
      %v2822 = vpack.c.b16 %v2813, %v2812
      %v2823 = vpack.c.b16 %v2815, %v2814
      %2832 = vrot.lane.b32.xlu0 %v2816, 127
      %v2833 = vpop.permute.xlu0 %2832
      %2834 = vrot.lane.b32.xlu0 %v2817, 127
      %v2835 = vpop.permute.xlu0 %2834
      %2836 = vrot.lane.b32.xlu0 %v2818, 127
      %v2837 = vpop.permute.xlu0 %2836
      %2838 = vrot.lane.b32.xlu0 %v2819, 127
      %v2839 = vpop.permute.xlu0 %2838
      %2840 = vrot.lane.b32.xlu0 %v2820, 127
      %v2841 = vpop.permute.xlu0 %2840
      %2842 = vrot.lane.b32.xlu0 %v2821, 127
      %v2843 = vpop.permute.xlu0 %2842
      %2844 = vrot.lane.b32.xlu0 %v2822, 127
      %v2845 = vpop.permute.xlu0 %2844
      %2846 = vrot.lane.b32.xlu0 %v2823, 127
      %v2847 = vpop.permute.xlu0 %2846
      %v2856 = vld [vmem:[%s2] sm:$0xff]
      %v2857 = vld [vmem:[%s2 + $0x8] sm:$0xff]
      %v2858 = vld [vmem:[%s2 + $0x10] sm:$0xff]
      %v2859 = vld [vmem:[%s2 + $0x18] sm:$0xff]
      %v2860 = vld [vmem:[%s2 + $0x20] sm:$0xff]
      %v2861 = vld [vmem:[%s2 + $0x28] sm:$0xff]
      %v2862 = vld [vmem:[%s2 + $0x30] sm:$0xff]
      %v2863 = vld [vmem:[%s2 + $0x38] sm:$0xff]
      %v2864 = vld [vmem:[%s2 + $0x40] sm:$0xff]
      %v2865 = vld [vmem:[%s2 + $0x48] sm:$0xff]
      %v2866 = vld [vmem:[%s2 + $0x50] sm:$0xff]
      %v2867 = vld [vmem:[%s2 + $0x58] sm:$0xff]
      %v2868 = vld [vmem:[%s2 + $0x60] sm:$0xff]
      %v2869 = vld [vmem:[%s2 + $0x68] sm:$0xff]
      %v2870 = vld [vmem:[%s2 + $0x70] sm:$0xff]
      %v2871 = vld [vmem:[%s2 + $0x78] sm:$0xff]
      %v2872 = vld [vmem:[%s3] sm:$0xff]
      %v2873 = vld [vmem:[%s3 + $0x8] sm:$0xff]
      %v2874 = vld [vmem:[%s3 + $0x10] sm:$0xff]
      %v2875 = vld [vmem:[%s3 + $0x18] sm:$0xff]
      %v2876 = vld [vmem:[%s3 + $0x20] sm:$0xff]
      %v2877 = vld [vmem:[%s3 + $0x28] sm:$0xff]
      %v2878 = vld [vmem:[%s3 + $0x30] sm:$0xff]
      %v2879 = vld [vmem:[%s3 + $0x38] sm:$0xff]
      %2881 = vset.pattern.permute.xlu0 0
      %2882 = vperm.xlu0 %2881, %v2872
      %v2883 = vpop.permute.xlu0 %2882
      %2886 = vset.pattern.permute.xlu0 0
      %2887 = vperm.xlu0 %2886, %v2873
      %v2888 = vpop.permute.xlu0 %2887
      %2891 = vset.pattern.permute.xlu0 0
      %2892 = vperm.xlu0 %2891, %v2874
      %v2893 = vpop.permute.xlu0 %2892
      %2896 = vset.pattern.permute.xlu0 0
      %2897 = vperm.xlu0 %2896, %v2875
      %v2898 = vpop.permute.xlu0 %2897
      %2901 = vset.pattern.permute.xlu0 0
      %2902 = vperm.xlu0 %2901, %v2876
      %v2903 = vpop.permute.xlu0 %2902
      %2906 = vset.pattern.permute.xlu0 0
      %2907 = vperm.xlu0 %2906, %v2877
      %v2908 = vpop.permute.xlu0 %2907
      %2911 = vset.pattern.permute.xlu0 0
      %2912 = vperm.xlu0 %2911, %v2878
      %v2913 = vpop.permute.xlu0 %2912
      %2916 = vset.pattern.permute.xlu0 0
      %2917 = vperm.xlu0 %2916, %v2879
      %v2918 = vpop.permute.xlu0 %2917
      %v2936 = vunpack.c.l.b16 %v2856
      %v2937 = vunpack.c.h.b16 %v2856
      %v2938 = vunpack.c.l.b16 %v2857
      %v2939 = vunpack.c.h.b16 %v2857
      %v2940 = vunpack.c.l.b16 %v2858
      %v2941 = vunpack.c.h.b16 %v2858
      %v2942 = vunpack.c.l.b16 %v2859
      %v2943 = vunpack.c.h.b16 %v2859
      %v2944 = vunpack.c.l.b16 %v2860
      %v2945 = vunpack.c.h.b16 %v2860
      %v2946 = vunpack.c.l.b16 %v2861
      %v2947 = vunpack.c.h.b16 %v2861
      %v2948 = vunpack.c.l.b16 %v2862
      %v2949 = vunpack.c.h.b16 %v2862
      %v2950 = vunpack.c.l.b16 %v2863
      %v2951 = vunpack.c.h.b16 %v2863
      %v2952 = vunpack.c.l.b16 %v2864
      %v2953 = vunpack.c.h.b16 %v2864
      %v2954 = vunpack.c.l.b16 %v2865
      %v2955 = vunpack.c.h.b16 %v2865
      %v2956 = vunpack.c.l.b16 %v2866
      %v2957 = vunpack.c.h.b16 %v2866
      %v2958 = vunpack.c.l.b16 %v2867
      %v2959 = vunpack.c.h.b16 %v2867
      %v2960 = vunpack.c.l.b16 %v2868
      %v2961 = vunpack.c.h.b16 %v2868
      %v2962 = vunpack.c.l.b16 %v2869
      %v2963 = vunpack.c.h.b16 %v2869
      %v2964 = vunpack.c.l.b16 %v2870
      %v2965 = vunpack.c.h.b16 %v2870
      %v2966 = vunpack.c.l.b16 %v2871
      %v2967 = vunpack.c.h.b16 %v2871
      %v2968 = vpack.c.b16 %v2940, %v2936
      %v2969 = vpack.c.b16 %v2941, %v2937
      %v2970 = vpack.c.b16 %v2942, %v2938
      %v2971 = vpack.c.b16 %v2943, %v2939
      %v2972 = vpack.c.b16 %v2948, %v2944
      %v2973 = vpack.c.b16 %v2949, %v2945
      %v2974 = vpack.c.b16 %v2950, %v2946
      %v2975 = vpack.c.b16 %v2951, %v2947
      %v2976 = vpack.c.b16 %v2956, %v2952
      %v2977 = vpack.c.b16 %v2957, %v2953
      %v2978 = vpack.c.b16 %v2958, %v2954
      %v2979 = vpack.c.b16 %v2959, %v2955
      %v2980 = vpack.c.b16 %v2964, %v2960
      %v2981 = vpack.c.b16 %v2965, %v2961
      %v2982 = vpack.c.b16 %v2966, %v2962
      %v2983 = vpack.c.b16 %v2967, %v2963
      %3000 = vmatprep.subr.bf16.mxu0 0
      %3001 = vmatpush1.bf16.msra.mxu0 %v2744
      %3002 = vmatprep.subr.bf16.mxu0 0
      %3003 = vmatpush1.bf16.msra.mxu0 %v2745
      %3004 = vmatprep.subr.bf16.mxu0 0
      %3005 = vmatpush1.bf16.msra.mxu0 %v2746
      %3006 = vmatprep.subr.bf16.mxu0 0
      %3007 = vmatpush1.bf16.msra.mxu0 %v2747
      %3008 = vmatprep.subr.bf16.mxu0 0
      %3009 = vmatpush1.bf16.msra.mxu0 %v2748
      %3010 = vmatprep.subr.bf16.mxu0 0
      %3011 = vmatpush1.bf16.msra.mxu0 %v2749
      %3012 = vmatprep.subr.bf16.mxu0 0
      %3013 = vmatpush1.bf16.msra.mxu0 %v2750
      %3014 = vmatprep.subr.bf16.mxu0 0
      %3015 = vmatpush1.bf16.msra.mxu0 %v2751
      %3016 = vmatprep.subr.bf16.mxu0 0
      %3017 = vmatpush1.bf16.msra.mxu0 %v2761
      %3018 = vmatprep.subr.bf16.mxu0 0
      %3019 = vmatpush1.bf16.msra.mxu0 %v2763
      %3020 = vmatprep.subr.bf16.mxu0 0
      %3021 = vmatpush1.bf16.msra.mxu0 %v2765
      %3022 = vmatprep.subr.bf16.mxu0 0
      %3023 = vmatpush1.bf16.msra.mxu0 %v2767
      %3024 = vmatprep.subr.bf16.mxu0 0
      %3025 = vmatpush1.bf16.msra.mxu0 %v2769
      %3026 = vmatprep.subr.bf16.mxu0 0
      %3027 = vmatpush1.bf16.msra.mxu0 %v2771
      %3028 = vmatprep.subr.bf16.mxu0 0
      %3029 = vmatpush1.bf16.msra.mxu0 %v2773
      %3030 = vmatprep.subr.bf16.mxu0 0
      %3031 = vmatpush1.bf16.msra.mxu0 %v2775
      %3032 = vmatprep.mubr.bf16.mxu0 %v2969
      %3033 = vmatmul.mubr.bf16.gmra.mrb[0].mxu0 %v2968
      %v3034 = vpop.f32.mrb[0].mxu0
      %v3035 = vadd.f32 %v2883, %v3034
      %v3036 = vpop.f32.mrb[0].mxu0
      %v3037 = vpop.f32.mrb[0].mxu0
      %v3038 = vadd.f32 %v2888, %v3037
      %v3039 = vpop.f32.mrb[0].mxu0
      %3040 = vmatprep.mubr.bf16.mxu0 %v2973
      %3041 = vmatmul.mubr.bf16.gmra.mrb[0].mxu0 %v2972
      %v3042 = vpop.f32.mrb[0].mxu0
      %v3043 = vadd.f32 %v2893, %v3042
      %v3044 = vpop.f32.mrb[0].mxu0
      %v3045 = vpop.f32.mrb[0].mxu0
      %v3046 = vadd.f32 %v2898, %v3045
      %v3047 = vpop.f32.mrb[0].mxu0
      %3048 = vmatprep.mubr.bf16.mxu0 %v2977
      %3049 = vmatmul.mubr.bf16.gmra.mrb[0].mxu0 %v2976
      %v3050 = vpop.f32.mrb[0].mxu0
      %v3051 = vadd.f32 %v2903, %v3050
      %v3052 = vpop.f32.mrb[0].mxu0
      %v3053 = vpop.f32.mrb[0].mxu0
      %v3054 = vadd.f32 %v2908, %v3053
      %v3055 = vpop.f32.mrb[0].mxu0
      %3056 = vmatprep.mubr.bf16.mxu0 %v2981
      %3057 = vmatmul.mubr.bf16.gmra.mrb[0].mxu0 %v2980
      %v3058 = vpop.f32.mrb[0].mxu0
      %v3059 = vadd.f32 %v2913, %v3058
      %v3060 = vpop.f32.mrb[0].mxu0
      %v3061 = vpop.f32.mrb[0].mxu0
      %v3062 = vadd.f32 %v2918, %v3061
      %v3063 = vpop.f32.mrb[0].mxu0
      %3064 = vdwg.mxu0
      %3065 = vmatprep.subr.bf16.mxu0 0
      %3066 = vmatpush1.bf16.msra.mxu0 %v2816
      %3067 = vmatprep.subr.bf16.mxu0 0
      %3068 = vmatpush1.bf16.msra.mxu0 %v2817
      %3069 = vmatprep.subr.bf16.mxu0 0
      %3070 = vmatpush1.bf16.msra.mxu0 %v2818
      %3071 = vmatprep.subr.bf16.mxu0 0
      %3072 = vmatpush1.bf16.msra.mxu0 %v2819
      %3073 = vmatprep.subr.bf16.mxu0 0
      %3074 = vmatpush1.bf16.msra.mxu0 %v2820
      %3075 = vmatprep.subr.bf16.mxu0 0
      %3076 = vmatpush1.bf16.msra.mxu0 %v2821
      %3077 = vmatprep.subr.bf16.mxu0 0
      %3078 = vmatpush1.bf16.msra.mxu0 %v2822
      %3079 = vmatprep.subr.bf16.mxu0 0
      %3080 = vmatpush1.bf16.msra.mxu0 %v2823
      %3081 = vmatprep.subr.bf16.mxu0 0
      %3082 = vmatpush1.bf16.msra.mxu0 %v2833
      %3083 = vmatprep.subr.bf16.mxu0 0
      %3084 = vmatpush1.bf16.msra.mxu0 %v2835
      %3085 = vmatprep.subr.bf16.mxu0 0
      %3086 = vmatpush1.bf16.msra.mxu0 %v2837
      %3087 = vmatprep.subr.bf16.mxu0 0
      %3088 = vmatpush1.bf16.msra.mxu0 %v2839
      %3089 = vmatprep.subr.bf16.mxu0 0
      %3090 = vmatpush1.bf16.msra.mxu0 %v2841
      %3091 = vmatprep.subr.bf16.mxu0 0
      %3092 = vmatpush1.bf16.msra.mxu0 %v2843
      %3093 = vmatprep.subr.bf16.mxu0 0
      %3094 = vmatpush1.bf16.msra.mxu0 %v2845
      %3095 = vmatprep.subr.bf16.mxu0 0
      %3096 = vmatpush1.bf16.msra.mxu0 %v2847
      %3097 = vmatprep.mubr.bf16.mxu0 %v2971
      %3098 = vmatmul.mubr.bf16.gmra.mrb[0].mxu0 %v2970
      %v3099 = vpop.f32.mrb[0].mxu0
      %v3100 = vadd.f32 %v3035, %v3099
      %v3101 = vpop.f32.mrb[0].mxu0
      %v3102 = vpop.f32.mrb[0].mxu0
      %v3103 = vadd.f32 %v3038, %v3102
      %v3104 = vpop.f32.mrb[0].mxu0
      %3105 = vmatprep.mubr.bf16.mxu0 %v2975
      %3106 = vmatmul.mubr.bf16.gmra.mrb[0].mxu0 %v2974
      %v3107 = vpop.f32.mrb[0].mxu0
      %v3108 = vadd.f32 %v3043, %v3107
      %v3109 = vpop.f32.mrb[0].mxu0
      %v3110 = vpop.f32.mrb[0].mxu0
      %v3111 = vadd.f32 %v3046, %v3110
      %v3112 = vpop.f32.mrb[0].mxu0
      %3113 = vmatprep.mubr.bf16.mxu0 %v2979
      %3114 = vmatmul.mubr.bf16.gmra.mrb[0].mxu0 %v2978
      %v3115 = vpop.f32.mrb[0].mxu0
      %v3116 = vadd.f32 %v3051, %v3115
      %v3117 = vpop.f32.mrb[0].mxu0
      %v3118 = vpop.f32.mrb[0].mxu0
      %v3119 = vadd.f32 %v3054, %v3118
      %v3120 = vpop.f32.mrb[0].mxu0
      %3121 = vmatprep.mubr.bf16.mxu0 %v2983
      %3122 = vmatmul.mubr.bf16.gmra.mrb[0].mxu0 %v2982
      %v3123 = vpop.f32.mrb[0].mxu0
      %v3124 = vadd.f32 %v3059, %v3123
      %v3125 = vpop.f32.mrb[0].mxu0
      %v3126 = vpop.f32.mrb[0].mxu0
      %v3127 = vadd.f32 %v3062, %v3126
      %v3128 = vpop.f32.mrb[0].mxu0
      %3129 = vdwg.mxu0
      %v3130 = vmax.f32 %v3100, 0.0
      %v3131 = vmax.f32 %v3103, 0.0
      %v3132 = vmax.f32 %v3108, 0.0
      %v3133 = vmax.f32 %v3111, 0.0
      %v3134 = vmax.f32 %v3116, 0.0
      %v3135 = vmax.f32 %v3119, 0.0
      %v3136 = vmax.f32 %v3124, 0.0
      %v3137 = vmax.f32 %v3127, 0.0
      %v3138 = vsel %vm731, %v3130, -inf
      %v3139 = vsel %vm731, %v3131, -inf
      %v3140 = vsel %vm731, %v3132, -inf
      %v3141 = vsel %vm731, %v3133, -inf
      %v3142 = vsel %vm731, %v3134, -inf
      %v3143 = vmax.f32 %v3138, %v3142
      %v3144 = vsel %vm731, %v3135, -inf
      %v3145 = vmax.f32 %v3139, %v3144
      %v3146 = vsel %vm731, %v3136, -inf
      %v3147 = vmax.f32 %v3140, %v3146
      %v3148 = vsel %vm731, %v3137, -inf
      %v3149 = vmax.f32 %v3141, %v3148
      %v3150 = vmax.f32 %v3143, %v3145
      %v3151 = vmax.f32 %v3147, %v3149
      %v3152 = vmax.f32 %v3150, %v3151
      %v3153 = vrot.slane %v3152, 4
      %v3154 = vmax.f32 %v3152, %v3153
      %v3155 = vrot.slane %v3154, 2
      %v3156 = vmax.f32 %v3154, %v3155
      %v3157 = vrot.slane %v3156, 1
      %v3158 = vmax.f32 %v3156, %v3157
      %3159 = vst.msk [vmem:[%s270 + $0x5] sm:$0x1] %vm753, %v3158
      %v3160 = vld [vmem:[%s2695] sm:$0xf]
      %v3161 = vld [vmem:[%s2695 + $0x4] sm:$0xf]
      %v3162 = vld [vmem:[%s2695 + $0x8] sm:$0xf]
      %v3163 = vld [vmem:[%s2695 + $0xc] sm:$0xf]
      %v3164 = vld [vmem:[%s2695 + $0x10] sm:$0xf]
      %v3165 = vld [vmem:[%s2695 + $0x14] sm:$0xf]
      %v3166 = vld [vmem:[%s2695 + $0x18] sm:$0xf]
      %v3167 = vld [vmem:[%s2695 + $0x1c] sm:$0xf]
      %v3168 = vld [vmem:[%s2695 + $0x20] sm:$0xf]
      %v3169 = vld [vmem:[%s2695 + $0x24] sm:$0xf]
      %v3170 = vld [vmem:[%s2695 + $0x28] sm:$0xf]
      %v3171 = vld [vmem:[%s2695 + $0x2c] sm:$0xf]
      %v3172 = vld [vmem:[%s2695 + $0x30] sm:$0xf]
      %v3173 = vld [vmem:[%s2695 + $0x34] sm:$0xf]
      %v3174 = vld [vmem:[%s2695 + $0x38] sm:$0xf]
      %v3175 = vld [vmem:[%s2695 + $0x3c] sm:$0xf]
      %s3176 = scalar_lea.vmem %s252, 448
      %v3177 = vld [vmem:[%s3176] sm:$0xf]
      %v3178 = vld [vmem:[%s3176 + $0x4] sm:$0xf]
      %v3179 = vld [vmem:[%s3176 + $0x8] sm:$0xf]
      %v3180 = vld [vmem:[%s3176 + $0xc] sm:$0xf]
      %v3181 = vld [vmem:[%s3176 + $0x10] sm:$0xf]
      %v3182 = vld [vmem:[%s3176 + $0x14] sm:$0xf]
      %v3183 = vld [vmem:[%s3176 + $0x18] sm:$0xf]
      %v3184 = vld [vmem:[%s3176 + $0x1c] sm:$0xf]
      %v3185 = vld [vmem:[%s3176 + $0x20] sm:$0xf]
      %v3186 = vld [vmem:[%s3176 + $0x24] sm:$0xf]
      %v3187 = vld [vmem:[%s3176 + $0x28] sm:$0xf]
      %v3188 = vld [vmem:[%s3176 + $0x2c] sm:$0xf]
      %v3189 = vld [vmem:[%s3176 + $0x30] sm:$0xf]
      %v3190 = vld [vmem:[%s3176 + $0x34] sm:$0xf]
      %v3191 = vld [vmem:[%s3176 + $0x38] sm:$0xf]
      %v3192 = vld [vmem:[%s3176 + $0x3c] sm:$0xf]
      %v3209 = vunpack.c.l.b16 %v3160
      %v3210 = vunpack.c.l.b16 %v3161
      %v3211 = vunpack.c.l.b16 %v3162
      %v3212 = vunpack.c.l.b16 %v3163
      %v3213 = vunpack.c.l.b16 %v3164
      %v3214 = vunpack.c.l.b16 %v3165
      %v3215 = vunpack.c.l.b16 %v3166
      %v3216 = vunpack.c.l.b16 %v3167
      %v3217 = vunpack.c.l.b16 %v3168
      %v3218 = vunpack.c.l.b16 %v3169
      %v3219 = vunpack.c.l.b16 %v3170
      %v3220 = vunpack.c.l.b16 %v3171
      %v3221 = vunpack.c.l.b16 %v3172
      %v3222 = vunpack.c.l.b16 %v3173
      %v3223 = vunpack.c.l.b16 %v3174
      %v3224 = vunpack.c.l.b16 %v3175
      %v3225 = vpack.c.b16 %v3210, %v3209
      %v3226 = vpack.c.b16 %v3212, %v3211
      %v3227 = vpack.c.b16 %v3214, %v3213
      %v3228 = vpack.c.b16 %v3216, %v3215
      %v3229 = vpack.c.b16 %v3218, %v3217
      %v3230 = vpack.c.b16 %v3220, %v3219
      %v3231 = vpack.c.b16 %v3222, %v3221
      %v3232 = vpack.c.b16 %v3224, %v3223
      %3241 = vrot.lane.b32.xlu0 %v3225, 127
      %v3242 = vpop.permute.xlu0 %3241
      %3243 = vrot.lane.b32.xlu0 %v3226, 127
      %v3244 = vpop.permute.xlu0 %3243
      %3245 = vrot.lane.b32.xlu0 %v3227, 127
      %v3246 = vpop.permute.xlu0 %3245
      %3247 = vrot.lane.b32.xlu0 %v3228, 127
      %v3248 = vpop.permute.xlu0 %3247
      %3249 = vrot.lane.b32.xlu0 %v3229, 127
      %v3250 = vpop.permute.xlu0 %3249
      %3251 = vrot.lane.b32.xlu0 %v3230, 127
      %v3252 = vpop.permute.xlu0 %3251
      %3253 = vrot.lane.b32.xlu0 %v3231, 127
      %v3254 = vpop.permute.xlu0 %3253
      %3255 = vrot.lane.b32.xlu0 %v3232, 127
      %v3256 = vpop.permute.xlu0 %3255
      %v3281 = vunpack.c.l.b16 %v3177
      %v3282 = vunpack.c.l.b16 %v3178
      %v3283 = vunpack.c.l.b16 %v3179
      %v3284 = vunpack.c.l.b16 %v3180
      %v3285 = vunpack.c.l.b16 %v3181
      %v3286 = vunpack.c.l.b16 %v3182
      %v3287 = vunpack.c.l.b16 %v3183
      %v3288 = vunpack.c.l.b16 %v3184
      %v3289 = vunpack.c.l.b16 %v3185
      %v3290 = vunpack.c.l.b16 %v3186
      %v3291 = vunpack.c.l.b16 %v3187
      %v3292 = vunpack.c.l.b16 %v3188
      %v3293 = vunpack.c.l.b16 %v3189
      %v3294 = vunpack.c.l.b16 %v3190
      %v3295 = vunpack.c.l.b16 %v3191
      %v3296 = vunpack.c.l.b16 %v3192
      %v3297 = vpack.c.b16 %v3282, %v3281
      %v3298 = vpack.c.b16 %v3284, %v3283
      %v3299 = vpack.c.b16 %v3286, %v3285
      %v3300 = vpack.c.b16 %v3288, %v3287
      %v3301 = vpack.c.b16 %v3290, %v3289
      %v3302 = vpack.c.b16 %v3292, %v3291
      %v3303 = vpack.c.b16 %v3294, %v3293
      %v3304 = vpack.c.b16 %v3296, %v3295
      %3313 = vrot.lane.b32.xlu0 %v3297, 127
      %v3314 = vpop.permute.xlu0 %3313
      %3315 = vrot.lane.b32.xlu0 %v3298, 127
      %v3316 = vpop.permute.xlu0 %3315
      %3317 = vrot.lane.b32.xlu0 %v3299, 127
      %v3318 = vpop.permute.xlu0 %3317
      %3319 = vrot.lane.b32.xlu0 %v3300, 127
      %v3320 = vpop.permute.xlu0 %3319
      %3321 = vrot.lane.b32.xlu0 %v3301, 127
      %v3322 = vpop.permute.xlu0 %3321
      %3323 = vrot.lane.b32.xlu0 %v3302, 127
      %v3324 = vpop.permute.xlu0 %3323
      %3325 = vrot.lane.b32.xlu0 %v3303, 127
      %v3326 = vpop.permute.xlu0 %3325
      %3327 = vrot.lane.b32.xlu0 %v3304, 127
      %v3328 = vpop.permute.xlu0 %3327
      %v3337 = vld [vmem:[%s2] sm:$0xff]
      %v3338 = vld [vmem:[%s2 + $0x8] sm:$0xff]
      %v3339 = vld [vmem:[%s2 + $0x10] sm:$0xff]
      %v3340 = vld [vmem:[%s2 + $0x18] sm:$0xff]
      %v3341 = vld [vmem:[%s2 + $0x20] sm:$0xff]
      %v3342 = vld [vmem:[%s2 + $0x28] sm:$0xff]
      %v3343 = vld [vmem:[%s2 + $0x30] sm:$0xff]
      %v3344 = vld [vmem:[%s2 + $0x38] sm:$0xff]
      %v3345 = vld [vmem:[%s2 + $0x40] sm:$0xff]
      %v3346 = vld [vmem:[%s2 + $0x48] sm:$0xff]
      %v3347 = vld [vmem:[%s2 + $0x50] sm:$0xff]
      %v3348 = vld [vmem:[%s2 + $0x58] sm:$0xff]
      %v3349 = vld [vmem:[%s2 + $0x60] sm:$0xff]
      %v3350 = vld [vmem:[%s2 + $0x68] sm:$0xff]
      %v3351 = vld [vmem:[%s2 + $0x70] sm:$0xff]
      %v3352 = vld [vmem:[%s2 + $0x78] sm:$0xff]
      %v3353 = vld [vmem:[%s3] sm:$0xff]
      %v3354 = vld [vmem:[%s3 + $0x8] sm:$0xff]
      %v3355 = vld [vmem:[%s3 + $0x10] sm:$0xff]
      %v3356 = vld [vmem:[%s3 + $0x18] sm:$0xff]
      %v3357 = vld [vmem:[%s3 + $0x20] sm:$0xff]
      %v3358 = vld [vmem:[%s3 + $0x28] sm:$0xff]
      %v3359 = vld [vmem:[%s3 + $0x30] sm:$0xff]
      %v3360 = vld [vmem:[%s3 + $0x38] sm:$0xff]
      %3362 = vset.pattern.permute.xlu0 0
      %3363 = vperm.xlu0 %3362, %v3353
      %v3364 = vpop.permute.xlu0 %3363
      %3367 = vset.pattern.permute.xlu0 0
      %3368 = vperm.xlu0 %3367, %v3354
      %v3369 = vpop.permute.xlu0 %3368
      %3372 = vset.pattern.permute.xlu0 0
      %3373 = vperm.xlu0 %3372, %v3355
      %v3374 = vpop.permute.xlu0 %3373
      %3377 = vset.pattern.permute.xlu0 0
      %3378 = vperm.xlu0 %3377, %v3356
      %v3379 = vpop.permute.xlu0 %3378
      %3382 = vset.pattern.permute.xlu0 0
      %3383 = vperm.xlu0 %3382, %v3357
      %v3384 = vpop.permute.xlu0 %3383
      %3387 = vset.pattern.permute.xlu0 0
      %3388 = vperm.xlu0 %3387, %v3358
      %v3389 = vpop.permute.xlu0 %3388
      %3392 = vset.pattern.permute.xlu0 0
      %3393 = vperm.xlu0 %3392, %v3359
      %v3394 = vpop.permute.xlu0 %3393
      %3397 = vset.pattern.permute.xlu0 0
      %3398 = vperm.xlu0 %3397, %v3360
      %v3399 = vpop.permute.xlu0 %3398
      %v3417 = vunpack.c.l.b16 %v3337
      %v3418 = vunpack.c.h.b16 %v3337
      %v3419 = vunpack.c.l.b16 %v3338
      %v3420 = vunpack.c.h.b16 %v3338
      %v3421 = vunpack.c.l.b16 %v3339
      %v3422 = vunpack.c.h.b16 %v3339
      %v3423 = vunpack.c.l.b16 %v3340
      %v3424 = vunpack.c.h.b16 %v3340
      %v3425 = vunpack.c.l.b16 %v3341
      %v3426 = vunpack.c.h.b16 %v3341
      %v3427 = vunpack.c.l.b16 %v3342
      %v3428 = vunpack.c.h.b16 %v3342
      %v3429 = vunpack.c.l.b16 %v3343
      %v3430 = vunpack.c.h.b16 %v3343
      %v3431 = vunpack.c.l.b16 %v3344
      %v3432 = vunpack.c.h.b16 %v3344
      %v3433 = vunpack.c.l.b16 %v3345
      %v3434 = vunpack.c.h.b16 %v3345
      %v3435 = vunpack.c.l.b16 %v3346
      %v3436 = vunpack.c.h.b16 %v3346
      %v3437 = vunpack.c.l.b16 %v3347
      %v3438 = vunpack.c.h.b16 %v3347
      %v3439 = vunpack.c.l.b16 %v3348
      %v3440 = vunpack.c.h.b16 %v3348
      %v3441 = vunpack.c.l.b16 %v3349
      %v3442 = vunpack.c.h.b16 %v3349
      %v3443 = vunpack.c.l.b16 %v3350
      %v3444 = vunpack.c.h.b16 %v3350
      %v3445 = vunpack.c.l.b16 %v3351
      %v3446 = vunpack.c.h.b16 %v3351
      %v3447 = vunpack.c.l.b16 %v3352
      %v3448 = vunpack.c.h.b16 %v3352
      %v3449 = vpack.c.b16 %v3421, %v3417
      %v3450 = vpack.c.b16 %v3422, %v3418
      %v3451 = vpack.c.b16 %v3423, %v3419
      %v3452 = vpack.c.b16 %v3424, %v3420
      %v3453 = vpack.c.b16 %v3429, %v3425
      %v3454 = vpack.c.b16 %v3430, %v3426
      %v3455 = vpack.c.b16 %v3431, %v3427
      %v3456 = vpack.c.b16 %v3432, %v3428
      %v3457 = vpack.c.b16 %v3437, %v3433
      %v3458 = vpack.c.b16 %v3438, %v3434
      %v3459 = vpack.c.b16 %v3439, %v3435
      %v3460 = vpack.c.b16 %v3440, %v3436
      %v3461 = vpack.c.b16 %v3445, %v3441
      %v3462 = vpack.c.b16 %v3446, %v3442
      %v3463 = vpack.c.b16 %v3447, %v3443
      %v3464 = vpack.c.b16 %v3448, %v3444
      %3481 = vmatprep.subr.bf16.mxu0 0
      %3482 = vmatpush1.bf16.msra.mxu0 %v3225
      %3483 = vmatprep.subr.bf16.mxu0 0
      %3484 = vmatpush1.bf16.msra.mxu0 %v3226
      %3485 = vmatprep.subr.bf16.mxu0 0
      %3486 = vmatpush1.bf16.msra.mxu0 %v3227
      %3487 = vmatprep.subr.bf16.mxu0 0
      %3488 = vmatpush1.bf16.msra.mxu0 %v3228
      %3489 = vmatprep.subr.bf16.mxu0 0
      %3490 = vmatpush1.bf16.msra.mxu0 %v3229
      %3491 = vmatprep.subr.bf16.mxu0 0
      %3492 = vmatpush1.bf16.msra.mxu0 %v3230
      %3493 = vmatprep.subr.bf16.mxu0 0
      %3494 = vmatpush1.bf16.msra.mxu0 %v3231
      %3495 = vmatprep.subr.bf16.mxu0 0
      %3496 = vmatpush1.bf16.msra.mxu0 %v3232
      %3497 = vmatprep.subr.bf16.mxu0 0
      %3498 = vmatpush1.bf16.msra.mxu0 %v3242
      %3499 = vmatprep.subr.bf16.mxu0 0
      %3500 = vmatpush1.bf16.msra.mxu0 %v3244
      %3501 = vmatprep.subr.bf16.mxu0 0
      %3502 = vmatpush1.bf16.msra.mxu0 %v3246
      %3503 = vmatprep.subr.bf16.mxu0 0
      %3504 = vmatpush1.bf16.msra.mxu0 %v3248
      %3505 = vmatprep.subr.bf16.mxu0 0
      %3506 = vmatpush1.bf16.msra.mxu0 %v3250
      %3507 = vmatprep.subr.bf16.mxu0 0
      %3508 = vmatpush1.bf16.msra.mxu0 %v3252
      %3509 = vmatprep.subr.bf16.mxu0 0
      %3510 = vmatpush1.bf16.msra.mxu0 %v3254
      %3511 = vmatprep.subr.bf16.mxu0 0
      %3512 = vmatpush1.bf16.msra.mxu0 %v3256
      %3513 = vmatprep.mubr.bf16.mxu0 %v3450
      %3514 = vmatmul.mubr.bf16.gmra.mrb[0].mxu0 %v3449
      %v3515 = vpop.f32.mrb[0].mxu0
      %v3516 = vadd.f32 %v3364, %v3515
      %v3517 = vpop.f32.mrb[0].mxu0
      %v3518 = vpop.f32.mrb[0].mxu0
      %v3519 = vadd.f32 %v3369, %v3518
      %v3520 = vpop.f32.mrb[0].mxu0
      %3521 = vmatprep.mubr.bf16.mxu0 %v3454
      %3522 = vmatmul.mubr.bf16.gmra.mrb[0].mxu0 %v3453
      %v3523 = vpop.f32.mrb[0].mxu0
      %v3524 = vadd.f32 %v3374, %v3523
      %v3525 = vpop.f32.mrb[0].mxu0
      %v3526 = vpop.f32.mrb[0].mxu0
      %v3527 = vadd.f32 %v3379, %v3526
      %v3528 = vpop.f32.mrb[0].mxu0
      %3529 = vmatprep.mubr.bf16.mxu0 %v3458
      %3530 = vmatmul.mubr.bf16.gmra.mrb[0].mxu0 %v3457
      %v3531 = vpop.f32.mrb[0].mxu0
      %v3532 = vadd.f32 %v3384, %v3531
      %v3533 = vpop.f32.mrb[0].mxu0
      %v3534 = vpop.f32.mrb[0].mxu0
      %v3535 = vadd.f32 %v3389, %v3534
      %v3536 = vpop.f32.mrb[0].mxu0
      %3537 = vmatprep.mubr.bf16.mxu0 %v3462
      %3538 = vmatmul.mubr.bf16.gmra.mrb[0].mxu0 %v3461
      %v3539 = vpop.f32.mrb[0].mxu0
      %v3540 = vadd.f32 %v3394, %v3539
      %v3541 = vpop.f32.mrb[0].mxu0
      %v3542 = vpop.f32.mrb[0].mxu0
      %v3543 = vadd.f32 %v3399, %v3542
      %v3544 = vpop.f32.mrb[0].mxu0
      %3545 = vdwg.mxu0
      %3546 = vmatprep.subr.bf16.mxu0 0
      %3547 = vmatpush1.bf16.msra.mxu0 %v3297
      %3548 = vmatprep.subr.bf16.mxu0 0
      %3549 = vmatpush1.bf16.msra.mxu0 %v3298
      %3550 = vmatprep.subr.bf16.mxu0 0
      %3551 = vmatpush1.bf16.msra.mxu0 %v3299
      %3552 = vmatprep.subr.bf16.mxu0 0
      %3553 = vmatpush1.bf16.msra.mxu0 %v3300
      %3554 = vmatprep.subr.bf16.mxu0 0
      %3555 = vmatpush1.bf16.msra.mxu0 %v3301
      %3556 = vmatprep.subr.bf16.mxu0 0
      %3557 = vmatpush1.bf16.msra.mxu0 %v3302
      %3558 = vmatprep.subr.bf16.mxu0 0
      %3559 = vmatpush1.bf16.msra.mxu0 %v3303
      %3560 = vmatprep.subr.bf16.mxu0 0
      %3561 = vmatpush1.bf16.msra.mxu0 %v3304
      %3562 = vmatprep.subr.bf16.mxu0 0
      %3563 = vmatpush1.bf16.msra.mxu0 %v3314
      %3564 = vmatprep.subr.bf16.mxu0 0
      %3565 = vmatpush1.bf16.msra.mxu0 %v3316
      %3566 = vmatprep.subr.bf16.mxu0 0
      %3567 = vmatpush1.bf16.msra.mxu0 %v3318
      %3568 = vmatprep.subr.bf16.mxu0 0
      %3569 = vmatpush1.bf16.msra.mxu0 %v3320
      %3570 = vmatprep.subr.bf16.mxu0 0
      %3571 = vmatpush1.bf16.msra.mxu0 %v3322
      %3572 = vmatprep.subr.bf16.mxu0 0
      %3573 = vmatpush1.bf16.msra.mxu0 %v3324
      %3574 = vmatprep.subr.bf16.mxu0 0
      %3575 = vmatpush1.bf16.msra.mxu0 %v3326
      %3576 = vmatprep.subr.bf16.mxu0 0
      %3577 = vmatpush1.bf16.msra.mxu0 %v3328
      %3578 = vmatprep.mubr.bf16.mxu0 %v3452
      %3579 = vmatmul.mubr.bf16.gmra.mrb[0].mxu0 %v3451
      %v3580 = vpop.f32.mrb[0].mxu0
      %v3581 = vadd.f32 %v3516, %v3580
      %v3582 = vpop.f32.mrb[0].mxu0
      %v3583 = vpop.f32.mrb[0].mxu0
      %v3584 = vadd.f32 %v3519, %v3583
      %v3585 = vpop.f32.mrb[0].mxu0
      %3586 = vmatprep.mubr.bf16.mxu0 %v3456
      %3587 = vmatmul.mubr.bf16.gmra.mrb[0].mxu0 %v3455
      %v3588 = vpop.f32.mrb[0].mxu0
      %v3589 = vadd.f32 %v3524, %v3588
      %v3590 = vpop.f32.mrb[0].mxu0
      %v3591 = vpop.f32.mrb[0].mxu0
      %v3592 = vadd.f32 %v3527, %v3591
      %v3593 = vpop.f32.mrb[0].mxu0
      %3594 = vmatprep.mubr.bf16.mxu0 %v3460
      %3595 = vmatmul.mubr.bf16.gmra.mrb[0].mxu0 %v3459
      %v3596 = vpop.f32.mrb[0].mxu0
      %v3597 = vadd.f32 %v3532, %v3596
      %v3598 = vpop.f32.mrb[0].mxu0
      %v3599 = vpop.f32.mrb[0].mxu0
      %v3600 = vadd.f32 %v3535, %v3599
      %v3601 = vpop.f32.mrb[0].mxu0
      %3602 = vmatprep.mubr.bf16.mxu0 %v3464
      %3603 = vmatmul.mubr.bf16.gmra.mrb[0].mxu0 %v3463
      %v3604 = vpop.f32.mrb[0].mxu0
      %v3605 = vadd.f32 %v3540, %v3604
      %v3606 = vpop.f32.mrb[0].mxu0
      %v3607 = vpop.f32.mrb[0].mxu0
      %v3608 = vadd.f32 %v3543, %v3607
      %v3609 = vpop.f32.mrb[0].mxu0
      %3610 = vdwg.mxu0
      %v3611 = vmax.f32 %v3581, 0.0
      %v3612 = vmax.f32 %v3584, 0.0
      %v3613 = vmax.f32 %v3589, 0.0
      %v3614 = vmax.f32 %v3592, 0.0
      %v3615 = vmax.f32 %v3597, 0.0
      %v3616 = vmax.f32 %v3600, 0.0
      %v3617 = vmax.f32 %v3605, 0.0
      %v3618 = vmax.f32 %v3608, 0.0
      %v3619 = vsel %vm731, %v3611, -inf
      %v3620 = vsel %vm731, %v3612, -inf
      %v3621 = vsel %vm731, %v3613, -inf
      %v3622 = vsel %vm731, %v3614, -inf
      %v3623 = vsel %vm731, %v3615, -inf
      %v3624 = vmax.f32 %v3619, %v3623
      %v3625 = vsel %vm731, %v3616, -inf
      %v3626 = vmax.f32 %v3620, %v3625
      %v3627 = vsel %vm731, %v3617, -inf
      %v3628 = vmax.f32 %v3621, %v3627
      %v3629 = vsel %vm731, %v3618, -inf
      %v3630 = vmax.f32 %v3622, %v3629
      %v3631 = vmax.f32 %v3624, %v3626
      %v3632 = vmax.f32 %v3628, %v3630
      %v3633 = vmax.f32 %v3631, %v3632
      %v3634 = vrot.slane %v3633, 4
      %v3635 = vmax.f32 %v3633, %v3634
      %v3636 = vrot.slane %v3635, 2
      %v3637 = vmax.f32 %v3635, %v3636
      %v3638 = vrot.slane %v3637, 1
      %v3639 = vmax.f32 %v3637, %v3638
      %3640 = vst.msk [vmem:[%s270 + $0x6] sm:$0x1] %vm753, %v3639
      %v3641 = vld [vmem:[%s3176] sm:$0xf]
      %v3642 = vld [vmem:[%s3176 + $0x4] sm:$0xf]
      %v3643 = vld [vmem:[%s3176 + $0x8] sm:$0xf]
      %v3644 = vld [vmem:[%s3176 + $0xc] sm:$0xf]
      %v3645 = vld [vmem:[%s3176 + $0x10] sm:$0xf]
      %v3646 = vld [vmem:[%s3176 + $0x14] sm:$0xf]
      %v3647 = vld [vmem:[%s3176 + $0x18] sm:$0xf]
      %v3648 = vld [vmem:[%s3176 + $0x1c] sm:$0xf]
      %v3649 = vld [vmem:[%s3176 + $0x20] sm:$0xf]
      %v3650 = vld [vmem:[%s3176 + $0x24] sm:$0xf]
      %v3651 = vld [vmem:[%s3176 + $0x28] sm:$0xf]
      %v3652 = vld [vmem:[%s3176 + $0x2c] sm:$0xf]
      %v3653 = vld [vmem:[%s3176 + $0x30] sm:$0xf]
      %v3654 = vld [vmem:[%s3176 + $0x34] sm:$0xf]
      %v3655 = vld [vmem:[%s3176 + $0x38] sm:$0xf]
      %v3656 = vld [vmem:[%s3176 + $0x3c] sm:$0xf]
      %v3657 = vld [vmem:[%s262] sm:$0xf]
      %v3658 = vld [vmem:[%s262 + $0x4] sm:$0xf]
      %v3659 = vld [vmem:[%s262 + $0x8] sm:$0xf]
      %v3660 = vld [vmem:[%s262 + $0xc] sm:$0xf]
      %v3661 = vld [vmem:[%s262 + $0x10] sm:$0xf]
      %v3662 = vld [vmem:[%s262 + $0x14] sm:$0xf]
      %v3663 = vld [vmem:[%s262 + $0x18] sm:$0xf]
      %v3664 = vld [vmem:[%s262 + $0x1c] sm:$0xf]
      %v3665 = vld [vmem:[%s262 + $0x20] sm:$0xf]
      %v3666 = vld [vmem:[%s262 + $0x24] sm:$0xf]
      %v3667 = vld [vmem:[%s262 + $0x28] sm:$0xf]
      %v3668 = vld [vmem:[%s262 + $0x2c] sm:$0xf]
      %v3669 = vld [vmem:[%s262 + $0x30] sm:$0xf]
      %v3670 = vld [vmem:[%s262 + $0x34] sm:$0xf]
      %v3671 = vld [vmem:[%s262 + $0x38] sm:$0xf]
      %v3672 = vld [vmem:[%s262 + $0x3c] sm:$0xf]
      %v3689 = vunpack.c.l.b16 %v3641
      %v3690 = vunpack.c.l.b16 %v3642
      %v3691 = vunpack.c.l.b16 %v3643
      %v3692 = vunpack.c.l.b16 %v3644
      %v3693 = vunpack.c.l.b16 %v3645
      %v3694 = vunpack.c.l.b16 %v3646
      %v3695 = vunpack.c.l.b16 %v3647
      %v3696 = vunpack.c.l.b16 %v3648
      %v3697 = vunpack.c.l.b16 %v3649
      %v3698 = vunpack.c.l.b16 %v3650
      %v3699 = vunpack.c.l.b16 %v3651
      %v3700 = vunpack.c.l.b16 %v3652
      %v3701 = vunpack.c.l.b16 %v3653
      %v3702 = vunpack.c.l.b16 %v3654
      %v3703 = vunpack.c.l.b16 %v3655
      %v3704 = vunpack.c.l.b16 %v3656
      %v3705 = vpack.c.b16 %v3690, %v3689
      %v3706 = vpack.c.b16 %v3692, %v3691
      %v3707 = vpack.c.b16 %v3694, %v3693
      %v3708 = vpack.c.b16 %v3696, %v3695
      %v3709 = vpack.c.b16 %v3698, %v3697
      %v3710 = vpack.c.b16 %v3700, %v3699
      %v3711 = vpack.c.b16 %v3702, %v3701
      %v3712 = vpack.c.b16 %v3704, %v3703
      %3721 = vrot.lane.b32.xlu0 %v3705, 127
      %v3722 = vpop.permute.xlu0 %3721
      %3723 = vrot.lane.b32.xlu0 %v3706, 127
      %v3724 = vpop.permute.xlu0 %3723
      %3725 = vrot.lane.b32.xlu0 %v3707, 127
      %v3726 = vpop.permute.xlu0 %3725
      %3727 = vrot.lane.b32.xlu0 %v3708, 127
      %v3728 = vpop.permute.xlu0 %3727
      %3729 = vrot.lane.b32.xlu0 %v3709, 127
      %v3730 = vpop.permute.xlu0 %3729
      %3731 = vrot.lane.b32.xlu0 %v3710, 127
      %v3732 = vpop.permute.xlu0 %3731
      %3733 = vrot.lane.b32.xlu0 %v3711, 127
      %v3734 = vpop.permute.xlu0 %3733
      %3735 = vrot.lane.b32.xlu0 %v3712, 127
      %v3736 = vpop.permute.xlu0 %3735
      %v3761 = vunpack.c.l.b16 %v3657
      %v3762 = vunpack.c.l.b16 %v3658
      %v3763 = vunpack.c.l.b16 %v3659
      %v3764 = vunpack.c.l.b16 %v3660
      %v3765 = vunpack.c.l.b16 %v3661
      %v3766 = vunpack.c.l.b16 %v3662
      %v3767 = vunpack.c.l.b16 %v3663
      %v3768 = vunpack.c.l.b16 %v3664
      %v3769 = vunpack.c.l.b16 %v3665
      %v3770 = vunpack.c.l.b16 %v3666
      %v3771 = vunpack.c.l.b16 %v3667
      %v3772 = vunpack.c.l.b16 %v3668
      %v3773 = vunpack.c.l.b16 %v3669
      %v3774 = vunpack.c.l.b16 %v3670
      %v3775 = vunpack.c.l.b16 %v3671
      %v3776 = vunpack.c.l.b16 %v3672
      %v3777 = vpack.c.b16 %v3762, %v3761
      %v3778 = vpack.c.b16 %v3764, %v3763
      %v3779 = vpack.c.b16 %v3766, %v3765
      %v3780 = vpack.c.b16 %v3768, %v3767
      %v3781 = vpack.c.b16 %v3770, %v3769
      %v3782 = vpack.c.b16 %v3772, %v3771
      %v3783 = vpack.c.b16 %v3774, %v3773
      %v3784 = vpack.c.b16 %v3776, %v3775
      %3793 = vrot.lane.b32.xlu0 %v3777, 127
      %v3794 = vpop.permute.xlu0 %3793
      %3795 = vrot.lane.b32.xlu0 %v3778, 127
      %v3796 = vpop.permute.xlu0 %3795
      %3797 = vrot.lane.b32.xlu0 %v3779, 127
      %v3798 = vpop.permute.xlu0 %3797
      %3799 = vrot.lane.b32.xlu0 %v3780, 127
      %v3800 = vpop.permute.xlu0 %3799
      %3801 = vrot.lane.b32.xlu0 %v3781, 127
      %v3802 = vpop.permute.xlu0 %3801
      %3803 = vrot.lane.b32.xlu0 %v3782, 127
      %v3804 = vpop.permute.xlu0 %3803
      %3805 = vrot.lane.b32.xlu0 %v3783, 127
      %v3806 = vpop.permute.xlu0 %3805
      %3807 = vrot.lane.b32.xlu0 %v3784, 127
      %v3808 = vpop.permute.xlu0 %3807
      %v3817 = vld [vmem:[%s2] sm:$0xff]
      %v3818 = vld [vmem:[%s2 + $0x8] sm:$0xff]
      %v3819 = vld [vmem:[%s2 + $0x10] sm:$0xff]
      %v3820 = vld [vmem:[%s2 + $0x18] sm:$0xff]
      %v3821 = vld [vmem:[%s2 + $0x20] sm:$0xff]
      %v3822 = vld [vmem:[%s2 + $0x28] sm:$0xff]
      %v3823 = vld [vmem:[%s2 + $0x30] sm:$0xff]
      %v3824 = vld [vmem:[%s2 + $0x38] sm:$0xff]
      %v3825 = vld [vmem:[%s2 + $0x40] sm:$0xff]
      %v3826 = vld [vmem:[%s2 + $0x48] sm:$0xff]
      %v3827 = vld [vmem:[%s2 + $0x50] sm:$0xff]
      %v3828 = vld [vmem:[%s2 + $0x58] sm:$0xff]
      %v3829 = vld [vmem:[%s2 + $0x60] sm:$0xff]
      %v3830 = vld [vmem:[%s2 + $0x68] sm:$0xff]
      %v3831 = vld [vmem:[%s2 + $0x70] sm:$0xff]
      %v3832 = vld [vmem:[%s2 + $0x78] sm:$0xff]
      %v3833 = vld [vmem:[%s3] sm:$0xff]
      %v3834 = vld [vmem:[%s3 + $0x8] sm:$0xff]
      %v3835 = vld [vmem:[%s3 + $0x10] sm:$0xff]
      %v3836 = vld [vmem:[%s3 + $0x18] sm:$0xff]
      %v3837 = vld [vmem:[%s3 + $0x20] sm:$0xff]
      %v3838 = vld [vmem:[%s3 + $0x28] sm:$0xff]
      %v3839 = vld [vmem:[%s3 + $0x30] sm:$0xff]
      %v3840 = vld [vmem:[%s3 + $0x38] sm:$0xff]
      %3842 = vset.pattern.permute.xlu0 0
      %3843 = vperm.xlu0 %3842, %v3833
      %v3844 = vpop.permute.xlu0 %3843
      %3847 = vset.pattern.permute.xlu0 0
      %3848 = vperm.xlu0 %3847, %v3834
      %v3849 = vpop.permute.xlu0 %3848
      %3852 = vset.pattern.permute.xlu0 0
      %3853 = vperm.xlu0 %3852, %v3835
      %v3854 = vpop.permute.xlu0 %3853
      %3857 = vset.pattern.permute.xlu0 0
      %3858 = vperm.xlu0 %3857, %v3836
      %v3859 = vpop.permute.xlu0 %3858
      %3862 = vset.pattern.permute.xlu0 0
      %3863 = vperm.xlu0 %3862, %v3837
      %v3864 = vpop.permute.xlu0 %3863
      %3867 = vset.pattern.permute.xlu0 0
      %3868 = vperm.xlu0 %3867, %v3838
      %v3869 = vpop.permute.xlu0 %3868
      %3872 = vset.pattern.permute.xlu0 0
      %3873 = vperm.xlu0 %3872, %v3839
      %v3874 = vpop.permute.xlu0 %3873
      %3877 = vset.pattern.permute.xlu0 0
      %3878 = vperm.xlu0 %3877, %v3840
      %v3879 = vpop.permute.xlu0 %3878
      %v3897 = vunpack.c.l.b16 %v3817
      %v3898 = vunpack.c.h.b16 %v3817
      %v3899 = vunpack.c.l.b16 %v3818
      %v3900 = vunpack.c.h.b16 %v3818
      %v3901 = vunpack.c.l.b16 %v3819
      %v3902 = vunpack.c.h.b16 %v3819
      %v3903 = vunpack.c.l.b16 %v3820
      %v3904 = vunpack.c.h.b16 %v3820
      %v3905 = vunpack.c.l.b16 %v3821
      %v3906 = vunpack.c.h.b16 %v3821
      %v3907 = vunpack.c.l.b16 %v3822
      %v3908 = vunpack.c.h.b16 %v3822
      %v3909 = vunpack.c.l.b16 %v3823
      %v3910 = vunpack.c.h.b16 %v3823
      %v3911 = vunpack.c.l.b16 %v3824
      %v3912 = vunpack.c.h.b16 %v3824
      %v3913 = vunpack.c.l.b16 %v3825
      %v3914 = vunpack.c.h.b16 %v3825
      %v3915 = vunpack.c.l.b16 %v3826
      %v3916 = vunpack.c.h.b16 %v3826
      %v3917 = vunpack.c.l.b16 %v3827
      %v3918 = vunpack.c.h.b16 %v3827
      %v3919 = vunpack.c.l.b16 %v3828
      %v3920 = vunpack.c.h.b16 %v3828
      %v3921 = vunpack.c.l.b16 %v3829
      %v3922 = vunpack.c.h.b16 %v3829
      %v3923 = vunpack.c.l.b16 %v3830
      %v3924 = vunpack.c.h.b16 %v3830
      %v3925 = vunpack.c.l.b16 %v3831
      %v3926 = vunpack.c.h.b16 %v3831
      %v3927 = vunpack.c.l.b16 %v3832
      %v3928 = vunpack.c.h.b16 %v3832
      %v3929 = vpack.c.b16 %v3901, %v3897
      %v3930 = vpack.c.b16 %v3902, %v3898
      %v3931 = vpack.c.b16 %v3903, %v3899
      %v3932 = vpack.c.b16 %v3904, %v3900
      %v3933 = vpack.c.b16 %v3909, %v3905
      %v3934 = vpack.c.b16 %v3910, %v3906
      %v3935 = vpack.c.b16 %v3911, %v3907
      %v3936 = vpack.c.b16 %v3912, %v3908
      %v3937 = vpack.c.b16 %v3917, %v3913
      %v3938 = vpack.c.b16 %v3918, %v3914
      %v3939 = vpack.c.b16 %v3919, %v3915
      %v3940 = vpack.c.b16 %v3920, %v3916
      %v3941 = vpack.c.b16 %v3925, %v3921
      %v3942 = vpack.c.b16 %v3926, %v3922
      %v3943 = vpack.c.b16 %v3927, %v3923
      %v3944 = vpack.c.b16 %v3928, %v3924
      %3961 = vmatprep.subr.bf16.mxu0 0
      %3962 = vmatpush1.bf16.msra.mxu0 %v3705
      %3963 = vmatprep.subr.bf16.mxu0 0
      %3964 = vmatpush1.bf16.msra.mxu0 %v3706
      %3965 = vmatprep.subr.bf16.mxu0 0
      %3966 = vmatpush1.bf16.msra.mxu0 %v3707
      %3967 = vmatprep.subr.bf16.mxu0 0
      %3968 = vmatpush1.bf16.msra.mxu0 %v3708
      %3969 = vmatprep.subr.bf16.mxu0 0
      %3970 = vmatpush1.bf16.msra.mxu0 %v3709
      %3971 = vmatprep.subr.bf16.mxu0 0
      %3972 = vmatpush1.bf16.msra.mxu0 %v3710
      %3973 = vmatprep.subr.bf16.mxu0 0
      %3974 = vmatpush1.bf16.msra.mxu0 %v3711
      %3975 = vmatprep.subr.bf16.mxu0 0
      %3976 = vmatpush1.bf16.msra.mxu0 %v3712
      %3977 = vmatprep.subr.bf16.mxu0 0
      %3978 = vmatpush1.bf16.msra.mxu0 %v3722
      %3979 = vmatprep.subr.bf16.mxu0 0
      %3980 = vmatpush1.bf16.msra.mxu0 %v3724
      %3981 = vmatprep.subr.bf16.mxu0 0
      %3982 = vmatpush1.bf16.msra.mxu0 %v3726
      %3983 = vmatprep.subr.bf16.mxu0 0
      %3984 = vmatpush1.bf16.msra.mxu0 %v3728
      %3985 = vmatprep.subr.bf16.mxu0 0
      %3986 = vmatpush1.bf16.msra.mxu0 %v3730
      %3987 = vmatprep.subr.bf16.mxu0 0
      %3988 = vmatpush1.bf16.msra.mxu0 %v3732
      %3989 = vmatprep.subr.bf16.mxu0 0
      %3990 = vmatpush1.bf16.msra.mxu0 %v3734
      %3991 = vmatprep.subr.bf16.mxu0 0
      %3992 = vmatpush1.bf16.msra.mxu0 %v3736
      %3993 = vmatprep.mubr.bf16.mxu0 %v3930
      %3994 = vmatmul.mubr.bf16.gmra.mrb[0].mxu0 %v3929
      %v3995 = vpop.f32.mrb[0].mxu0
      %v3996 = vadd.f32 %v3844, %v3995
      %v3997 = vpop.f32.mrb[0].mxu0
      %v3998 = vpop.f32.mrb[0].mxu0
      %v3999 = vadd.f32 %v3849, %v3998
      %v4000 = vpop.f32.mrb[0].mxu0
      %4001 = vmatprep.mubr.bf16.mxu0 %v3934
      %4002 = vmatmul.mubr.bf16.gmra.mrb[0].mxu0 %v3933
      %v4003 = vpop.f32.mrb[0].mxu0
      %v4004 = vadd.f32 %v3854, %v4003
      %v4005 = vpop.f32.mrb[0].mxu0
      %v4006 = vpop.f32.mrb[0].mxu0
      %v4007 = vadd.f32 %v3859, %v4006
      %v4008 = vpop.f32.mrb[0].mxu0
      %4009 = vmatprep.mubr.bf16.mxu0 %v3938
      %4010 = vmatmul.mubr.bf16.gmra.mrb[0].mxu0 %v3937
      %v4011 = vpop.f32.mrb[0].mxu0
      %v4012 = vadd.f32 %v3864, %v4011
      %v4013 = vpop.f32.mrb[0].mxu0
      %v4014 = vpop.f32.mrb[0].mxu0
      %v4015 = vadd.f32 %v3869, %v4014
      %v4016 = vpop.f32.mrb[0].mxu0
      %4017 = vmatprep.mubr.bf16.mxu0 %v3942
      %4018 = vmatmul.mubr.bf16.gmra.mrb[0].mxu0 %v3941
      %v4019 = vpop.f32.mrb[0].mxu0
      %v4020 = vadd.f32 %v3874, %v4019
      %v4021 = vpop.f32.mrb[0].mxu0
      %v4022 = vpop.f32.mrb[0].mxu0
      %v4023 = vadd.f32 %v3879, %v4022
      %v4024 = vpop.f32.mrb[0].mxu0
      %4025 = vdwg.mxu0
      %4026 = vmatprep.subr.bf16.mxu0 0
      %4027 = vmatpush1.bf16.msra.mxu0 %v3777
      %4028 = vmatprep.subr.bf16.mxu0 0
      %4029 = vmatpush1.bf16.msra.mxu0 %v3778
      %4030 = vmatprep.subr.bf16.mxu0 0
      %4031 = vmatpush1.bf16.msra.mxu0 %v3779
      %4032 = vmatprep.subr.bf16.mxu0 0
      %4033 = vmatpush1.bf16.msra.mxu0 %v3780
      %4034 = vmatprep.subr.bf16.mxu0 0
      %4035 = vmatpush1.bf16.msra.mxu0 %v3781
      %4036 = vmatprep.subr.bf16.mxu0 0
      %4037 = vmatpush1.bf16.msra.mxu0 %v3782
      %4038 = vmatprep.subr.bf16.mxu0 0
      %4039 = vmatpush1.bf16.msra.mxu0 %v3783
      %4040 = vmatprep.subr.bf16.mxu0 0
      %4041 = vmatpush1.bf16.msra.mxu0 %v3784
      %4042 = vmatprep.subr.bf16.mxu0 0
      %4043 = vmatpush1.bf16.msra.mxu0 %v3794
      %4044 = vmatprep.subr.bf16.mxu0 0
      %4045 = vmatpush1.bf16.msra.mxu0 %v3796
      %4046 = vmatprep.subr.bf16.mxu0 0
      %4047 = vmatpush1.bf16.msra.mxu0 %v3798
      %4048 = vmatprep.subr.bf16.mxu0 0
      %4049 = vmatpush1.bf16.msra.mxu0 %v3800
      %4050 = vmatprep.subr.bf16.mxu0 0
      %4051 = vmatpush1.bf16.msra.mxu0 %v3802
      %4052 = vmatprep.subr.bf16.mxu0 0
      %4053 = vmatpush1.bf16.msra.mxu0 %v3804
      %4054 = vmatprep.subr.bf16.mxu0 0
      %4055 = vmatpush1.bf16.msra.mxu0 %v3806
      %4056 = vmatprep.subr.bf16.mxu0 0
      %4057 = vmatpush1.bf16.msra.mxu0 %v3808
      %4058 = vmatprep.mubr.bf16.mxu0 %v3932
      %4059 = vmatmul.mubr.bf16.gmra.mrb[0].mxu0 %v3931
      %v4060 = vpop.f32.mrb[0].mxu0
      %v4061 = vadd.f32 %v3996, %v4060
      %v4062 = vpop.f32.mrb[0].mxu0
      %v4063 = vpop.f32.mrb[0].mxu0
      %v4064 = vadd.f32 %v3999, %v4063
      %v4065 = vpop.f32.mrb[0].mxu0
      %4066 = vmatprep.mubr.bf16.mxu0 %v3936
      %4067 = vmatmul.mubr.bf16.gmra.mrb[0].mxu0 %v3935
      %v4068 = vpop.f32.mrb[0].mxu0
      %v4069 = vadd.f32 %v4004, %v4068
      %v4070 = vpop.f32.mrb[0].mxu0
      %v4071 = vpop.f32.mrb[0].mxu0
      %v4072 = vadd.f32 %v4007, %v4071
      %v4073 = vpop.f32.mrb[0].mxu0
      %4074 = vmatprep.mubr.bf16.mxu0 %v3940
      %4075 = vmatmul.mubr.bf16.gmra.mrb[0].mxu0 %v3939
      %v4076 = vpop.f32.mrb[0].mxu0
      %v4077 = vadd.f32 %v4012, %v4076
      %v4078 = vpop.f32.mrb[0].mxu0
      %v4079 = vpop.f32.mrb[0].mxu0
      %v4080 = vadd.f32 %v4015, %v4079
      %v4081 = vpop.f32.mrb[0].mxu0
      %4082 = vmatprep.mubr.bf16.mxu0 %v3944
      %4083 = vmatmul.mubr.bf16.gmra.mrb[0].mxu0 %v3943
      %v4084 = vpop.f32.mrb[0].mxu0
      %v4085 = vadd.f32 %v4020, %v4084
      %v4086 = vpop.f32.mrb[0].mxu0
      %v4087 = vpop.f32.mrb[0].mxu0
      %v4088 = vadd.f32 %v4023, %v4087
      %v4089 = vpop.f32.mrb[0].mxu0
      %4090 = vdwg.mxu0
      %v4091 = vmax.f32 %v4061, 0.0
      %v4092 = vmax.f32 %v4064, 0.0
      %v4093 = vmax.f32 %v4069, 0.0
      %v4094 = vmax.f32 %v4072, 0.0
      %v4095 = vmax.f32 %v4077, 0.0
      %v4096 = vmax.f32 %v4080, 0.0
      %v4097 = vmax.f32 %v4085, 0.0
      %v4098 = vmax.f32 %v4088, 0.0
      %v4099 = vsel %vm731, %v4091, -inf
      %v4100 = vsel %vm731, %v4092, -inf
      %v4101 = vsel %vm731, %v4093, -inf
      %v4102 = vsel %vm731, %v4094, -inf
      %v4103 = vsel %vm731, %v4095, -inf
      %v4104 = vmax.f32 %v4099, %v4103
      %v4105 = vsel %vm731, %v4096, -inf
      %v4106 = vmax.f32 %v4100, %v4105
      %v4107 = vsel %vm731, %v4097, -inf
      %v4108 = vmax.f32 %v4101, %v4107
      %v4109 = vsel %vm731, %v4098, -inf
      %v4110 = vmax.f32 %v4102, %v4109
      %v4111 = vmax.f32 %v4104, %v4106
      %v4112 = vmax.f32 %v4108, %v4110
      %v4113 = vmax.f32 %v4111, %v4112
      %v4114 = vrot.slane %v4113, 4
      %v4115 = vmax.f32 %v4113, %v4114
      %v4116 = vrot.slane %v4115, 2
      %v4117 = vmax.f32 %v4115, %v4116
      %v4118 = vrot.slane %v4117, 1
      %v4119 = vmax.f32 %v4117, %v4118
      %4120 = vst.msk [vmem:[%s270 + $0x7] sm:$0x1] %vm753, %v4119
      %p4121 = scmp.lt.s32.totalorder %s19, 1
      %s4122 = scalar_select %p4121, %s19, 1
      %p4123 = scmp.lt.s32.totalorder %s20, 1
      %s4124 = scalar_select %p4123, %s20, 1
      %s4125 = smul.addr %s4122, 2
      %s4126 = sadd.s32 %s4124, %s4125
      %s4127 = smul.addr %s4126, 8
      %s4128 = scalar_lea.vmem %s4, %s4127
      // Predicated region
      $region37: #{amer_loc_head.5} parent=35 // pred_check
        %p4129 = pneg %p145
      $region38: #{amer_loc_head.5} parent=35 // pred_check_branch
        %4131 = sbr.rel (%p4129) target = $region40
      $region39: #{amer_loc_head.5} parent=35 // pred_region
        _
      $region40: #{amer_loc_head.5} parent=35 // pred_fallthru
        _
    $region36: #{amer_loc_head.5} parent=5 // pred_fallthru
      _
    %p4132 = scmp.le.s32.totalorder 2, %s10
    // Predicated region
    $region41: #{amer_loc_head.5} parent=5 // pred_check
      %p4133 = pneg %p4132
    $region42: #{amer_loc_head.5} parent=5 // pred_check_branch
      %4135 = sbr.rel (%p4133) target = $region44
    $region43: #{amer_loc_head.5} parent=5 // pred_region
      %s4136 = ssub.s32 %s10, 2
      // Predicated region
      $region45: #{amer_loc_head.5} parent=43 // pred_check
        %p4137 = pneg %p151
      $region46: #{amer_loc_head.5} parent=43 // pred_check_branch
        %4139 = sbr.rel (%p4137) target = $region48
      $region47: #{amer_loc_head.5} parent=43 // pred_region
        %p4140 = scmp.lt.s32.totalorder %s21, 1
        %s4141 = scalar_select %p4140, %s21, 1
        %p4142 = scmp.lt.s32.totalorder %s22, 1
        %s4143 = scalar_select %p4142, %s22, 1
        %s4144 = smul.addr %s4141, 2
        %s4145 = sadd.s32 %s4143, %s4144
        %s4146 = smul.addr %s4145, 8
        %s4147 = scalar_lea.vmem %s4, %s4146
      $region48: #{amer_loc_head.5} parent=43 // pred_fallthru
        _
    $region44: #{amer_loc_head.5} parent=5 // pred_fallthru
      _
  $region6: #{amer_loc_head.5} parent=0 // loop_footer
    %s14 = sadd.s32 1, %s10
  $region7: #{amer_loc_head.5} parent=0 // loop_footer_branch
    %9 = sbr.rel target = $region3
  $region8: #{amer_loc_head.5} parent=0 // loop_exit
    _

</llo_original>
